<compile_context>
chip_gen: v7x
topology: tpu7x:2x2x1
jax: 0.10.0
libtpu: 0.0.40
codegen_flags: <defaults>
</compile_context>

<pallas_src>
import functools

import jax
import jax.numpy as jnp
from jax.experimental import pallas as pl
from jax.experimental.pallas import tpu as pltpu

NEG_SLOPE = 0.2
BN_EPS = 1e-5
TILE_K = 512  # reduction tile: pipelines conv4/conv5 weight streaming under the MXU


def _round_up(x, m):
    return (x + m - 1) // m * m


# ----------------------------- Pallas kernels ------------------------------ #

def _conv_bias_kernel(p_ref, w_ref, b_ref, o_ref, acc_ref, *, act):
    """K-tiled  o = [leaky_relu](patches @ W + b)  (bf16 MXU, f32 accumulate)."""
    @pl.when(pl.program_id(0) == 0)
    def _():
        acc_ref[...] = jnp.zeros_like(acc_ref)

    acc_ref[...] += jnp.dot(p_ref[...], w_ref[...],
                            preferred_element_type=jnp.float32)

    @pl.when(pl.program_id(0) == pl.num_programs(0) - 1)
    def _():
        y = acc_ref[...] + b_ref[...]
        if act:
            y = jnp.where(y >= 0, y, NEG_SLOPE * y)
        o_ref[...] = y.astype(o_ref.dtype)


def _conv_bn_lrelu_kernel(p_ref, w_ref, g_ref, beta_ref, o_ref, acc_ref, *, inv_m):
    """K-tiled bias-free conv with fused training-mode BatchNorm + LeakyReLU.

    The full (M_pad, C) result stays resident in the f32 VMEM accumulator, so
    batch statistics and normalization happen in the same pass (no HBM round
    trip).  Zero-padded M rows contribute nothing to the sums (zero patches,
    bias-free conv); the divisor uses the true M.
    """
    @pl.when(pl.program_id(0) == 0)
    def _():
        acc_ref[...] = jnp.zeros_like(acc_ref)

    acc_ref[...] += jnp.dot(p_ref[...], w_ref[...],
                            preferred_element_type=jnp.float32)

    @pl.when(pl.program_id(0) == pl.num_programs(0) - 1)
    def _():
        y = acc_ref[...]
        mean = jnp.sum(y, axis=0, keepdims=True) * inv_m
        var = jnp.sum(y * y, axis=0, keepdims=True) * inv_m - mean * mean
        var = jnp.maximum(var, 0.0)  # guard tiny negatives from E[x^2]-E[x]^2
        scale = g_ref[...] * jax.lax.rsqrt(var + BN_EPS)
        shift = beta_ref[...] - mean * scale
        z = y * scale + shift
        o_ref[...] = jnp.where(z >= 0, z, NEG_SLOPE * z).astype(o_ref.dtype)


def _conv_matvec_kernel(p_ref, w_ref, b_ref, o_ref, acc_ref):
    """K-tiled Cout=1 conv as a VPU mat-vec (no 1->128 lane-padded weight)."""
    @pl.when(pl.program_id(0) == 0)
    def _():
        acc_ref[...] = jnp.zeros_like(acc_ref)

    prod = p_ref[...].astype(jnp.float32) * w_ref[...]
    acc_ref[...] += jnp.sum(prod, axis=-1, keepdims=True)

    @pl.when(pl.program_id(0) == pl.num_programs(0) - 1)
    def _():
        o_ref[...] = (acc_ref[...] + b_ref[...]).astype(o_ref.dtype)


# ----------------------------- Pallas wrappers ------------------------------ #

def _conv_bias(patches, w2d, bias, *, act, out_dtype, tk):
    m_pad, kdim = patches.shape
    cp = w2d.shape[1]
    return pl.pallas_call(
        functools.partial(_conv_bias_kernel, act=act),
        out_shape=jax.ShapeDtypeStruct((m_pad, cp), out_dtype),
        grid_spec=pltpu.PrefetchScalarGridSpec(
            num_scalar_prefetch=0,
            grid=(kdim // tk,),
            in_specs=[
                pl.BlockSpec((m_pad, tk), lambda k: (0, k)),
                pl.BlockSpec((tk, cp), lambda k: (k, 0)),
                pl.BlockSpec((1, cp), lambda k: (0, 0)),
            ],
            out_specs=pl.BlockSpec((m_pad, cp), lambda k: (0, 0)),
            scratch_shapes=[pltpu.VMEM((m_pad, cp), jnp.float32)],
        ),
        # K is a reduction axis with a resident output block -> "arbitrary"
        compiler_params=pltpu.CompilerParams(
            dimension_semantics=("arbitrary",)),
    )(patches, w2d, bias)


def _conv_bn_lrelu(patches, w2d, gamma, beta, *, m_true, out_dtype, tk):
    m_pad, kdim = patches.shape
    c = w2d.shape[1]
    vec_spec = pl.BlockSpec((1, c), lambda k: (0, 0))
    return pl.pallas_call(
        functools.partial(_conv_bn_lrelu_kernel, inv_m=1.0 / float(m_true)),
        out_shape=jax.ShapeDtypeStruct((m_pad, c), out_dtype),
        grid_spec=pltpu.PrefetchScalarGridSpec(
            num_scalar_prefetch=0,
            grid=(kdim // tk,),
            in_specs=[
                pl.BlockSpec((m_pad, tk), lambda k: (0, k)),
                pl.BlockSpec((tk, c), lambda k: (k, 0)),
                vec_spec, vec_spec,
            ],
            out_specs=pl.BlockSpec((m_pad, c), lambda k: (0, 0)),
            scratch_shapes=[pltpu.VMEM((m_pad, c), jnp.float32)],
        ),
        compiler_params=pltpu.CompilerParams(
            dimension_semantics=("arbitrary",)),
    )(patches, w2d, gamma, beta)


def _conv_matvec(patches, w_row, bias, *, out_dtype, tk):
    m_pad, kdim = patches.shape
    return pl.pallas_call(
        _conv_matvec_kernel,
        out_shape=jax.ShapeDtypeStruct((m_pad, 1), out_dtype),
        grid_spec=pltpu.PrefetchScalarGridSpec(
            num_scalar_prefetch=0,
            grid=(kdim // tk,),
            in_specs=[
                pl.BlockSpec((m_pad, tk), lambda k: (0, k)),
                pl.BlockSpec((1, tk), lambda k: (0, k)),
                pl.BlockSpec((1, 1), lambda k: (0, 0)),
            ],
            out_specs=pl.BlockSpec((m_pad, 1), lambda k: (0, 0)),
            scratch_shapes=[pltpu.VMEM((m_pad, 1), jnp.float32)],
        ),
        compiler_params=pltpu.CompilerParams(
            dimension_semantics=("arbitrary",)),
    )(patches, w_row, bias)


# ------------------------------- JAX glue ----------------------------------- #

def _im2col_nhwc(x, k, stride, pad):
    """x: (N, H, W, C) -> patches (N*Ho*Wo, k*k*C), K ordered (kh, kw, C)."""
    n, h, w, c = x.shape
    ho = (h + 2 * pad - k) // stride + 1
    wo = (w + 2 * pad - k) // stride + 1
    xp = jnp.pad(x, ((0, 0), (pad, pad), (pad, pad), (0, 0)))
    cols = []
    for i in range(k):
        for j in range(k):
            sl = jax.lax.slice(
                xp,
                (0, i, j, 0),
                (n, i + stride * (ho - 1) + 1, j + stride * (wo - 1) + 1, c),
                (1, stride, stride, 1),
            )  # (N, ho, wo, C)
            cols.append(sl)
    p = jnp.stack(cols, axis=3)  # (N, ho, wo, k*k, C)
    return p.reshape(n * ho * wo, k * k * c), ho, wo


def _conv_layer(x_nhwc, w, b, stride, pad, *, bn=None, lrelu=False,
                out_dtype=jnp.bfloat16):
    """One Conv2d with a fully fused bias/BN + LeakyReLU epilogue (1 pallas_call)."""
    n = x_nhwc.shape[0]
    cout, cin, k, _ = w.shape

    # TODO(synk): fuse this im2col gather into the matmul grid (per-tap DMA from
    # the padded NHWC activation) so the duplicated [M, k*k*Cin] slab never
    # touches HBM.
    patches, ho, wo = _im2col_nhwc(x_nhwc.astype(jnp.bfloat16), k, stride, pad)
    m, kdim = patches.shape

    m_pad = _round_up(m, 16)  # bf16 sublane packing (16 rows)
    if m_pad != m:
        patches = jnp.pad(patches, ((0, m_pad - m), (0, 0)))
    assert m_pad <= 1024, "single-M-tile design; add M tiling for larger inputs"

    tk = TILE_K if (kdim > TILE_K and kdim % TILE_K == 0) else kdim

    # OIHW -> (kh, kw, Cin, Cout) -> (K, Cout), matching the patch K ordering.
    w2d = w.transpose(2, 3, 1, 0).reshape(kdim, cout)

    if bn is not None:
        gamma, beta = bn
        y = _conv_bn_lrelu(
            patches, w2d.astype(jnp.bfloat16),
            gamma.reshape(1, cout).astype(jnp.float32),
            beta.reshape(1, cout).astype(jnp.float32),
            m_true=m, out_dtype=out_dtype, tk=tk)
    elif cout == 1:
        # conv5: compact mat-vec; weight stays (1, K) f32 (16 KB real data).
        y = _conv_matvec(
            patches, w2d.reshape(1, kdim).astype(jnp.float32),
            b.reshape(1, 1).astype(jnp.float32),
            out_dtype=out_dtype, tk=tk)
    else:
        # conv1: lane-pad Cout 64 -> 128 so the output store is lane-dense.
        cp = _round_up(cout, 128)
        w2d = jnp.pad(w2d, ((0, 0), (0, cp - cout))).astype(jnp.bfloat16)
        bias = jnp.zeros((1, cp), jnp.float32)
        if b is not None:
            bias = bias.at[0, :cout].set(b.astype(jnp.float32))
        y = _conv_bias(patches, w2d, bias, act=lrelu, out_dtype=out_dtype, tk=tk)

    return y[:m, :cout].reshape(n, ho, wo, cout)


def discriminator_forward(params, x):
    # NCHW only at the module boundary; NHWC (bf16) internally.
    x = jnp.transpose(x, (0, 2, 3, 1))
    # conv1 + LeakyReLU (bn1 is unused in forward, same as the PyTorch module)
    x = _conv_layer(x, params["w1"], params["b1"], 2, 1, lrelu=True)
    # conv2 -> bn2 -> LeakyReLU
    x = _conv_layer(x, params["w2"], None, 2, 1, bn=(params["g2"], params["be2"]))
    # conv3 -> bn3 -> LeakyReLU
    x = _conv_layer(x, params["w3"], None, 2, 1, bn=(params["g3"], params["be3"]))
    # conv4 -> bn4 -> LeakyReLU
    x = _conv_layer(x, params["w4"], None, 1, 1, bn=(params["g4"], params["be4"]))
    # conv5 (bias, no activation) -> f32 output
    x = _conv_layer(x, params["w5"], params["b5"], 1, 1, out_dtype=jnp.float32)
    return jnp.transpose(x, (0, 3, 1, 2))  # back to NCHW


# ------------------------- deterministic parameters -------------------------- #

def init_params(key, inputc):
    def convw(k, cout, cin, ks):
        fan_in = cin * ks * ks
        return jax.random.normal(k, (cout, cin, ks, ks), jnp.float32) / jnp.sqrt(fan_in)

    ks = jax.random.split(key, 13)
    return dict(
        w1=convw(ks[0], 64, inputc, 4),
        b1=0.01 * jax.random.normal(ks[1], (64,), jnp.float32),
        w2=convw(ks[2], 128, 64, 4),
        g2=1.0 + 0.1 * jax.random.normal(ks[3], (128,), jnp.float32),
        be2=0.1 * jax.random.normal(ks[4], (128,), jnp.float32),
        w3=convw(ks[5], 256, 128, 4),
        g3=1.0 + 0.1 * jax.random.normal(ks[6], (256,), jnp.float32),
        be3=0.1 * jax.random.normal(ks[7], (256,), jnp.float32),
        w4=convw(ks[8], 512, 256, 4),
        g4=1.0 + 0.1 * jax.random.normal(ks[9], (512,), jnp.float32),
        be4=0.1 * jax.random.normal(ks[10], (512,), jnp.float32),
        w5=convw(ks[11], 1, 512, 4),
        b5=0.01 * jax.random.normal(ks[12], (1,), jnp.float32),
    )


# ------------------------------ plain-JAX ref -------------------------------- #

def ref_forward(params, x):
    def conv(x, w, b, stride, pad):
        y = jax.lax.conv_general_dilated(
            x, w, window_strides=(stride, stride),
            padding=[(pad, pad), (pad, pad)],
            dimension_numbers=("NCHW", "OIHW", "NCHW"))
        if b is not None:
            y = y + b[None, :, None, None]
        return y

    def bn(y, g, b):
        m = jnp.mean(y, axis=(0, 2, 3), keepdims=True)
        v = jnp.mean((y - m) ** 2, axis=(0, 2, 3), keepdims=True)
        return (y - m) * jax.lax.rsqrt(v + BN_EPS) * g[None, :, None, None] \
            + b[None, :, None, None]

    lr = lambda v: jnp.where(v >= 0, v, NEG_SLOPE * v)
    y = lr(conv(x, params["w1"], params["b1"], 2, 1))
    y = lr(bn(conv(y, params["w2"], None, 2, 1), params["g2"], params["be2"]))
    y = lr(bn(conv(y, params["w3"], None, 2, 1), params["g3"], params["be3"]))
    y = lr(bn(conv(y, params["w4"], None, 1, 1), params["g4"], params["be4"]))
    y = conv(y, params["w5"], params["b5"], 1, 1)
    return y


if __name__ == "__main__":
    key = jax.random.PRNGKey(0)
    kp, kx = jax.random.split(key)
    inputc = 4
    # spatial=32 so the stride-2 stack + two 4x4 stride-1 convs keep H,W >= 1
    x = jax.random.normal(kx, (2, inputc, 32, 32), jnp.float32)
    params = init_params(kp, inputc)

    out = jax.jit(discriminator_forward)(params, x)
    out = jax.block_until_ready(out)
    assert out.shape == (2, 1, 2, 2), out.shape

    ref = ref_forward(params, x)
    max_diff = float(jnp.max(jnp.abs(out - ref)))
    # bf16 MXU operands + bf16 intermediate activations (f32 accumulate /
    # epilogue) vs XLA's f32 conv path: scale-aware tolerance.
    tol = 8e-2 * (1.0 + float(jnp.max(jnp.abs(ref))))
    assert max_diff < tol, f"max abs diff vs reference = {max_diff} (tol {tol})"

    print("KERNEL_OK")
</pallas_src>

<mosaic_0001>
module attributes {stable_mosaic.version = 11 : i64} {
  func.func @_conv_bias_kernel(%arg0: i32, %arg1: memref<512x64xbf16, #tpu.memory_space<vmem>>, %arg2: memref<64x128xbf16, #tpu.memory_space<vmem>>, %arg3: memref<1x128xf32, #tpu.memory_space<vmem>>, %arg4: memref<512x128xbf16, #tpu.memory_space<vmem>>, %arg5: memref<512x128xf32, #tpu.memory_space<vmem>>) attributes {dimension_semantics = [#tpu.dimension_semantics<arbitrary>], iteration_bounds = array<i64: 1>, scalar_prefetch = 0 : i64, scratch_operands = 1 : i64, tpu.core_type = #tpu.core_type<tc>, window_params = [{transform_indices = @transform_0, window_bounds = array<i64: 512, 64>}, {transform_indices = @transform_1, window_bounds = array<i64: 64, 128>}, {pipeline_mode = #tpu.pipeline_mode<synchronous>, transform_indices = @transform_2, window_bounds = array<i64: 1, 128>}, {pipeline_mode = #tpu.pipeline_mode<synchronous>, transform_indices = @transform_3, window_bounds = array<i64: 512, 128>}]} {
    %c0_i32 = arith.constant 0 : i32
    %0 = arith.cmpi eq, %arg0, %c0_i32 : i32
    %1 = arith.extui %0 : i1 to i32
    %c0_i32_0 = arith.constant 0 : i32
    %2 = arith.cmpi ne, %1, %c0_i32_0 : i32
    scf.if %2 {
      %cst_10 = arith.constant 0.000000e+00 : f32
      %12 = vector.broadcast %cst_10 : f32 to vector<512x128xf32>
      %c0_11 = arith.constant 0 : index
      %c0_12 = arith.constant 0 : index
      %13 = vector.load %arg5[%c0_11, %c0_12] : memref<512x128xf32, #tpu.memory_space<vmem>>, vector<512x128xf32>
      tpu.vector_store %arg5[%c0_11, %c0_12], %12 {strides = array<i32>} : memref<512x128xf32, #tpu.memory_space<vmem>>, vector<512x128xf32>,
    } else {
    }
    %c0 = arith.constant 0 : index
    %c0_1 = arith.constant 0 : index
    %3 = vector.load %arg5[%c0, %c0_1] : memref<512x128xf32, #tpu.memory_space<vmem>>, vector<512x128xf32>
    %c0_2 = arith.constant 0 : index
    %c0_3 = arith.constant 0 : index
    %4 = vector.load %arg1[%c0_2, %c0_3] : memref<512x64xbf16, #tpu.memory_space<vmem>>, vector<512x64xbf16>
    %c0_4 = arith.constant 0 : index
    %c0_5 = arith.constant 0 : index
    %5 = vector.load %arg2[%c0_4, %c0_5] : memref<64x128xbf16, #tpu.memory_space<vmem>>, vector<64x128xbf16>
    %cst = arith.constant dense<0.000000e+00> : vector<512x128xf32>
    %6 = tpu.matmul %4, %5, %cst {dimension_numbers = #tpu.dot_dimension_numbers<[1], [0], [0], [1], [0, 0, 1, 1], [], []>} : vector<512x64xbf16>, vector<64x128xbf16>, vector<512x128xf32> -> vector<512x128xf32>
    %7 = arith.addf %3, %6 : vector<512x128xf32>
    %c0_6 = arith.constant 0 : index
    %c0_7 = arith.constant 0 : index
    %8 = vector.load %arg5[%c0_6, %c0_7] : memref<512x128xf32, #tpu.memory_space<vmem>>, vector<512x128xf32>
    tpu.vector_store %arg5[%c0_6, %c0_7], %7 {strides = array<i32>} : memref<512x128xf32, #tpu.memory_space<vmem>>, vector<512x128xf32>,
    %c0_i32_8 = arith.constant 0 : i32
    %9 = arith.cmpi eq, %arg0, %c0_i32_8 : i32
    %10 = arith.extui %9 : i1 to i32
    %c0_i32_9 = arith.constant 0 : i32
    %11 = arith.cmpi ne, %10, %c0_i32_9 : i32
    scf.if %11 {
      %c0_10 = arith.constant 0 : index
      %c0_11 = arith.constant 0 : index
      %12 = vector.load %arg5[%c0_10, %c0_11] : memref<512x128xf32, #tpu.memory_space<vmem>>, vector<512x128xf32>
      %c0_12 = arith.constant 0 : index
      %c0_13 = arith.constant 0 : index
      %13 = vector.load %arg3[%c0_12, %c0_13] : memref<1x128xf32, #tpu.memory_space<vmem>>, vector<1x128xf32>
      %14 = vector.broadcast %13 : vector<1x128xf32> to vector<512x128xf32>
      %15 = arith.addf %12, %14 : vector<512x128xf32>
      %cst_14 = arith.constant 0.000000e+00 : f32
      %16 = vector.broadcast %cst_14 : f32 to vector<512x128xf32>
      %17 = arith.cmpf oge, %15, %16 : vector<512x128xf32>
      %cst_15 = arith.constant 2.000000e-01 : f32
      %18 = vector.broadcast %cst_15 : f32 to vector<512x128xf32>
      %19 = arith.mulf %18, %15 : vector<512x128xf32>
      %20 = arith.select %17, %15, %19 : vector<512x128xi1>, vector<512x128xf32>
      %21 = arith.truncf %20 : vector<512x128xf32> to vector<512x128xbf16>
      %c0_16 = arith.constant 0 : index
      %c0_17 = arith.constant 0 : index
      %22 = vector.load %arg4[%c0_16, %c0_17] : memref<512x128xbf16, #tpu.memory_space<vmem>>, vector<512x128xbf16>
      tpu.vector_store %arg4[%c0_16, %c0_17], %21 {strides = array<i32>} : memref<512x128xbf16, #tpu.memory_space<vmem>>, vector<512x128xbf16>,
    } else {
    }
    return
  }
  func.func @transform_0(%arg0: i32) -> (i32, i32) {
    %c0_i32 = arith.constant 0 : i32
    %c0_i32_0 = arith.constant 0 : i32
    return %c0_i32, %arg0 : i32, i32
  }
  func.func @transform_1(%arg0: i32) -> (i32, i32) {
    %c0_i32 = arith.constant 0 : i32
    %c0_i32_0 = arith.constant 0 : i32
    return %arg0, %c0_i32 : i32, i32
  }
  func.func @transform_2(%arg0: i32) -> (i32, i32) {
    %c0_i32 = arith.constant 0 : i32
    %c0_i32_0 = arith.constant 0 : i32
    %c0_i32_1 = arith.constant 0 : i32
    return %c0_i32, %c0_i32_0 : i32, i32
  }
  func.func @transform_3(%arg0: i32) -> (i32, i32) {
    %c0_i32 = arith.constant 0 : i32
    %c0_i32_0 = arith.constant 0 : i32
    %c0_i32_1 = arith.constant 0 : i32
    return %c0_i32, %c0_i32_0 : i32, i32
  }
}

module attributes {stable_mosaic.version = 11 : i64} {
  func.func @_conv_bn_lrelu_kernel(%arg0: i32, %arg1: memref<128x512xbf16, #tpu.memory_space<vmem>>, %arg2: memref<512x128xbf16, #tpu.memory_space<vmem>>, %arg3: memref<1x128xf32, #tpu.memory_space<vmem>>, %arg4: memref<1x128xf32, #tpu.memory_space<vmem>>, %arg5: memref<128x128xbf16, #tpu.memory_space<vmem>>, %arg6: memref<128x128xf32, #tpu.memory_space<vmem>>) attributes {dimension_semantics = [#tpu.dimension_semantics<arbitrary>], iteration_bounds = array<i64: 2>, scalar_prefetch = 0 : i64, scratch_operands = 1 : i64, tpu.core_type = #tpu.core_type<tc>, window_params = [{transform_indices = @transform_0, window_bounds = array<i64: 128, 512>}, {transform_indices = @transform_1, window_bounds = array<i64: 512, 128>}, {pipeline_mode = #tpu.pipeline_mode<synchronous>, transform_indices = @transform_2, window_bounds = array<i64: 1, 128>}, {pipeline_mode = #tpu.pipeline_mode<synchronous>, transform_indices = @transform_3, window_bounds = array<i64: 1, 128>}, {pipeline_mode = #tpu.pipeline_mode<synchronous>, transform_indices = @transform_4, window_bounds = array<i64: 128, 128>}]} {
    %c0_i32 = arith.constant 0 : i32
    %0 = arith.cmpi eq, %arg0, %c0_i32 : i32
    %1 = arith.extui %0 : i1 to i32
    %c0_i32_0 = arith.constant 0 : i32
    %2 = arith.cmpi ne, %1, %c0_i32_0 : i32
    scf.if %2 {
      %cst_9 = arith.constant 0.000000e+00 : f32
      %12 = vector.broadcast %cst_9 : f32 to vector<128x128xf32>
      %c0_10 = arith.constant 0 : index
      %c0_11 = arith.constant 0 : index
      %13 = vector.load %arg6[%c0_10, %c0_11] : memref<128x128xf32, #tpu.memory_space<vmem>>, vector<128x128xf32>
      tpu.vector_store %arg6[%c0_10, %c0_11], %12 {strides = array<i32>} : memref<128x128xf32, #tpu.memory_space<vmem>>, vector<128x128xf32>,
    } else {
    }
    %c0 = arith.constant 0 : index
    %c0_1 = arith.constant 0 : index
    %3 = vector.load %arg6[%c0, %c0_1] : memref<128x128xf32, #tpu.memory_space<vmem>>, vector<128x128xf32>
    %c0_2 = arith.constant 0 : index
    %c0_3 = arith.constant 0 : index
    %4 = vector.load %arg1[%c0_2, %c0_3] : memref<128x512xbf16, #tpu.memory_space<vmem>>, vector<128x512xbf16>
    %c0_4 = arith.constant 0 : index
    %c0_5 = arith.constant 0 : index
    %5 = vector.load %arg2[%c0_4, %c0_5] : memref<512x128xbf16, #tpu.memory_space<vmem>>, vector<512x128xbf16>
    %cst = arith.constant dense<0.000000e+00> : vector<128x128xf32>
    %6 = tpu.matmul %4, %5, %cst {dimension_numbers = #tpu.dot_dimension_numbers<[1], [0], [0], [1], [0, 0, 1, 1], [], []>} : vector<128x512xbf16>, vector<512x128xbf16>, vector<128x128xf32> -> vector<128x128xf32>
    %7 = arith.addf %3, %6 : vector<128x128xf32>
    %c0_6 = arith.constant 0 : index
    %c0_7 = arith.constant 0 : index
    %8 = vector.load %arg6[%c0_6, %c0_7] : memref<128x128xf32, #tpu.memory_space<vmem>>, vector<128x128xf32>
    tpu.vector_store %arg6[%c0_6, %c0_7], %7 {strides = array<i32>} : memref<128x128xf32, #tpu.memory_space<vmem>>, vector<128x128xf32>,
    %c1_i32 = arith.constant 1 : i32
    %9 = arith.cmpi eq, %arg0, %c1_i32 : i32
    %10 = arith.extui %9 : i1 to i32
    %c0_i32_8 = arith.constant 0 : i32
    %11 = arith.cmpi ne, %10, %c0_i32_8 : i32
    scf.if %11 {
      %c0_9 = arith.constant 0 : index
      %c0_10 = arith.constant 0 : index
      %12 = vector.load %arg6[%c0_9, %c0_10] : memref<128x128xf32, #tpu.memory_space<vmem>>, vector<128x128xf32>
      %cst_11 = arith.constant dense<0.000000e+00> : vector<128xf32>
      %13 = vector.multi_reduction <add>, %12, %cst_11 [0] : vector<128x128xf32> to vector<128xf32>
      %14 = vector.shape_cast %13 : vector<128xf32> to vector<1x128xf32>
      %cst_12 = arith.constant 7.812500e-03 : f32
      %15 = vector.broadcast %cst_12 : f32 to vector<1x128xf32>
      %16 = arith.mulf %14, %15 : vector<1x128xf32>
      %17 = arith.mulf %12, %12 : vector<128x128xf32>
      %cst_13 = arith.constant dense<0.000000e+00> : vector<128xf32>
      %18 = vector.multi_reduction <add>, %17, %cst_13 [0] : vector<128x128xf32> to vector<128xf32>
      %19 = vector.shape_cast %18 : vector<128xf32> to vector<1x128xf32>
      %cst_14 = arith.constant 7.812500e-03 : f32
      %20 = vector.broadcast %cst_14 : f32 to vector<1x128xf32>
      %21 = arith.mulf %19, %20 : vector<1x128xf32>
      %22 = arith.mulf %16, %16 : vector<1x128xf32>
      %23 = arith.subf %21, %22 : vector<1x128xf32>
      %cst_15 = arith.constant 0.000000e+00 : f32
      %24 = vector.broadcast %cst_15 : f32 to vector<1x128xf32>
      %25 = arith.maximumf %23, %24 : vector<1x128xf32>
      %c0_16 = arith.constant 0 : index
      %c0_17 = arith.constant 0 : index
      %26 = vector.load %arg3[%c0_16, %c0_17] : memref<1x128xf32, #tpu.memory_space<vmem>>, vector<1x128xf32>
      %cst_18 = arith.constant 9.99999974E-6 : f32
      %27 = vector.broadcast %cst_18 : f32 to vector<1x128xf32>
      %28 = arith.addf %25, %27 : vector<1x128xf32>
      %29 = math.rsqrt %28 : vector<1x128xf32>
      %30 = arith.mulf %26, %29 : vector<1x128xf32>
      %c0_19 = arith.constant 0 : index
      %c0_20 = arith.constant 0 : index
      %31 = vector.load %arg4[%c0_19, %c0_20] : memref<1x128xf32, #tpu.memory_space<vmem>>, vector<1x128xf32>
      %32 = arith.mulf %16, %30 : vector<1x128xf32>
      %33 = arith.subf %31, %32 : vector<1x128xf32>
      %34 = vector.broadcast %30 : vector<1x128xf32> to vector<128x128xf32>
      %35 = arith.mulf %12, %34 : vector<128x128xf32>
      %36 = vector.broadcast %33 : vector<1x128xf32> to vector<128x128xf32>
      %37 = arith.addf %35, %36 : vector<128x128xf32>
      %cst_21 = arith.constant 0.000000e+00 : f32
      %38 = vector.broadcast %cst_21 : f32 to vector<128x128xf32>
      %39 = arith.cmpf oge, %37, %38 : vector<128x128xf32>
      %cst_22 = arith.constant 2.000000e-01 : f32
      %40 = vector.broadcast %cst_22 : f32 to vector<128x128xf32>
      %41 = arith.mulf %40, %37 : vector<128x128xf32>
      %42 = arith.select %39, %37, %41 : vector<128x128xi1>, vector<128x128xf32>
      %43 = arith.truncf %42 : vector<128x128xf32> to vector<128x128xbf16>
      %c0_23 = arith.constant 0 : index
      %c0_24 = arith.constant 0 : index
      %44 = vector.load %arg5[%c0_23, %c0_24] : memref<128x128xbf16, #tpu.memory_space<vmem>>, vector<128x128xbf16>
      tpu.vector_store %arg5[%c0_23, %c0_24], %43 {strides = array<i32>} : memref<128x128xbf16, #tpu.memory_space<vmem>>, vector<128x128xbf16>,
    } else {
    }
    return
  }
  func.func @transform_0(%arg0: i32) -> (i32, i32) {
    %c0_i32 = arith.constant 0 : i32
    %c0_i32_0 = arith.constant 0 : i32
    return %c0_i32, %arg0 : i32, i32
  }
  func.func @transform_1(%arg0: i32) -> (i32, i32) {
    %c0_i32 = arith.constant 0 : i32
    %c0_i32_0 = arith.constant 0 : i32
    return %arg0, %c0_i32 : i32, i32
  }
  func.func @transform_2(%arg0: i32) -> (i32, i32) {
    %c0_i32 = arith.constant 0 : i32
    %c0_i32_0 = arith.constant 0 : i32
    %c0_i32_1 = arith.constant 0 : i32
    return %c0_i32, %c0_i32_0 : i32, i32
  }
  func.func @transform_3(%arg0: i32) -> (i32, i32) {
    %c0_i32 = arith.constant 0 : i32
    %c0_i32_0 = arith.constant 0 : i32
    %c0_i32_1 = arith.constant 0 : i32
    return %c0_i32, %c0_i32_0 : i32, i32
  }
  func.func @transform_4(%arg0: i32) -> (i32, i32) {
    %c0_i32 = arith.constant 0 : i32
    %c0_i32_0 = arith.constant 0 : i32
    %c0_i32_1 = arith.constant 0 : i32
    return %c0_i32, %c0_i32_0 : i32, i32
  }
}

module attributes {stable_mosaic.version = 11 : i64} {
  func.func @_conv_bn_lrelu_kernel(%arg0: i32, %arg1: memref<32x512xbf16, #tpu.memory_space<vmem>>, %arg2: memref<512x256xbf16, #tpu.memory_space<vmem>>, %arg3: memref<1x256xf32, #tpu.memory_space<vmem>>, %arg4: memref<1x256xf32, #tpu.memory_space<vmem>>, %arg5: memref<32x256xbf16, #tpu.memory_space<vmem>>, %arg6: memref<32x256xf32, #tpu.memory_space<vmem>>) attributes {dimension_semantics = [#tpu.dimension_semantics<arbitrary>], iteration_bounds = array<i64: 4>, scalar_prefetch = 0 : i64, scratch_operands = 1 : i64, tpu.core_type = #tpu.core_type<tc>, window_params = [{transform_indices = @transform_0, window_bounds = array<i64: 32, 512>}, {transform_indices = @transform_1, window_bounds = array<i64: 512, 256>}, {pipeline_mode = #tpu.pipeline_mode<synchronous>, transform_indices = @transform_2, window_bounds = array<i64: 1, 256>}, {pipeline_mode = #tpu.pipeline_mode<synchronous>, transform_indices = @transform_3, window_bounds = array<i64: 1, 256>}, {pipeline_mode = #tpu.pipeline_mode<synchronous>, transform_indices = @transform_4, window_bounds = array<i64: 32, 256>}]} {
    %c0_i32 = arith.constant 0 : i32
    %0 = arith.cmpi eq, %arg0, %c0_i32 : i32
    %1 = arith.extui %0 : i1 to i32
    %c0_i32_0 = arith.constant 0 : i32
    %2 = arith.cmpi ne, %1, %c0_i32_0 : i32
    scf.if %2 {
      %cst_9 = arith.constant 0.000000e+00 : f32
      %12 = vector.broadcast %cst_9 : f32 to vector<32x256xf32>
      %c0_10 = arith.constant 0 : index
      %c0_11 = arith.constant 0 : index
      %13 = vector.load %arg6[%c0_10, %c0_11] : memref<32x256xf32, #tpu.memory_space<vmem>>, vector<32x256xf32>
      tpu.vector_store %arg6[%c0_10, %c0_11], %12 {strides = array<i32>} : memref<32x256xf32, #tpu.memory_space<vmem>>, vector<32x256xf32>,
    } else {
    }
    %c0 = arith.constant 0 : index
    %c0_1 = arith.constant 0 : index
    %3 = vector.load %arg6[%c0, %c0_1] : memref<32x256xf32, #tpu.memory_space<vmem>>, vector<32x256xf32>
    %c0_2 = arith.constant 0 : index
    %c0_3 = arith.constant 0 : index
    %4 = vector.load %arg1[%c0_2, %c0_3] : memref<32x512xbf16, #tpu.memory_space<vmem>>, vector<32x512xbf16>
    %c0_4 = arith.constant 0 : index
    %c0_5 = arith.constant 0 : index
    %5 = vector.load %arg2[%c0_4, %c0_5] : memref<512x256xbf16, #tpu.memory_space<vmem>>, vector<512x256xbf16>
    %cst = arith.constant dense<0.000000e+00> : vector<32x256xf32>
    %6 = tpu.matmul %4, %5, %cst {dimension_numbers = #tpu.dot_dimension_numbers<[1], [0], [0], [1], [0, 0, 1, 1], [], []>} : vector<32x512xbf16>, vector<512x256xbf16>, vector<32x256xf32> -> vector<32x256xf32>
    %7 = arith.addf %3, %6 : vector<32x256xf32>
    %c0_6 = arith.constant 0 : index
    %c0_7 = arith.constant 0 : index
    %8 = vector.load %arg6[%c0_6, %c0_7] : memref<32x256xf32, #tpu.memory_space<vmem>>, vector<32x256xf32>
    tpu.vector_store %arg6[%c0_6, %c0_7], %7 {strides = array<i32>} : memref<32x256xf32, #tpu.memory_space<vmem>>, vector<32x256xf32>,
    %c3_i32 = arith.constant 3 : i32
    %9 = arith.cmpi eq, %arg0, %c3_i32 : i32
    %10 = arith.extui %9 : i1 to i32
    %c0_i32_8 = arith.constant 0 : i32
    %11 = arith.cmpi ne, %10, %c0_i32_8 : i32
    scf.if %11 {
      %c0_9 = arith.constant 0 : index
      %c0_10 = arith.constant 0 : index
      %12 = vector.load %arg6[%c0_9, %c0_10] : memref<32x256xf32, #tpu.memory_space<vmem>>, vector<32x256xf32>
      %cst_11 = arith.constant dense<0.000000e+00> : vector<256xf32>
      %13 = vector.multi_reduction <add>, %12, %cst_11 [0] : vector<32x256xf32> to vector<256xf32>
      %14 = vector.shape_cast %13 : vector<256xf32> to vector<1x256xf32>
      %cst_12 = arith.constant 3.125000e-02 : f32
      %15 = vector.broadcast %cst_12 : f32 to vector<1x256xf32>
      %16 = arith.mulf %14, %15 : vector<1x256xf32>
      %17 = arith.mulf %12, %12 : vector<32x256xf32>
      %cst_13 = arith.constant dense<0.000000e+00> : vector<256xf32>
      %18 = vector.multi_reduction <add>, %17, %cst_13 [0] : vector<32x256xf32> to vector<256xf32>
      %19 = vector.shape_cast %18 : vector<256xf32> to vector<1x256xf32>
      %cst_14 = arith.constant 3.125000e-02 : f32
      %20 = vector.broadcast %cst_14 : f32 to vector<1x256xf32>
      %21 = arith.mulf %19, %20 : vector<1x256xf32>
      %22 = arith.mulf %16, %16 : vector<1x256xf32>
      %23 = arith.subf %21, %22 : vector<1x256xf32>
      %cst_15 = arith.constant 0.000000e+00 : f32
      %24 = vector.broadcast %cst_15 : f32 to vector<1x256xf32>
      %25 = arith.maximumf %23, %24 : vector<1x256xf32>
      %c0_16 = arith.constant 0 : index
      %c0_17 = arith.constant 0 : index
      %26 = vector.load %arg3[%c0_16, %c0_17] : memref<1x256xf32, #tpu.memory_space<vmem>>, vector<1x256xf32>
      %cst_18 = arith.constant 9.99999974E-6 : f32
      %27 = vector.broadcast %cst_18 : f32 to vector<1x256xf32>
      %28 = arith.addf %25, %27 : vector<1x256xf32>
      %29 = math.rsqrt %28 : vector<1x256xf32>
      %30 = arith.mulf %26, %29 : vector<1x256xf32>
      %c0_19 = arith.constant 0 : index
      %c0_20 = arith.constant 0 : index
      %31 = vector.load %arg4[%c0_19, %c0_20] : memref<1x256xf32, #tpu.memory_space<vmem>>, vector<1x256xf32>
      %32 = arith.mulf %16, %30 : vector<1x256xf32>
      %33 = arith.subf %31, %32 : vector<1x256xf32>
      %34 = vector.broadcast %30 : vector<1x256xf32> to vector<32x256xf32>
      %35 = arith.mulf %12, %34 : vector<32x256xf32>
      %36 = vector.broadcast %33 : vector<1x256xf32> to vector<32x256xf32>
      %37 = arith.addf %35, %36 : vector<32x256xf32>
      %cst_21 = arith.constant 0.000000e+00 : f32
      %38 = vector.broadcast %cst_21 : f32 to vector<32x256xf32>
      %39 = arith.cmpf oge, %37, %38 : vector<32x256xf32>
      %cst_22 = arith.constant 2.000000e-01 : f32
      %40 = vector.broadcast %cst_22 : f32 to vector<32x256xf32>
      %41 = arith.mulf %40, %37 : vector<32x256xf32>
      %42 = arith.select %39, %37, %41 : vector<32x256xi1>, vector<32x256xf32>
      %43 = arith.truncf %42 : vector<32x256xf32> to vector<32x256xbf16>
      %c0_23 = arith.constant 0 : index
      %c0_24 = arith.constant 0 : index
      %44 = vector.load %arg5[%c0_23, %c0_24] : memref<32x256xbf16, #tpu.memory_space<vmem>>, vector<32x256xbf16>
      tpu.vector_store %arg5[%c0_23, %c0_24], %43 {strides = array<i32>} : memref<32x256xbf16, #tpu.memory_space<vmem>>, vector<32x256xbf16>,
    } else {
    }
    return
  }
  func.func @transform_0(%arg0: i32) -> (i32, i32) {
    %c0_i32 = arith.constant 0 : i32
    %c0_i32_0 = arith.constant 0 : i32
    return %c0_i32, %arg0 : i32, i32
  }
  func.func @transform_1(%arg0: i32) -> (i32, i32) {
    %c0_i32 = arith.constant 0 : i32
    %c0_i32_0 = arith.constant 0 : i32
    return %arg0, %c0_i32 : i32, i32
  }
  func.func @transform_2(%arg0: i32) -> (i32, i32) {
    %c0_i32 = arith.constant 0 : i32
    %c0_i32_0 = arith.constant 0 : i32
    %c0_i32_1 = arith.constant 0 : i32
    return %c0_i32, %c0_i32_0 : i32, i32
  }
  func.func @transform_3(%arg0: i32) -> (i32, i32) {
    %c0_i32 = arith.constant 0 : i32
    %c0_i32_0 = arith.constant 0 : i32
    %c0_i32_1 = arith.constant 0 : i32
    return %c0_i32, %c0_i32_0 : i32, i32
  }
  func.func @transform_4(%arg0: i32) -> (i32, i32) {
    %c0_i32 = arith.constant 0 : i32
    %c0_i32_0 = arith.constant 0 : i32
    %c0_i32_1 = arith.constant 0 : i32
    return %c0_i32, %c0_i32_0 : i32, i32
  }
}

module attributes {stable_mosaic.version = 11 : i64} {
  func.func @_conv_bn_lrelu_kernel(%arg0: i32, %arg1: memref<32x512xbf16, #tpu.memory_space<vmem>>, %arg2: memref<512x512xbf16, #tpu.memory_space<vmem>>, %arg3: memref<1x512xf32, #tpu.memory_space<vmem>>, %arg4: memref<1x512xf32, #tpu.memory_space<vmem>>, %arg5: memref<32x512xbf16, #tpu.memory_space<vmem>>, %arg6: memref<32x512xf32, #tpu.memory_space<vmem>>) attributes {dimension_semantics = [#tpu.dimension_semantics<arbitrary>], iteration_bounds = array<i64: 8>, scalar_prefetch = 0 : i64, scratch_operands = 1 : i64, tpu.core_type = #tpu.core_type<tc>, window_params = [{transform_indices = @transform_0, window_bounds = array<i64: 32, 512>}, {transform_indices = @transform_1, window_bounds = array<i64: 512, 512>}, {pipeline_mode = #tpu.pipeline_mode<synchronous>, transform_indices = @transform_2, window_bounds = array<i64: 1, 512>}, {pipeline_mode = #tpu.pipeline_mode<synchronous>, transform_indices = @transform_3, window_bounds = array<i64: 1, 512>}, {pipeline_mode = #tpu.pipeline_mode<synchronous>, transform_indices = @transform_4, window_bounds = array<i64: 32, 512>}]} {
    %c0_i32 = arith.constant 0 : i32
    %0 = arith.cmpi eq, %arg0, %c0_i32 : i32
    %1 = arith.extui %0 : i1 to i32
    %c0_i32_0 = arith.constant 0 : i32
    %2 = arith.cmpi ne, %1, %c0_i32_0 : i32
    scf.if %2 {
      %cst_9 = arith.constant 0.000000e+00 : f32
      %12 = vector.broadcast %cst_9 : f32 to vector<32x512xf32>
      %c0_10 = arith.constant 0 : index
      %c0_11 = arith.constant 0 : index
      %13 = vector.load %arg6[%c0_10, %c0_11] : memref<32x512xf32, #tpu.memory_space<vmem>>, vector<32x512xf32>
      tpu.vector_store %arg6[%c0_10, %c0_11], %12 {strides = array<i32>} : memref<32x512xf32, #tpu.memory_space<vmem>>, vector<32x512xf32>,
    } else {
    }
    %c0 = arith.constant 0 : index
    %c0_1 = arith.constant 0 : index
    %3 = vector.load %arg6[%c0, %c0_1] : memref<32x512xf32, #tpu.memory_space<vmem>>, vector<32x512xf32>
    %c0_2 = arith.constant 0 : index
    %c0_3 = arith.constant 0 : index
    %4 = vector.load %arg1[%c0_2, %c0_3] : memref<32x512xbf16, #tpu.memory_space<vmem>>, vector<32x512xbf16>
    %c0_4 = arith.constant 0 : index
    %c0_5 = arith.constant 0 : index
    %5 = vector.load %arg2[%c0_4, %c0_5] : memref<512x512xbf16, #tpu.memory_space<vmem>>, vector<512x512xbf16>
    %cst = arith.constant dense<0.000000e+00> : vector<32x512xf32>
    %6 = tpu.matmul %4, %5, %cst {dimension_numbers = #tpu.dot_dimension_numbers<[1], [0], [0], [1], [0, 0, 1, 1], [], []>} : vector<32x512xbf16>, vector<512x512xbf16>, vector<32x512xf32> -> vector<32x512xf32>
    %7 = arith.addf %3, %6 : vector<32x512xf32>
    %c0_6 = arith.constant 0 : index
    %c0_7 = arith.constant 0 : index
    %8 = vector.load %arg6[%c0_6, %c0_7] : memref<32x512xf32, #tpu.memory_space<vmem>>, vector<32x512xf32>
    tpu.vector_store %arg6[%c0_6, %c0_7], %7 {strides = array<i32>} : memref<32x512xf32, #tpu.memory_space<vmem>>, vector<32x512xf32>,
    %c7_i32 = arith.constant 7 : i32
    %9 = arith.cmpi eq, %arg0, %c7_i32 : i32
    %10 = arith.extui %9 : i1 to i32
    %c0_i32_8 = arith.constant 0 : i32
    %11 = arith.cmpi ne, %10, %c0_i32_8 : i32
    scf.if %11 {
      %c0_9 = arith.constant 0 : index
      %c0_10 = arith.constant 0 : index
      %12 = vector.load %arg6[%c0_9, %c0_10] : memref<32x512xf32, #tpu.memory_space<vmem>>, vector<32x512xf32>
      %cst_11 = arith.constant dense<0.000000e+00> : vector<512xf32>
      %13 = vector.multi_reduction <add>, %12, %cst_11 [0] : vector<32x512xf32> to vector<512xf32>
      %14 = vector.shape_cast %13 : vector<512xf32> to vector<1x512xf32>
      %cst_12 = arith.constant 0.055555556 : f32
      %15 = vector.broadcast %cst_12 : f32 to vector<1x512xf32>
      %16 = arith.mulf %14, %15 : vector<1x512xf32>
      %17 = arith.mulf %12, %12 : vector<32x512xf32>
      %cst_13 = arith.constant dense<0.000000e+00> : vector<512xf32>
      %18 = vector.multi_reduction <add>, %17, %cst_13 [0] : vector<32x512xf32> to vector<512xf32>
      %19 = vector.shape_cast %18 : vector<512xf32> to vector<1x512xf32>
      %cst_14 = arith.constant 0.055555556 : f32
      %20 = vector.broadcast %cst_14 : f32 to vector<1x512xf32>
      %21 = arith.mulf %19, %20 : vector<1x512xf32>
      %22 = arith.mulf %16, %16 : vector<1x512xf32>
      %23 = arith.subf %21, %22 : vector<1x512xf32>
      %cst_15 = arith.constant 0.000000e+00 : f32
      %24 = vector.broadcast %cst_15 : f32 to vector<1x512xf32>
      %25 = arith.maximumf %23, %24 : vector<1x512xf32>
      %c0_16 = arith.constant 0 : index
      %c0_17 = arith.constant 0 : index
      %26 = vector.load %arg3[%c0_16, %c0_17] : memref<1x512xf32, #tpu.memory_space<vmem>>, vector<1x512xf32>
      %cst_18 = arith.constant 9.99999974E-6 : f32
      %27 = vector.broadcast %cst_18 : f32 to vector<1x512xf32>
      %28 = arith.addf %25, %27 : vector<1x512xf32>
      %29 = math.rsqrt %28 : vector<1x512xf32>
      %30 = arith.mulf %26, %29 : vector<1x512xf32>
      %c0_19 = arith.constant 0 : index
      %c0_20 = arith.constant 0 : index
      %31 = vector.load %arg4[%c0_19, %c0_20] : memref<1x512xf32, #tpu.memory_space<vmem>>, vector<1x512xf32>
      %32 = arith.mulf %16, %30 : vector<1x512xf32>
      %33 = arith.subf %31, %32 : vector<1x512xf32>
      %34 = vector.broadcast %30 : vector<1x512xf32> to vector<32x512xf32>
      %35 = arith.mulf %12, %34 : vector<32x512xf32>
      %36 = vector.broadcast %33 : vector<1x512xf32> to vector<32x512xf32>
      %37 = arith.addf %35, %36 : vector<32x512xf32>
      %cst_21 = arith.constant 0.000000e+00 : f32
      %38 = vector.broadcast %cst_21 : f32 to vector<32x512xf32>
      %39 = arith.cmpf oge, %37, %38 : vector<32x512xf32>
      %cst_22 = arith.constant 2.000000e-01 : f32
      %40 = vector.broadcast %cst_22 : f32 to vector<32x512xf32>
      %41 = arith.mulf %40, %37 : vector<32x512xf32>
      %42 = arith.select %39, %37, %41 : vector<32x512xi1>, vector<32x512xf32>
      %43 = arith.truncf %42 : vector<32x512xf32> to vector<32x512xbf16>
      %c0_23 = arith.constant 0 : index
      %c0_24 = arith.constant 0 : index
      %44 = vector.load %arg5[%c0_23, %c0_24] : memref<32x512xbf16, #tpu.memory_space<vmem>>, vector<32x512xbf16>
      tpu.vector_store %arg5[%c0_23, %c0_24], %43 {strides = array<i32>} : memref<32x512xbf16, #tpu.memory_space<vmem>>, vector<32x512xbf16>,
    } else {
    }
    return
  }
  func.func @transform_0(%arg0: i32) -> (i32, i32) {
    %c0_i32 = arith.constant 0 : i32
    %c0_i32_0 = arith.constant 0 : i32
    return %c0_i32, %arg0 : i32, i32
  }
  func.func @transform_1(%arg0: i32) -> (i32, i32) {
    %c0_i32 = arith.constant 0 : i32
    %c0_i32_0 = arith.constant 0 : i32
    return %arg0, %c0_i32 : i32, i32
  }
  func.func @transform_2(%arg0: i32) -> (i32, i32) {
    %c0_i32 = arith.constant 0 : i32
    %c0_i32_0 = arith.constant 0 : i32
    %c0_i32_1 = arith.constant 0 : i32
    return %c0_i32, %c0_i32_0 : i32, i32
  }
  func.func @transform_3(%arg0: i32) -> (i32, i32) {
    %c0_i32 = arith.constant 0 : i32
    %c0_i32_0 = arith.constant 0 : i32
    %c0_i32_1 = arith.constant 0 : i32
    return %c0_i32, %c0_i32_0 : i32, i32
  }
  func.func @transform_4(%arg0: i32) -> (i32, i32) {
    %c0_i32 = arith.constant 0 : i32
    %c0_i32_0 = arith.constant 0 : i32
    %c0_i32_1 = arith.constant 0 : i32
    return %c0_i32, %c0_i32_0 : i32, i32
  }
}

module attributes {stable_mosaic.version = 11 : i64} {
  func.func @_conv_matvec_kernel(%arg0: i32, %arg1: memref<16x512xbf16, #tpu.memory_space<vmem>>, %arg2: memref<1x512xf32, #tpu.memory_space<vmem>>, %arg3: memref<1x1xf32, #tpu.memory_space<vmem>>, %arg4: memref<16x1xf32, #tpu.memory_space<vmem>>, %arg5: memref<16x1xf32, #tpu.memory_space<vmem>>) attributes {dimension_semantics = [#tpu.dimension_semantics<arbitrary>], iteration_bounds = array<i64: 16>, scalar_prefetch = 0 : i64, scratch_operands = 1 : i64, tpu.core_type = #tpu.core_type<tc>, window_params = [{transform_indices = @transform_0, window_bounds = array<i64: 16, 512>}, {transform_indices = @transform_1, window_bounds = array<i64: 1, 512>}, {pipeline_mode = #tpu.pipeline_mode<synchronous>, transform_indices = @transform_2, window_bounds = array<i64: 1, 1>}, {pipeline_mode = #tpu.pipeline_mode<synchronous>, transform_indices = @transform_3, window_bounds = array<i64: 16, 1>}]} {
    %c0_i32 = arith.constant 0 : i32
    %0 = arith.cmpi eq, %arg0, %c0_i32 : i32
    %1 = arith.extui %0 : i1 to i32
    %c0_i32_0 = arith.constant 0 : i32
    %2 = arith.cmpi ne, %1, %c0_i32_0 : i32
    scf.if %2 {
      %cst_9 = arith.constant 0.000000e+00 : f32
      %16 = vector.broadcast %cst_9 : f32 to vector<16x1xf32>
      %c0_10 = arith.constant 0 : index
      %c0_11 = arith.constant 0 : index
      %17 = vector.load %arg5[%c0_10, %c0_11] : memref<16x1xf32, #tpu.memory_space<vmem>>, vector<16x1xf32>
      tpu.vector_store %arg5[%c0_10, %c0_11], %16 {strides = array<i32>} : memref<16x1xf32, #tpu.memory_space<vmem>>, vector<16x1xf32>,
    } else {
    }
    %c0 = arith.constant 0 : index
    %c0_1 = arith.constant 0 : index
    %3 = vector.load %arg1[%c0, %c0_1] : memref<16x512xbf16, #tpu.memory_space<vmem>>, vector<16x512xbf16>
    %4 = arith.extf %3 : vector<16x512xbf16> to vector<16x512xf32>
    %c0_2 = arith.constant 0 : index
    %c0_3 = arith.constant 0 : index
    %5 = vector.load %arg2[%c0_2, %c0_3] : memref<1x512xf32, #tpu.memory_space<vmem>>, vector<1x512xf32>
    %6 = vector.broadcast %5 : vector<1x512xf32> to vector<16x512xf32>
    %7 = arith.mulf %4, %6 : vector<16x512xf32>
    %c0_4 = arith.constant 0 : index
    %c0_5 = arith.constant 0 : index
    %8 = vector.load %arg5[%c0_4, %c0_5] : memref<16x1xf32, #tpu.memory_space<vmem>>, vector<16x1xf32>
    %cst = arith.constant dense<0.000000e+00> : vector<16xf32>
    %9 = vector.multi_reduction <add>, %7, %cst [1] : vector<16x512xf32> to vector<16xf32>
    %10 = vector.shape_cast %9 : vector<16xf32> to vector<16x1xf32>
    %11 = arith.addf %8, %10 : vector<16x1xf32>
    %c0_6 = arith.constant 0 : index
    %c0_7 = arith.constant 0 : index
    %12 = vector.load %arg5[%c0_6, %c0_7] : memref<16x1xf32, #tpu.memory_space<vmem>>, vector<16x1xf32>
    tpu.vector_store %arg5[%c0_6, %c0_7], %11 {strides = array<i32>} : memref<16x1xf32, #tpu.memory_space<vmem>>, vector<16x1xf32>,
    %c15_i32 = arith.constant 15 : i32
    %13 = arith.cmpi eq, %arg0, %c15_i32 : i32
    %14 = arith.extui %13 : i1 to i32
    %c0_i32_8 = arith.constant 0 : i32
    %15 = arith.cmpi ne, %14, %c0_i32_8 : i32
    scf.if %15 {
      %c0_9 = arith.constant 0 : index
      %c0_10 = arith.constant 0 : index
      %16 = vector.load %arg5[%c0_9, %c0_10] : memref<16x1xf32, #tpu.memory_space<vmem>>, vector<16x1xf32>
      %c0_11 = arith.constant 0 : index
      %c0_12 = arith.constant 0 : index
      %17 = vector.load %arg3[%c0_11, %c0_12] : memref<1x1xf32, #tpu.memory_space<vmem>>, vector<1x1xf32>
      %18 = vector.broadcast %17 : vector<1x1xf32> to vector<16x1xf32>
      %19 = arith.addf %16, %18 : vector<16x1xf32>
      %c0_13 = arith.constant 0 : index
      %c0_14 = arith.constant 0 : index
      %20 = vector.load %arg4[%c0_13, %c0_14] : memref<16x1xf32, #tpu.memory_space<vmem>>, vector<16x1xf32>
      tpu.vector_store %arg4[%c0_13, %c0_14], %19 {strides = array<i32>} : memref<16x1xf32, #tpu.memory_space<vmem>>, vector<16x1xf32>,
    } else {
    }
    return
  }
  func.func @transform_0(%arg0: i32) -> (i32, i32) {
    %c0_i32 = arith.constant 0 : i32
    %c0_i32_0 = arith.constant 0 : i32
    return %c0_i32, %arg0 : i32, i32
  }
  func.func @transform_1(%arg0: i32) -> (i32, i32) {
    %c0_i32 = arith.constant 0 : i32
    %c0_i32_0 = arith.constant 0 : i32
    return %c0_i32, %arg0 : i32, i32
  }
  func.func @transform_2(%arg0: i32) -> (i32, i32) {
    %c0_i32 = arith.constant 0 : i32
    %c0_i32_0 = arith.constant 0 : i32
    %c0_i32_1 = arith.constant 0 : i32
    return %c0_i32, %c0_i32_0 : i32, i32
  }
  func.func @transform_3(%arg0: i32) -> (i32, i32) {
    %c0_i32 = arith.constant 0 : i32
    %c0_i32_0 = arith.constant 0 : i32
    %c0_i32_1 = arith.constant 0 : i32
    return %c0_i32, %c0_i32_0 : i32, i32
  }
}

</mosaic_0001>

<llo_original>
// kernel: discriminator_forward.5
$region0: #{discriminator_forward.5}
  #allocation0 [shape = 'u32[]', space=smem, size = 0x4, offset = 0x4, fixed_abs, tag = 'smem constant byte address 0x4 - core index']
  #allocation1 [shape = 'u32[144,128]{1,0:T(1,128)}', space=vmem, size = 0x12000, scoped, tag = 'internal scratch']
  #allocation2 [shape = 'f32[512,128]{1,0:T(8,128)}', space=vmem, size = 0x40000, scoped, tag = 'scratch operand']
  %s0 = inlined_call_operand.vmem [shape: bf16[512,64], index: 0, kind: input, shape index: {}]
  %s1 = inlined_call_operand.vmem [shape: bf16[64,128], index: 1, kind: input, shape index: {}]
  %s2 = inlined_call_operand.vmem [shape: f32[1,128], index: 2, kind: input, shape index: {}]
  %s3 = inlined_call_operand.vmem [shape: bf16[512,128], index: 3, kind: output, shape index: {}]
  %s4 = sld [smem:[#allocation0]]
  $region30: #{discriminator_forward.5} parent=0
    _
  %s6 = ssub.s32 1, %s4
  %s7 = scalar_select 0, %s6, %s4
  // Predicated region
  $region2: #{discriminator_forward.5} parent=0 // pred_check
    _
  $region3: #{discriminator_forward.5} parent=0 // pred_check_branch
    %9 = sbr.rel (0) target = $region5
  $region4: #{discriminator_forward.5} parent=0 // pred_region
    _
  $region5: #{discriminator_forward.5} parent=0 // pred_fallthru
    _
  // Predicated region
  $region6: #{discriminator_forward.5} parent=0 // pred_check
    _
  $region7: #{discriminator_forward.5} parent=0 // pred_check_branch
    %11 = sbr.rel (0) target = $region9
  $region8: #{discriminator_forward.5} parent=0 // pred_region
    _
  $region9: #{discriminator_forward.5} parent=0 // pred_fallthru
    _
  // Predicated region
  $region10: #{discriminator_forward.5} parent=0 // pred_check
    _
  $region11: #{discriminator_forward.5} parent=0 // pred_check_branch
    %13 = sbr.rel (0) target = $region13
  $region12: #{discriminator_forward.5} parent=0 // pred_region
    _
  $region13: #{discriminator_forward.5} parent=0 // pred_fallthru
    _
  %p15 = scmp.eq.s32.totalorder 0, 0
  // Predicated region
  $region14: #{discriminator_forward.5} parent=0 // pred_check
    %p16 = pneg %p15
  $region15: #{discriminator_forward.5} parent=0 // pred_check_branch
    %18 = sbr.rel (%p16) target = $region17
  $region16: #{discriminator_forward.5} parent=0 // pred_region
    %19 = vst [vmem:[#allocation2] sm:$0xff] 0.0
    %20 = vst [vmem:[#allocation2 + $0x8] sm:$0xff] 0.0
    %21 = vst [vmem:[#allocation2 + $0x10] sm:$0xff] 0.0
    %22 = vst [vmem:[#allocation2 + $0x18] sm:$0xff] 0.0
    %23 = vst [vmem:[#allocation2 + $0x20] sm:$0xff] 0.0
    %24 = vst [vmem:[#allocation2 + $0x28] sm:$0xff] 0.0
    %25 = vst [vmem:[#allocation2 + $0x30] sm:$0xff] 0.0
    %26 = vst [vmem:[#allocation2 + $0x38] sm:$0xff] 0.0
    %27 = vst [vmem:[#allocation2 + $0x40] sm:$0xff] 0.0
    %28 = vst [vmem:[#allocation2 + $0x48] sm:$0xff] 0.0
    %29 = vst [vmem:[#allocation2 + $0x50] sm:$0xff] 0.0
    %30 = vst [vmem:[#allocation2 + $0x58] sm:$0xff] 0.0
    %31 = vst [vmem:[#allocation2 + $0x60] sm:$0xff] 0.0
    %32 = vst [vmem:[#allocation2 + $0x68] sm:$0xff] 0.0
    %33 = vst [vmem:[#allocation2 + $0x70] sm:$0xff] 0.0
    %34 = vst [vmem:[#allocation2 + $0x78] sm:$0xff] 0.0
    %35 = vst [vmem:[#allocation2 + $0x80] sm:$0xff] 0.0
    %36 = vst [vmem:[#allocation2 + $0x88] sm:$0xff] 0.0
    %37 = vst [vmem:[#allocation2 + $0x90] sm:$0xff] 0.0
    %38 = vst [vmem:[#allocation2 + $0x98] sm:$0xff] 0.0
    %39 = vst [vmem:[#allocation2 + $0xa0] sm:$0xff] 0.0
    %40 = vst [vmem:[#allocation2 + $0xa8] sm:$0xff] 0.0
    %41 = vst [vmem:[#allocation2 + $0xb0] sm:$0xff] 0.0
    %42 = vst [vmem:[#allocation2 + $0xb8] sm:$0xff] 0.0
    %43 = vst [vmem:[#allocation2 + $0xc0] sm:$0xff] 0.0
    %44 = vst [vmem:[#allocation2 + $0xc8] sm:$0xff] 0.0
    %45 = vst [vmem:[#allocation2 + $0xd0] sm:$0xff] 0.0
    %46 = vst [vmem:[#allocation2 + $0xd8] sm:$0xff] 0.0
    %47 = vst [vmem:[#allocation2 + $0xe0] sm:$0xff] 0.0
    %48 = vst [vmem:[#allocation2 + $0xe8] sm:$0xff] 0.0
    %49 = vst [vmem:[#allocation2 + $0xf0] sm:$0xff] 0.0
    %50 = vst [vmem:[#allocation2 + $0xf8] sm:$0xff] 0.0
    %51 = vst [vmem:[#allocation2 + $0x100] sm:$0xff] 0.0
    %52 = vst [vmem:[#allocation2 + $0x108] sm:$0xff] 0.0
    %53 = vst [vmem:[#allocation2 + $0x110] sm:$0xff] 0.0
    %54 = vst [vmem:[#allocation2 + $0x118] sm:$0xff] 0.0
    %55 = vst [vmem:[#allocation2 + $0x120] sm:$0xff] 0.0
    %56 = vst [vmem:[#allocation2 + $0x128] sm:$0xff] 0.0
    %57 = vst [vmem:[#allocation2 + $0x130] sm:$0xff] 0.0
    %58 = vst [vmem:[#allocation2 + $0x138] sm:$0xff] 0.0
    %59 = vst [vmem:[#allocation2 + $0x140] sm:$0xff] 0.0
    %60 = vst [vmem:[#allocation2 + $0x148] sm:$0xff] 0.0
    %61 = vst [vmem:[#allocation2 + $0x150] sm:$0xff] 0.0
    %62 = vst [vmem:[#allocation2 + $0x158] sm:$0xff] 0.0
    %63 = vst [vmem:[#allocation2 + $0x160] sm:$0xff] 0.0
    %64 = vst [vmem:[#allocation2 + $0x168] sm:$0xff] 0.0
    %65 = vst [vmem:[#allocation2 + $0x170] sm:$0xff] 0.0
    %66 = vst [vmem:[#allocation2 + $0x178] sm:$0xff] 0.0
    %67 = vst [vmem:[#allocation2 + $0x180] sm:$0xff] 0.0
    %68 = vst [vmem:[#allocation2 + $0x188] sm:$0xff] 0.0
    %69 = vst [vmem:[#allocation2 + $0x190] sm:$0xff] 0.0
    %70 = vst [vmem:[#allocation2 + $0x198] sm:$0xff] 0.0
    %71 = vst [vmem:[#allocation2 + $0x1a0] sm:$0xff] 0.0
    %72 = vst [vmem:[#allocation2 + $0x1a8] sm:$0xff] 0.0
    %73 = vst [vmem:[#allocation2 + $0x1b0] sm:$0xff] 0.0
    %74 = vst [vmem:[#allocation2 + $0x1b8] sm:$0xff] 0.0
    %75 = vst [vmem:[#allocation2 + $0x1c0] sm:$0xff] 0.0
    %76 = vst [vmem:[#allocation2 + $0x1c8] sm:$0xff] 0.0
    %77 = vst [vmem:[#allocation2 + $0x1d0] sm:$0xff] 0.0
    %78 = vst [vmem:[#allocation2 + $0x1d8] sm:$0xff] 0.0
    %79 = vst [vmem:[#allocation2 + $0x1e0] sm:$0xff] 0.0
    %80 = vst [vmem:[#allocation2 + $0x1e8] sm:$0xff] 0.0
    %81 = vst [vmem:[#allocation2 + $0x1f0] sm:$0xff] 0.0
    %82 = vst [vmem:[#allocation2 + $0x1f8] sm:$0xff] 0.0
  $region17: #{discriminator_forward.5} parent=0 // pred_fallthru
    _
  %v83 = vld [vmem:[#allocation2] sm:$0xff]
  %v84 = vld [vmem:[#allocation2 + $0x8] sm:$0xff]
  %v85 = vld [vmem:[#allocation2 + $0x10] sm:$0xff]
  %v86 = vld [vmem:[#allocation2 + $0x18] sm:$0xff]
  %v87 = vld [vmem:[#allocation2 + $0x20] sm:$0xff]
  %v88 = vld [vmem:[#allocation2 + $0x28] sm:$0xff]
  %v89 = vld [vmem:[#allocation2 + $0x30] sm:$0xff]
  %v90 = vld [vmem:[#allocation2 + $0x38] sm:$0xff]
  %v91 = vld [vmem:[#allocation2 + $0x40] sm:$0xff]
  %v92 = vld [vmem:[#allocation2 + $0x48] sm:$0xff]
  %v93 = vld [vmem:[#allocation2 + $0x50] sm:$0xff]
  %v94 = vld [vmem:[#allocation2 + $0x58] sm:$0xff]
  %v95 = vld [vmem:[#allocation2 + $0x60] sm:$0xff]
  %v96 = vld [vmem:[#allocation2 + $0x68] sm:$0xff]
  %v97 = vld [vmem:[#allocation2 + $0x70] sm:$0xff]
  %v98 = vld [vmem:[#allocation2 + $0x78] sm:$0xff]
  %v99 = vld [vmem:[#allocation2 + $0x80] sm:$0xff]
  %v100 = vld [vmem:[#allocation2 + $0x88] sm:$0xff]
  %v101 = vld [vmem:[#allocation2 + $0x90] sm:$0xff]
  %v102 = vld [vmem:[#allocation2 + $0x98] sm:$0xff]
  %v103 = vld [vmem:[#allocation2 + $0xa0] sm:$0xff]
  %v104 = vld [vmem:[#allocation2 + $0xa8] sm:$0xff]
  %v105 = vld [vmem:[#allocation2 + $0xb0] sm:$0xff]
  %v106 = vld [vmem:[#allocation2 + $0xb8] sm:$0xff]
  %v107 = vld [vmem:[#allocation2 + $0xc0] sm:$0xff]
  %v108 = vld [vmem:[#allocation2 + $0xc8] sm:$0xff]
  %v109 = vld [vmem:[#allocation2 + $0xd0] sm:$0xff]
  %v110 = vld [vmem:[#allocation2 + $0xd8] sm:$0xff]
  %v111 = vld [vmem:[#allocation2 + $0xe0] sm:$0xff]
  %v112 = vld [vmem:[#allocation2 + $0xe8] sm:$0xff]
  %v113 = vld [vmem:[#allocation2 + $0xf0] sm:$0xff]
  %v114 = vld [vmem:[#allocation2 + $0xf8] sm:$0xff]
  %v115 = vld [vmem:[#allocation2 + $0x100] sm:$0xff]
  %v116 = vld [vmem:[#allocation2 + $0x108] sm:$0xff]
  %v117 = vld [vmem:[#allocation2 + $0x110] sm:$0xff]
  %v118 = vld [vmem:[#allocation2 + $0x118] sm:$0xff]
  %v119 = vld [vmem:[#allocation2 + $0x120] sm:$0xff]
  %v120 = vld [vmem:[#allocation2 + $0x128] sm:$0xff]
  %v121 = vld [vmem:[#allocation2 + $0x130] sm:$0xff]
  %v122 = vld [vmem:[#allocation2 + $0x138] sm:$0xff]
  %v123 = vld [vmem:[#allocation2 + $0x140] sm:$0xff]
  %v124 = vld [vmem:[#allocation2 + $0x148] sm:$0xff]
  %v125 = vld [vmem:[#allocation2 + $0x150] sm:$0xff]
  %v126 = vld [vmem:[#allocation2 + $0x158] sm:$0xff]
  %v127 = vld [vmem:[#allocation2 + $0x160] sm:$0xff]
  %v128 = vld [vmem:[#allocation2 + $0x168] sm:$0xff]
  %v129 = vld [vmem:[#allocation2 + $0x170] sm:$0xff]
  %v130 = vld [vmem:[#allocation2 + $0x178] sm:$0xff]
  %v131 = vld [vmem:[#allocation2 + $0x180] sm:$0xff]
  %v132 = vld [vmem:[#allocation2 + $0x188] sm:$0xff]
  %v133 = vld [vmem:[#allocation2 + $0x190] sm:$0xff]
  %v134 = vld [vmem:[#allocation2 + $0x198] sm:$0xff]
  %v135 = vld [vmem:[#allocation2 + $0x1a0] sm:$0xff]
  %v136 = vld [vmem:[#allocation2 + $0x1a8] sm:$0xff]
  %v137 = vld [vmem:[#allocation2 + $0x1b0] sm:$0xff]
  %v138 = vld [vmem:[#allocation2 + $0x1b8] sm:$0xff]
  %v139 = vld [vmem:[#allocation2 + $0x1c0] sm:$0xff]
  %v140 = vld [vmem:[#allocation2 + $0x1c8] sm:$0xff]
  %v141 = vld [vmem:[#allocation2 + $0x1d0] sm:$0xff]
  %v142 = vld [vmem:[#allocation2 + $0x1d8] sm:$0xff]
  %v143 = vld [vmem:[#allocation2 + $0x1e0] sm:$0xff]
  %v144 = vld [vmem:[#allocation2 + $0x1e8] sm:$0xff]
  %v145 = vld [vmem:[#allocation2 + $0x1f0] sm:$0xff]
  %v146 = vld [vmem:[#allocation2 + $0x1f8] sm:$0xff]
  %v147 = vld [vmem:[%s0] sm:$0xf]
  %v148 = vld [vmem:[%s0 + $0x4] sm:$0xf]
  %v149 = vld [vmem:[%s0 + $0x8] sm:$0xf]
  %v150 = vld [vmem:[%s0 + $0xc] sm:$0xf]
  %v151 = vld [vmem:[%s0 + $0x10] sm:$0xf]
  %v152 = vld [vmem:[%s0 + $0x14] sm:$0xf]
  %v153 = vld [vmem:[%s0 + $0x18] sm:$0xf]
  %v154 = vld [vmem:[%s0 + $0x1c] sm:$0xf]
  %v155 = vld [vmem:[%s0 + $0x20] sm:$0xf]
  %v156 = vld [vmem:[%s0 + $0x24] sm:$0xf]
  %v157 = vld [vmem:[%s0 + $0x28] sm:$0xf]
  %v158 = vld [vmem:[%s0 + $0x2c] sm:$0xf]
  %v159 = vld [vmem:[%s0 + $0x30] sm:$0xf]
  %v160 = vld [vmem:[%s0 + $0x34] sm:$0xf]
  %v161 = vld [vmem:[%s0 + $0x38] sm:$0xf]
  %v162 = vld [vmem:[%s0 + $0x3c] sm:$0xf]
  %v163 = vld [vmem:[%s0 + $0x40] sm:$0xf]
  %v164 = vld [vmem:[%s0 + $0x44] sm:$0xf]
  %v165 = vld [vmem:[%s0 + $0x48] sm:$0xf]
  %v166 = vld [vmem:[%s0 + $0x4c] sm:$0xf]
  %v167 = vld [vmem:[%s0 + $0x50] sm:$0xf]
  %v168 = vld [vmem:[%s0 + $0x54] sm:$0xf]
  %v169 = vld [vmem:[%s0 + $0x58] sm:$0xf]
  %v170 = vld [vmem:[%s0 + $0x5c] sm:$0xf]
  %v171 = vld [vmem:[%s0 + $0x60] sm:$0xf]
  %v172 = vld [vmem:[%s0 + $0x64] sm:$0xf]
  %v173 = vld [vmem:[%s0 + $0x68] sm:$0xf]
  %v174 = vld [vmem:[%s0 + $0x6c] sm:$0xf]
  %v175 = vld [vmem:[%s0 + $0x70] sm:$0xf]
  %v176 = vld [vmem:[%s0 + $0x74] sm:$0xf]
  %v177 = vld [vmem:[%s0 + $0x78] sm:$0xf]
  %v178 = vld [vmem:[%s0 + $0x7c] sm:$0xf]
  %v179 = vld [vmem:[%s0 + $0x80] sm:$0xf]
  %v180 = vld [vmem:[%s0 + $0x84] sm:$0xf]
  %v181 = vld [vmem:[%s0 + $0x88] sm:$0xf]
  %v182 = vld [vmem:[%s0 + $0x8c] sm:$0xf]
  %v183 = vld [vmem:[%s0 + $0x90] sm:$0xf]
  %v184 = vld [vmem:[%s0 + $0x94] sm:$0xf]
  %v185 = vld [vmem:[%s0 + $0x98] sm:$0xf]
  %v186 = vld [vmem:[%s0 + $0x9c] sm:$0xf]
  %v187 = vld [vmem:[%s0 + $0xa0] sm:$0xf]
  %v188 = vld [vmem:[%s0 + $0xa4] sm:$0xf]
  %v189 = vld [vmem:[%s0 + $0xa8] sm:$0xf]
  %v190 = vld [vmem:[%s0 + $0xac] sm:$0xf]
  %v191 = vld [vmem:[%s0 + $0xb0] sm:$0xf]
  %v192 = vld [vmem:[%s0 + $0xb4] sm:$0xf]
  %v193 = vld [vmem:[%s0 + $0xb8] sm:$0xf]
  %v194 = vld [vmem:[%s0 + $0xbc] sm:$0xf]
  %v195 = vld [vmem:[%s0 + $0xc0] sm:$0xf]
  %v196 = vld [vmem:[%s0 + $0xc4] sm:$0xf]
  %v197 = vld [vmem:[%s0 + $0xc8] sm:$0xf]
  %v198 = vld [vmem:[%s0 + $0xcc] sm:$0xf]
  %v199 = vld [vmem:[%s0 + $0xd0] sm:$0xf]
  %v200 = vld [vmem:[%s0 + $0xd4] sm:$0xf]
  %v201 = vld [vmem:[%s0 + $0xd8] sm:$0xf]
  %v202 = vld [vmem:[%s0 + $0xdc] sm:$0xf]
  %v203 = vld [vmem:[%s0 + $0xe0] sm:$0xf]
  %v204 = vld [vmem:[%s0 + $0xe4] sm:$0xf]
  %v205 = vld [vmem:[%s0 + $0xe8] sm:$0xf]
  %v206 = vld [vmem:[%s0 + $0xec] sm:$0xf]
  %v207 = vld [vmem:[%s0 + $0xf0] sm:$0xf]
  %v208 = vld [vmem:[%s0 + $0xf4] sm:$0xf]
  %v209 = vld [vmem:[%s0 + $0xf8] sm:$0xf]
  %v210 = vld [vmem:[%s0 + $0xfc] sm:$0xf]
  %v211 = vld [vmem:[%s1] sm:$0xf]
  %v212 = vld [vmem:[%s1 + $0x4] sm:$0xf]
  %v213 = vld [vmem:[%s1 + $0x8] sm:$0xf]
  %v214 = vld [vmem:[%s1 + $0xc] sm:$0xf]
  %v215 = vld [vmem:[%s1 + $0x10] sm:$0xf]
  %v216 = vld [vmem:[%s1 + $0x14] sm:$0xf]
  %v217 = vld [vmem:[%s1 + $0x18] sm:$0xf]
  %v218 = vld [vmem:[%s1 + $0x1c] sm:$0xf]
  %v283 = vunpack.c.l.b16 %v147
  %v284 = vunpack.c.l.b16 %v148
  %v285 = vunpack.c.l.b16 %v149
  %v286 = vunpack.c.l.b16 %v150
  %v287 = vunpack.c.l.b16 %v151
  %v288 = vunpack.c.l.b16 %v152
  %v289 = vunpack.c.l.b16 %v153
  %v290 = vunpack.c.l.b16 %v154
  %v291 = vunpack.c.l.b16 %v155
  %v292 = vunpack.c.l.b16 %v156
  %v293 = vunpack.c.l.b16 %v157
  %v294 = vunpack.c.l.b16 %v158
  %v295 = vunpack.c.l.b16 %v159
  %v296 = vunpack.c.l.b16 %v160
  %v297 = vunpack.c.l.b16 %v161
  %v298 = vunpack.c.l.b16 %v162
  %v299 = vunpack.c.l.b16 %v163
  %v300 = vunpack.c.l.b16 %v164
  %v301 = vunpack.c.l.b16 %v165
  %v302 = vunpack.c.l.b16 %v166
  %v303 = vunpack.c.l.b16 %v167
  %v304 = vunpack.c.l.b16 %v168
  %v305 = vunpack.c.l.b16 %v169
  %v306 = vunpack.c.l.b16 %v170
  %v307 = vunpack.c.l.b16 %v171
  %v308 = vunpack.c.l.b16 %v172
  %v309 = vunpack.c.l.b16 %v173
  %v310 = vunpack.c.l.b16 %v174
  %v311 = vunpack.c.l.b16 %v175
  %v312 = vunpack.c.l.b16 %v176
  %v313 = vunpack.c.l.b16 %v177
  %v314 = vunpack.c.l.b16 %v178
  %v315 = vunpack.c.l.b16 %v179
  %v316 = vunpack.c.l.b16 %v180
  %v317 = vunpack.c.l.b16 %v181
  %v318 = vunpack.c.l.b16 %v182
  %v319 = vunpack.c.l.b16 %v183
  %v320 = vunpack.c.l.b16 %v184
  %v321 = vunpack.c.l.b16 %v185
  %v322 = vunpack.c.l.b16 %v186
  %v323 = vunpack.c.l.b16 %v187
  %v324 = vunpack.c.l.b16 %v188
  %v325 = vunpack.c.l.b16 %v189
  %v326 = vunpack.c.l.b16 %v190
  %v327 = vunpack.c.l.b16 %v191
  %v328 = vunpack.c.l.b16 %v192
  %v329 = vunpack.c.l.b16 %v193
  %v330 = vunpack.c.l.b16 %v194
  %v331 = vunpack.c.l.b16 %v195
  %v332 = vunpack.c.l.b16 %v196
  %v333 = vunpack.c.l.b16 %v197
  %v334 = vunpack.c.l.b16 %v198
  %v335 = vunpack.c.l.b16 %v199
  %v336 = vunpack.c.l.b16 %v200
  %v337 = vunpack.c.l.b16 %v201
  %v338 = vunpack.c.l.b16 %v202
  %v339 = vunpack.c.l.b16 %v203
  %v340 = vunpack.c.l.b16 %v204
  %v341 = vunpack.c.l.b16 %v205
  %v342 = vunpack.c.l.b16 %v206
  %v343 = vunpack.c.l.b16 %v207
  %v344 = vunpack.c.l.b16 %v208
  %v345 = vunpack.c.l.b16 %v209
  %v346 = vunpack.c.l.b16 %v210
  %v347 = vpack.c.b16 %v284, %v283
  %v348 = vpack.c.b16 %v286, %v285
  %v349 = vpack.c.b16 %v288, %v287
  %v350 = vpack.c.b16 %v290, %v289
  %v351 = vpack.c.b16 %v292, %v291
  %v352 = vpack.c.b16 %v294, %v293
  %v353 = vpack.c.b16 %v296, %v295
  %v354 = vpack.c.b16 %v298, %v297
  %v355 = vpack.c.b16 %v300, %v299
  %v356 = vpack.c.b16 %v302, %v301
  %v357 = vpack.c.b16 %v304, %v303
  %v358 = vpack.c.b16 %v306, %v305
  %v359 = vpack.c.b16 %v308, %v307
  %v360 = vpack.c.b16 %v310, %v309
  %v361 = vpack.c.b16 %v312, %v311
  %v362 = vpack.c.b16 %v314, %v313
  %v363 = vpack.c.b16 %v316, %v315
  %v364 = vpack.c.b16 %v318, %v317
  %v365 = vpack.c.b16 %v320, %v319
  %v366 = vpack.c.b16 %v322, %v321
  %v367 = vpack.c.b16 %v324, %v323
  %v368 = vpack.c.b16 %v326, %v325
  %v369 = vpack.c.b16 %v328, %v327
  %v370 = vpack.c.b16 %v330, %v329
  %v371 = vpack.c.b16 %v332, %v331
  %v372 = vpack.c.b16 %v334, %v333
  %v373 = vpack.c.b16 %v336, %v335
  %v374 = vpack.c.b16 %v338, %v337
  %v375 = vpack.c.b16 %v340, %v339
  %v376 = vpack.c.b16 %v342, %v341
  %v377 = vpack.c.b16 %v344, %v343
  %v378 = vpack.c.b16 %v346, %v345
  %v387 = vunpack.c.l.b16 %v211
  %v388 = vunpack.c.l.b16 %v212
  %v389 = vunpack.c.l.b16 %v213
  %v390 = vunpack.c.l.b16 %v214
  %v391 = vunpack.c.l.b16 %v215
  %v392 = vunpack.c.l.b16 %v216
  %v393 = vunpack.c.l.b16 %v217
  %v394 = vunpack.c.l.b16 %v218
  %v395 = vpack.c.b16 %v388, %v387
  %v396 = vpack.c.b16 %v390, %v389
  %v397 = vpack.c.b16 %v392, %v391
  %v398 = vpack.c.b16 %v394, %v393
  %vm403 = vcmask 523264
  %v405 = vsel %vm403, %v347, 0
  %v408 = vsel %vm403, %v348, 0
  %v411 = vsel %vm403, %v349, 0
  %v414 = vsel %vm403, %v350, 0
  %v417 = vsel %vm403, %v351, 0
  %v420 = vsel %vm403, %v352, 0
  %v423 = vsel %vm403, %v353, 0
  %v426 = vsel %vm403, %v354, 0
  %v429 = vsel %vm403, %v355, 0
  %v432 = vsel %vm403, %v356, 0
  %v435 = vsel %vm403, %v357, 0
  %v438 = vsel %vm403, %v358, 0
  %v441 = vsel %vm403, %v359, 0
  %v444 = vsel %vm403, %v360, 0
  %v447 = vsel %vm403, %v361, 0
  %v450 = vsel %vm403, %v362, 0
  %v453 = vsel %vm403, %v363, 0
  %v456 = vsel %vm403, %v364, 0
  %v459 = vsel %vm403, %v365, 0
  %v462 = vsel %vm403, %v366, 0
  %v465 = vsel %vm403, %v367, 0
  %v468 = vsel %vm403, %v368, 0
  %v471 = vsel %vm403, %v369, 0
  %v474 = vsel %vm403, %v370, 0
  %v477 = vsel %vm403, %v371, 0
  %v480 = vsel %vm403, %v372, 0
  %v483 = vsel %vm403, %v373, 0
  %v486 = vsel %vm403, %v374, 0
  %v489 = vsel %vm403, %v375, 0
  %v492 = vsel %vm403, %v376, 0
  %v495 = vsel %vm403, %v377, 0
  %v498 = vsel %vm403, %v378, 0
  %500 = vmatprep.subr.bf16.mxu0 0
  %501 = vmatpush1.bf16.msra.mxu0 %v395
  %502 = vmatprep.subr.bf16.mxu0 0
  %503 = vmatpush1.bf16.msra.mxu0 %v396
  %504 = vmatprep.subr.bf16.mxu0 0
  %505 = vmatpush1.bf16.msra.mxu0 %v397
  %506 = vmatprep.subr.bf16.mxu0 0
  %507 = vmatpush1.bf16.msra.mxu0 %v398
  %508 = vmatprep.subr.bf16.mxu0 0
  %509 = vmatpush1.bf16.msra.mxu0 0
  %510 = vmatprep.subr.bf16.mxu0 0
  %511 = vmatpush1.bf16.msra.mxu0 0
  %512 = vmatprep.subr.bf16.mxu0 0
  %513 = vmatpush1.bf16.msra.mxu0 0
  %514 = vmatprep.subr.bf16.mxu0 0
  %515 = vmatpush1.bf16.msra.mxu0 0
  %516 = vmatprep.subr.bf16.mxu0 0
  %517 = vmatpush1.bf16.msra.mxu0 0
  %518 = vmatprep.subr.bf16.mxu0 0
  %519 = vmatpush1.bf16.msra.mxu0 0
  %520 = vmatprep.subr.bf16.mxu0 0
  %521 = vmatpush1.bf16.msra.mxu0 0
  %522 = vmatprep.subr.bf16.mxu0 0
  %523 = vmatpush1.bf16.msra.mxu0 0
  %524 = vmatprep.subr.bf16.mxu0 0
  %525 = vmatpush1.bf16.msra.mxu0 0
  %526 = vmatprep.subr.bf16.mxu0 0
  %527 = vmatpush1.bf16.msra.mxu0 0
  %528 = vmatprep.subr.bf16.mxu0 0
  %529 = vmatpush1.bf16.msra.mxu0 0
  %530 = vmatprep.subr.bf16.mxu0 0
  %531 = vmatpush1.bf16.msra.mxu0 0
  %532 = vmatprep.mubr.bf16.mxu0 0
  %533 = vmatmul.mubr.bf16.gmra.mrb[0].mxu0 %v405
  %v534 = vpop.f32.mrb[0].mxu0
  %v535 = vadd.f32 0.0, %v534
  %v536 = vpop.f32.mrb[0].mxu0
  %v537 = vpop.f32.mrb[0].mxu0
  %v538 = vadd.f32 0.0, %v537
  %v539 = vpop.f32.mrb[0].mxu0
  %540 = vmatprep.mubr.bf16.mxu0 0
  %541 = vmatmul.mubr.bf16.gmra.mrb[0].mxu0 %v408
  %v542 = vpop.f32.mrb[0].mxu0
  %v543 = vadd.f32 0.0, %v542
  %v544 = vpop.f32.mrb[0].mxu0
  %v545 = vpop.f32.mrb[0].mxu0
  %v546 = vadd.f32 0.0, %v545
  %v547 = vpop.f32.mrb[0].mxu0
  %548 = vmatprep.mubr.bf16.mxu0 0
  %549 = vmatmul.mubr.bf16.gmra.mrb[0].mxu0 %v411
  %v550 = vpop.f32.mrb[0].mxu0
  %v551 = vadd.f32 0.0, %v550
  %v552 = vpop.f32.mrb[0].mxu0
  %v553 = vpop.f32.mrb[0].mxu0
  %v554 = vadd.f32 0.0, %v553
  %v555 = vpop.f32.mrb[0].mxu0
  %556 = vmatprep.mubr.bf16.mxu0 0
  %557 = vmatmul.mubr.bf16.gmra.mrb[0].mxu0 %v414
  %v558 = vpop.f32.mrb[0].mxu0
  %v559 = vadd.f32 0.0, %v558
  %v560 = vpop.f32.mrb[0].mxu0
  %v561 = vpop.f32.mrb[0].mxu0
  %v562 = vadd.f32 0.0, %v561
  %v563 = vpop.f32.mrb[0].mxu0
  %564 = vmatprep.mubr.bf16.mxu0 0
  %565 = vmatmul.mubr.bf16.gmra.mrb[0].mxu0 %v417
  %v566 = vpop.f32.mrb[0].mxu0
  %v567 = vadd.f32 0.0, %v566
  %v568 = vpop.f32.mrb[0].mxu0
  %v569 = vpop.f32.mrb[0].mxu0
  %v570 = vadd.f32 0.0, %v569
  %v571 = vpop.f32.mrb[0].mxu0
  %572 = vmatprep.mubr.bf16.mxu0 0
  %573 = vmatmul.mubr.bf16.gmra.mrb[0].mxu0 %v420
  %v574 = vpop.f32.mrb[0].mxu0
  %v575 = vadd.f32 0.0, %v574
  %v576 = vpop.f32.mrb[0].mxu0
  %v577 = vpop.f32.mrb[0].mxu0
  %v578 = vadd.f32 0.0, %v577
  %v579 = vpop.f32.mrb[0].mxu0
  %580 = vmatprep.mubr.bf16.mxu0 0
  %581 = vmatmul.mubr.bf16.gmra.mrb[0].mxu0 %v423
  %v582 = vpop.f32.mrb[0].mxu0
  %v583 = vadd.f32 0.0, %v582
  %v584 = vpop.f32.mrb[0].mxu0
  %v585 = vpop.f32.mrb[0].mxu0
  %v586 = vadd.f32 0.0, %v585
  %v587 = vpop.f32.mrb[0].mxu0
  %588 = vmatprep.mubr.bf16.mxu0 0
  %589 = vmatmul.mubr.bf16.gmra.mrb[0].mxu0 %v426
  %v590 = vpop.f32.mrb[0].mxu0
  %v591 = vadd.f32 0.0, %v590
  %v592 = vpop.f32.mrb[0].mxu0
  %v593 = vpop.f32.mrb[0].mxu0
  %v594 = vadd.f32 0.0, %v593
  %v595 = vpop.f32.mrb[0].mxu0
  %596 = vmatprep.mubr.bf16.mxu0 0
  %597 = vmatmul.mubr.bf16.gmra.mrb[0].mxu0 %v429
  %v598 = vpop.f32.mrb[0].mxu0
  %v599 = vadd.f32 0.0, %v598
  %v600 = vpop.f32.mrb[0].mxu0
  %v601 = vpop.f32.mrb[0].mxu0
  %v602 = vadd.f32 0.0, %v601
  %v603 = vpop.f32.mrb[0].mxu0
  %604 = vmatprep.mubr.bf16.mxu0 0
  %605 = vmatmul.mubr.bf16.gmra.mrb[0].mxu0 %v432
  %v606 = vpop.f32.mrb[0].mxu0
  %v607 = vadd.f32 0.0, %v606
  %v608 = vpop.f32.mrb[0].mxu0
  %v609 = vpop.f32.mrb[0].mxu0
  %v610 = vadd.f32 0.0, %v609
  %v611 = vpop.f32.mrb[0].mxu0
  %612 = vmatprep.mubr.bf16.mxu0 0
  %613 = vmatmul.mubr.bf16.gmra.mrb[0].mxu0 %v435
  %v614 = vpop.f32.mrb[0].mxu0
  %v615 = vadd.f32 0.0, %v614
  %v616 = vpop.f32.mrb[0].mxu0
  %v617 = vpop.f32.mrb[0].mxu0
  %v618 = vadd.f32 0.0, %v617
  %v619 = vpop.f32.mrb[0].mxu0
  %620 = vmatprep.mubr.bf16.mxu0 0
  %621 = vmatmul.mubr.bf16.gmra.mrb[0].mxu0 %v438
  %v622 = vpop.f32.mrb[0].mxu0
  %v623 = vadd.f32 0.0, %v622
  %v624 = vpop.f32.mrb[0].mxu0
  %v625 = vpop.f32.mrb[0].mxu0
  %v626 = vadd.f32 0.0, %v625
  %v627 = vpop.f32.mrb[0].mxu0
  %628 = vmatprep.mubr.bf16.mxu0 0
  %629 = vmatmul.mubr.bf16.gmra.mrb[0].mxu0 %v441
  %v630 = vpop.f32.mrb[0].mxu0
  %v631 = vadd.f32 0.0, %v630
  %v632 = vpop.f32.mrb[0].mxu0
  %v633 = vpop.f32.mrb[0].mxu0
  %v634 = vadd.f32 0.0, %v633
  %v635 = vpop.f32.mrb[0].mxu0
  %636 = vmatprep.mubr.bf16.mxu0 0
  %637 = vmatmul.mubr.bf16.gmra.mrb[0].mxu0 %v444
  %v638 = vpop.f32.mrb[0].mxu0
  %v639 = vadd.f32 0.0, %v638
  %v640 = vpop.f32.mrb[0].mxu0
  %v641 = vpop.f32.mrb[0].mxu0
  %v642 = vadd.f32 0.0, %v641
  %v643 = vpop.f32.mrb[0].mxu0
  %644 = vmatprep.mubr.bf16.mxu0 0
  %645 = vmatmul.mubr.bf16.gmra.mrb[0].mxu0 %v447
  %v646 = vpop.f32.mrb[0].mxu0
  %v647 = vadd.f32 0.0, %v646
  %v648 = vpop.f32.mrb[0].mxu0
  %v649 = vpop.f32.mrb[0].mxu0
  %v650 = vadd.f32 0.0, %v649
  %v651 = vpop.f32.mrb[0].mxu0
  %652 = vmatprep.mubr.bf16.mxu0 0
  %653 = vmatmul.mubr.bf16.gmra.mrb[0].mxu0 %v450
  %v654 = vpop.f32.mrb[0].mxu0
  %v655 = vadd.f32 0.0, %v654
  %v656 = vpop.f32.mrb[0].mxu0
  %v657 = vpop.f32.mrb[0].mxu0
  %v658 = vadd.f32 0.0, %v657
  %v659 = vpop.f32.mrb[0].mxu0
  %660 = vmatprep.mubr.bf16.mxu0 0
  %661 = vmatmul.mubr.bf16.gmra.mrb[0].mxu0 %v453
  %v662 = vpop.f32.mrb[0].mxu0
  %v663 = vadd.f32 0.0, %v662
  %v664 = vpop.f32.mrb[0].mxu0
  %v665 = vpop.f32.mrb[0].mxu0
  %v666 = vadd.f32 0.0, %v665
  %v667 = vpop.f32.mrb[0].mxu0
  %668 = vmatprep.mubr.bf16.mxu0 0
  %669 = vmatmul.mubr.bf16.gmra.mrb[0].mxu0 %v456
  %v670 = vpop.f32.mrb[0].mxu0
  %v671 = vadd.f32 0.0, %v670
  %v672 = vpop.f32.mrb[0].mxu0
  %v673 = vpop.f32.mrb[0].mxu0
  %v674 = vadd.f32 0.0, %v673
  %v675 = vpop.f32.mrb[0].mxu0
  %676 = vmatprep.mubr.bf16.mxu0 0
  %677 = vmatmul.mubr.bf16.gmra.mrb[0].mxu0 %v459
  %v678 = vpop.f32.mrb[0].mxu0
  %v679 = vadd.f32 0.0, %v678
  %v680 = vpop.f32.mrb[0].mxu0
  %v681 = vpop.f32.mrb[0].mxu0
  %v682 = vadd.f32 0.0, %v681
  %v683 = vpop.f32.mrb[0].mxu0
  %684 = vmatprep.mubr.bf16.mxu0 0
  %685 = vmatmul.mubr.bf16.gmra.mrb[0].mxu0 %v462
  %v686 = vpop.f32.mrb[0].mxu0
  %v687 = vadd.f32 0.0, %v686
  %v688 = vpop.f32.mrb[0].mxu0
  %v689 = vpop.f32.mrb[0].mxu0
  %v690 = vadd.f32 0.0, %v689
  %v691 = vpop.f32.mrb[0].mxu0
  %692 = vmatprep.mubr.bf16.mxu0 0
  %693 = vmatmul.mubr.bf16.gmra.mrb[0].mxu0 %v465
  %v694 = vpop.f32.mrb[0].mxu0
  %v695 = vadd.f32 0.0, %v694
  %v696 = vpop.f32.mrb[0].mxu0
  %v697 = vpop.f32.mrb[0].mxu0
  %v698 = vadd.f32 0.0, %v697
  %v699 = vpop.f32.mrb[0].mxu0
  %700 = vmatprep.mubr.bf16.mxu0 0
  %701 = vmatmul.mubr.bf16.gmra.mrb[0].mxu0 %v468
  %v702 = vpop.f32.mrb[0].mxu0
  %v703 = vadd.f32 0.0, %v702
  %v704 = vpop.f32.mrb[0].mxu0
  %v705 = vpop.f32.mrb[0].mxu0
  %v706 = vadd.f32 0.0, %v705
  %v707 = vpop.f32.mrb[0].mxu0
  %708 = vmatprep.mubr.bf16.mxu0 0
  %709 = vmatmul.mubr.bf16.gmra.mrb[0].mxu0 %v471
  %v710 = vpop.f32.mrb[0].mxu0
  %v711 = vadd.f32 0.0, %v710
  %v712 = vpop.f32.mrb[0].mxu0
  %v713 = vpop.f32.mrb[0].mxu0
  %v714 = vadd.f32 0.0, %v713
  %v715 = vpop.f32.mrb[0].mxu0
  %716 = vmatprep.mubr.bf16.mxu0 0
  %717 = vmatmul.mubr.bf16.gmra.mrb[0].mxu0 %v474
  %v718 = vpop.f32.mrb[0].mxu0
  %v719 = vadd.f32 0.0, %v718
  %v720 = vpop.f32.mrb[0].mxu0
  %v721 = vpop.f32.mrb[0].mxu0
  %v722 = vadd.f32 0.0, %v721
  %v723 = vpop.f32.mrb[0].mxu0
  %724 = vmatprep.mubr.bf16.mxu0 0
  %725 = vmatmul.mubr.bf16.gmra.mrb[0].mxu0 %v477
  %v726 = vpop.f32.mrb[0].mxu0
  %v727 = vadd.f32 0.0, %v726
  %v728 = vpop.f32.mrb[0].mxu0
  %v729 = vpop.f32.mrb[0].mxu0
  %v730 = vadd.f32 0.0, %v729
  %v731 = vpop.f32.mrb[0].mxu0
  %732 = vmatprep.mubr.bf16.mxu0 0
  %733 = vmatmul.mubr.bf16.gmra.mrb[0].mxu0 %v480
  %v734 = vpop.f32.mrb[0].mxu0
  %v735 = vadd.f32 0.0, %v734
  %v736 = vpop.f32.mrb[0].mxu0
  %v737 = vpop.f32.mrb[0].mxu0
  %v738 = vadd.f32 0.0, %v737
  %v739 = vpop.f32.mrb[0].mxu0
  %740 = vmatprep.mubr.bf16.mxu0 0
  %741 = vmatmul.mubr.bf16.gmra.mrb[0].mxu0 %v483
  %v742 = vpop.f32.mrb[0].mxu0
  %v743 = vadd.f32 0.0, %v742
  %v744 = vpop.f32.mrb[0].mxu0
  %v745 = vpop.f32.mrb[0].mxu0
  %v746 = vadd.f32 0.0, %v745
  %v747 = vpop.f32.mrb[0].mxu0
  %748 = vmatprep.mubr.bf16.mxu0 0
  %749 = vmatmul.mubr.bf16.gmra.mrb[0].mxu0 %v486
  %v750 = vpop.f32.mrb[0].mxu0
  %v751 = vadd.f32 0.0, %v750
  %v752 = vpop.f32.mrb[0].mxu0
  %v753 = vpop.f32.mrb[0].mxu0
  %v754 = vadd.f32 0.0, %v753
  %v755 = vpop.f32.mrb[0].mxu0
  %756 = vmatprep.mubr.bf16.mxu0 0
  %757 = vmatmul.mubr.bf16.gmra.mrb[0].mxu0 %v489
  %v758 = vpop.f32.mrb[0].mxu0
  %v759 = vadd.f32 0.0, %v758
  %v760 = vpop.f32.mrb[0].mxu0
  %v761 = vpop.f32.mrb[0].mxu0
  %v762 = vadd.f32 0.0, %v761
  %v763 = vpop.f32.mrb[0].mxu0
  %764 = vmatprep.mubr.bf16.mxu0 0
  %765 = vmatmul.mubr.bf16.gmra.mrb[0].mxu0 %v492
  %v766 = vpop.f32.mrb[0].mxu0
  %v767 = vadd.f32 0.0, %v766
  %v768 = vpop.f32.mrb[0].mxu0
  %v769 = vpop.f32.mrb[0].mxu0
  %v770 = vadd.f32 0.0, %v769
  %v771 = vpop.f32.mrb[0].mxu0
  %772 = vmatprep.mubr.bf16.mxu0 0
  %773 = vmatmul.mubr.bf16.gmra.mrb[0].mxu0 %v495
  %v774 = vpop.f32.mrb[0].mxu0
  %v775 = vadd.f32 0.0, %v774
  %v776 = vpop.f32.mrb[0].mxu0
  %v777 = vpop.f32.mrb[0].mxu0
  %v778 = vadd.f32 0.0, %v777
  %v779 = vpop.f32.mrb[0].mxu0
  %780 = vmatprep.mubr.bf16.mxu0 0
  %781 = vmatmul.mubr.bf16.gmra.mrb[0].mxu0 %v498
  %v782 = vpop.f32.mrb[0].mxu0
  %v783 = vadd.f32 0.0, %v782
  %v784 = vpop.f32.mrb[0].mxu0
  %v785 = vpop.f32.mrb[0].mxu0
  %v786 = vadd.f32 0.0, %v785
  %v787 = vpop.f32.mrb[0].mxu0
  %788 = vdwg.mxu0
  %v789 = vadd.f32 %v83, %v535
  %v790 = vadd.f32 %v84, %v538
  %v791 = vadd.f32 %v85, %v543
  %v792 = vadd.f32 %v86, %v546
  %v793 = vadd.f32 %v87, %v551
  %v794 = vadd.f32 %v88, %v554
  %v795 = vadd.f32 %v89, %v559
  %v796 = vadd.f32 %v90, %v562
  %v797 = vadd.f32 %v91, %v567
  %v798 = vadd.f32 %v92, %v570
  %v799 = vadd.f32 %v93, %v575
  %v800 = vadd.f32 %v94, %v578
  %v801 = vadd.f32 %v95, %v583
  %v802 = vadd.f32 %v96, %v586
  %v803 = vadd.f32 %v97, %v591
  %v804 = vadd.f32 %v98, %v594
  %v805 = vadd.f32 %v99, %v599
  %v806 = vadd.f32 %v100, %v602
  %v807 = vadd.f32 %v101, %v607
  %v808 = vadd.f32 %v102, %v610
  %v809 = vadd.f32 %v103, %v615
  %v810 = vadd.f32 %v104, %v618
  %v811 = vadd.f32 %v105, %v623
  %v812 = vadd.f32 %v106, %v626
  %v813 = vadd.f32 %v107, %v631
  %v814 = vadd.f32 %v108, %v634
  %v815 = vadd.f32 %v109, %v639
  %v816 = vadd.f32 %v110, %v642
  %v817 = vadd.f32 %v111, %v647
  %v818 = vadd.f32 %v112, %v650
  %v819 = vadd.f32 %v113, %v655
  %v820 = vadd.f32 %v114, %v658
  %v821 = vadd.f32 %v115, %v663
  %v822 = vadd.f32 %v116, %v666
  %v823 = vadd.f32 %v117, %v671
  %v824 = vadd.f32 %v118, %v674
  %v825 = vadd.f32 %v119, %v679
  %v826 = vadd.f32 %v120, %v682
  %v827 = vadd.f32 %v121, %v687
  %v828 = vadd.f32 %v122, %v690
  %v829 = vadd.f32 %v123, %v695
  %v830 = vadd.f32 %v124, %v698
  %v831 = vadd.f32 %v125, %v703
  %v832 = vadd.f32 %v126, %v706
  %v833 = vadd.f32 %v127, %v711
  %v834 = vadd.f32 %v128, %v714
  %v835 = vadd.f32 %v129, %v719
  %v836 = vadd.f32 %v130, %v722
  %v837 = vadd.f32 %v131, %v727
  %v838 = vadd.f32 %v132, %v730
  %v839 = vadd.f32 %v133, %v735
  %v840 = vadd.f32 %v134, %v738
  %v841 = vadd.f32 %v135, %v743
  %v842 = vadd.f32 %v136, %v746
  %v843 = vadd.f32 %v137, %v751
  %v844 = vadd.f32 %v138, %v754
  %v845 = vadd.f32 %v139, %v759
  %v846 = vadd.f32 %v140, %v762
  %v847 = vadd.f32 %v141, %v767
  %v848 = vadd.f32 %v142, %v770
  %v849 = vadd.f32 %v143, %v775
  %v850 = vadd.f32 %v144, %v778
  %v851 = vadd.f32 %v145, %v783
  %v852 = vadd.f32 %v146, %v786
  %853 = vst [vmem:[#allocation2] sm:$0xff] %v789
  %854 = vst [vmem:[#allocation2 + $0x8] sm:$0xff] %v790
  %855 = vst [vmem:[#allocation2 + $0x10] sm:$0xff] %v791
  %856 = vst [vmem:[#allocation2 + $0x18] sm:$0xff] %v792
  %857 = vst [vmem:[#allocation2 + $0x20] sm:$0xff] %v793
  %858 = vst [vmem:[#allocation2 + $0x28] sm:$0xff] %v794
  %859 = vst [vmem:[#allocation2 + $0x30] sm:$0xff] %v795
  %860 = vst [vmem:[#allocation2 + $0x38] sm:$0xff] %v796
  %861 = vst [vmem:[#allocation2 + $0x40] sm:$0xff] %v797
  %862 = vst [vmem:[#allocation2 + $0x48] sm:$0xff] %v798
  %863 = vst [vmem:[#allocation2 + $0x50] sm:$0xff] %v799
  %864 = vst [vmem:[#allocation2 + $0x58] sm:$0xff] %v800
  %865 = vst [vmem:[#allocation2 + $0x60] sm:$0xff] %v801
  %866 = vst [vmem:[#allocation2 + $0x68] sm:$0xff] %v802
  %867 = vst [vmem:[#allocation2 + $0x70] sm:$0xff] %v803
  %868 = vst [vmem:[#allocation2 + $0x78] sm:$0xff] %v804
  %869 = vst [vmem:[#allocation2 + $0x80] sm:$0xff] %v805
  %870 = vst [vmem:[#allocation2 + $0x88] sm:$0xff] %v806
  %871 = vst [vmem:[#allocation2 + $0x90] sm:$0xff] %v807
  %872 = vst [vmem:[#allocation2 + $0x98] sm:$0xff] %v808
  %873 = vst [vmem:[#allocation2 + $0xa0] sm:$0xff] %v809
  %874 = vst [vmem:[#allocation2 + $0xa8] sm:$0xff] %v810
  %875 = vst [vmem:[#allocation2 + $0xb0] sm:$0xff] %v811
  %876 = vst [vmem:[#allocation2 + $0xb8] sm:$0xff] %v812
  %877 = vst [vmem:[#allocation2 + $0xc0] sm:$0xff] %v813
  %878 = vst [vmem:[#allocation2 + $0xc8] sm:$0xff] %v814
  %879 = vst [vmem:[#allocation2 + $0xd0] sm:$0xff] %v815
  %880 = vst [vmem:[#allocation2 + $0xd8] sm:$0xff] %v816
  %881 = vst [vmem:[#allocation2 + $0xe0] sm:$0xff] %v817
  %882 = vst [vmem:[#allocation2 + $0xe8] sm:$0xff] %v818
  %883 = vst [vmem:[#allocation2 + $0xf0] sm:$0xff] %v819
  %884 = vst [vmem:[#allocation2 + $0xf8] sm:$0xff] %v820
  %885 = vst [vmem:[#allocation2 + $0x100] sm:$0xff] %v821
  %886 = vst [vmem:[#allocation2 + $0x108] sm:$0xff] %v822
  %887 = vst [vmem:[#allocation2 + $0x110] sm:$0xff] %v823
  %888 = vst [vmem:[#allocation2 + $0x118] sm:$0xff] %v824
  %889 = vst [vmem:[#allocation2 + $0x120] sm:$0xff] %v825
  %890 = vst [vmem:[#allocation2 + $0x128] sm:$0xff] %v826
  %891 = vst [vmem:[#allocation2 + $0x130] sm:$0xff] %v827
  %892 = vst [vmem:[#allocation2 + $0x138] sm:$0xff] %v828
  %893 = vst [vmem:[#allocation2 + $0x140] sm:$0xff] %v829
  %894 = vst [vmem:[#allocation2 + $0x148] sm:$0xff] %v830
  %895 = vst [vmem:[#allocation2 + $0x150] sm:$0xff] %v831
  %896 = vst [vmem:[#allocation2 + $0x158] sm:$0xff] %v832
  %897 = vst [vmem:[#allocation2 + $0x160] sm:$0xff] %v833
  %898 = vst [vmem:[#allocation2 + $0x168] sm:$0xff] %v834
  %899 = vst [vmem:[#allocation2 + $0x170] sm:$0xff] %v835
  %900 = vst [vmem:[#allocation2 + $0x178] sm:$0xff] %v836
  %901 = vst [vmem:[#allocation2 + $0x180] sm:$0xff] %v837
  %902 = vst [vmem:[#allocation2 + $0x188] sm:$0xff] %v838
  %903 = vst [vmem:[#allocation2 + $0x190] sm:$0xff] %v839
  %904 = vst [vmem:[#allocation2 + $0x198] sm:$0xff] %v840
  %905 = vst [vmem:[#allocation2 + $0x1a0] sm:$0xff] %v841
  %906 = vst [vmem:[#allocation2 + $0x1a8] sm:$0xff] %v842
  %907 = vst [vmem:[#allocation2 + $0x1b0] sm:$0xff] %v843
  %908 = vst [vmem:[#allocation2 + $0x1b8] sm:$0xff] %v844
  %909 = vst [vmem:[#allocation2 + $0x1c0] sm:$0xff] %v845
  %910 = vst [vmem:[#allocation2 + $0x1c8] sm:$0xff] %v846
  %911 = vst [vmem:[#allocation2 + $0x1d0] sm:$0xff] %v847
  %912 = vst [vmem:[#allocation2 + $0x1d8] sm:$0xff] %v848
  %913 = vst [vmem:[#allocation2 + $0x1e0] sm:$0xff] %v849
  %914 = vst [vmem:[#allocation2 + $0x1e8] sm:$0xff] %v850
  %915 = vst [vmem:[#allocation2 + $0x1f0] sm:$0xff] %v851
  %916 = vst [vmem:[#allocation2 + $0x1f8] sm:$0xff] %v852
  // Predicated region
  $region18: #{discriminator_forward.5} parent=0 // pred_check
    %p917 = pneg %p15
  $region19: #{discriminator_forward.5} parent=0 // pred_check_branch
    %919 = sbr.rel (%p917) target = $region21
  $region20: #{discriminator_forward.5} parent=0 // pred_region
    %v920 = vld [vmem:[#allocation2] sm:$0xff]
    %v921 = vld [vmem:[#allocation2 + $0x8] sm:$0xff]
    %v922 = vld [vmem:[#allocation2 + $0x10] sm:$0xff]
    %v923 = vld [vmem:[#allocation2 + $0x18] sm:$0xff]
    %v924 = vld [vmem:[#allocation2 + $0x20] sm:$0xff]
    %v925 = vld [vmem:[#allocation2 + $0x28] sm:$0xff]
    %v926 = vld [vmem:[#allocation2 + $0x30] sm:$0xff]
    %v927 = vld [vmem:[#allocation2 + $0x38] sm:$0xff]
    %v928 = vld [vmem:[#allocation2 + $0x40] sm:$0xff]
    %v929 = vld [vmem:[#allocation2 + $0x48] sm:$0xff]
    %v930 = vld [vmem:[#allocation2 + $0x50] sm:$0xff]
    %v931 = vld [vmem:[#allocation2 + $0x58] sm:$0xff]
    %v932 = vld [vmem:[#allocation2 + $0x60] sm:$0xff]
    %v933 = vld [vmem:[#allocation2 + $0x68] sm:$0xff]
    %v934 = vld [vmem:[#allocation2 + $0x70] sm:$0xff]
    %v935 = vld [vmem:[#allocation2 + $0x78] sm:$0xff]
    %v936 = vld [vmem:[#allocation2 + $0x80] sm:$0xff]
    %v937 = vld [vmem:[#allocation2 + $0x88] sm:$0xff]
    %v938 = vld [vmem:[#allocation2 + $0x90] sm:$0xff]
    %v939 = vld [vmem:[#allocation2 + $0x98] sm:$0xff]
    %v940 = vld [vmem:[#allocation2 + $0xa0] sm:$0xff]
    %v941 = vld [vmem:[#allocation2 + $0xa8] sm:$0xff]
    %v942 = vld [vmem:[#allocation2 + $0xb0] sm:$0xff]
    %v943 = vld [vmem:[#allocation2 + $0xb8] sm:$0xff]
    %v944 = vld [vmem:[#allocation2 + $0xc0] sm:$0xff]
    %v945 = vld [vmem:[#allocation2 + $0xc8] sm:$0xff]
    %v946 = vld [vmem:[#allocation2 + $0xd0] sm:$0xff]
    %v947 = vld [vmem:[#allocation2 + $0xd8] sm:$0xff]
    %v948 = vld [vmem:[#allocation2 + $0xe0] sm:$0xff]
    %v949 = vld [vmem:[#allocation2 + $0xe8] sm:$0xff]
    %v950 = vld [vmem:[#allocation2 + $0xf0] sm:$0xff]
    %v951 = vld [vmem:[#allocation2 + $0xf8] sm:$0xff]
    %v952 = vld [vmem:[#allocation2 + $0x100] sm:$0xff]
    %v953 = vld [vmem:[#allocation2 + $0x108] sm:$0xff]
    %v954 = vld [vmem:[#allocation2 + $0x110] sm:$0xff]
    %v955 = vld [vmem:[#allocation2 + $0x118] sm:$0xff]
    %v956 = vld [vmem:[#allocation2 + $0x120] sm:$0xff]
    %v957 = vld [vmem:[#allocation2 + $0x128] sm:$0xff]
    %v958 = vld [vmem:[#allocation2 + $0x130] sm:$0xff]
    %v959 = vld [vmem:[#allocation2 + $0x138] sm:$0xff]
    %v960 = vld [vmem:[#allocation2 + $0x140] sm:$0xff]
    %v961 = vld [vmem:[#allocation2 + $0x148] sm:$0xff]
    %v962 = vld [vmem:[#allocation2 + $0x150] sm:$0xff]
    %v963 = vld [vmem:[#allocation2 + $0x158] sm:$0xff]
    %v964 = vld [vmem:[#allocation2 + $0x160] sm:$0xff]
    %v965 = vld [vmem:[#allocation2 + $0x168] sm:$0xff]
    %v966 = vld [vmem:[#allocation2 + $0x170] sm:$0xff]
    %v967 = vld [vmem:[#allocation2 + $0x178] sm:$0xff]
    %v968 = vld [vmem:[#allocation2 + $0x180] sm:$0xff]
    %v969 = vld [vmem:[#allocation2 + $0x188] sm:$0xff]
    %v970 = vld [vmem:[#allocation2 + $0x190] sm:$0xff]
    %v971 = vld [vmem:[#allocation2 + $0x198] sm:$0xff]
    %v972 = vld [vmem:[#allocation2 + $0x1a0] sm:$0xff]
    %v973 = vld [vmem:[#allocation2 + $0x1a8] sm:$0xff]
    %v974 = vld [vmem:[#allocation2 + $0x1b0] sm:$0xff]
    %v975 = vld [vmem:[#allocation2 + $0x1b8] sm:$0xff]
    %v976 = vld [vmem:[#allocation2 + $0x1c0] sm:$0xff]
    %v977 = vld [vmem:[#allocation2 + $0x1c8] sm:$0xff]
    %v978 = vld [vmem:[#allocation2 + $0x1d0] sm:$0xff]
    %v979 = vld [vmem:[#allocation2 + $0x1d8] sm:$0xff]
    %v980 = vld [vmem:[#allocation2 + $0x1e0] sm:$0xff]
    %v981 = vld [vmem:[#allocation2 + $0x1e8] sm:$0xff]
    %v982 = vld [vmem:[#allocation2 + $0x1f0] sm:$0xff]
    %v983 = vld [vmem:[#allocation2 + $0x1f8] sm:$0xff]
    %v984 = vld [vmem:[%s2] sm:$0x1]
    %v986 = vlaneseq
    %v987 = vshrl.u32 %v986, 7
    %v988 = vsub.s32 0, %v987
    %v989 = vrot.slane %v984, %v988
    %v991 = vadd.f32 %v920, %v989
    %v992 = vadd.f32 %v921, %v989
    %v993 = vadd.f32 %v922, %v989
    %v994 = vadd.f32 %v923, %v989
    %v995 = vadd.f32 %v924, %v989
    %v996 = vadd.f32 %v925, %v989
    %v997 = vadd.f32 %v926, %v989
    %v998 = vadd.f32 %v927, %v989
    %v999 = vadd.f32 %v928, %v989
    %v1000 = vadd.f32 %v929, %v989
    %v1001 = vadd.f32 %v930, %v989
    %v1002 = vadd.f32 %v931, %v989
    %v1003 = vadd.f32 %v932, %v989
    %v1004 = vadd.f32 %v933, %v989
    %v1005 = vadd.f32 %v934, %v989
    %v1006 = vadd.f32 %v935, %v989
    %v1007 = vadd.f32 %v936, %v989
    %v1008 = vadd.f32 %v937, %v989
    %v1009 = vadd.f32 %v938, %v989
    %v1010 = vadd.f32 %v939, %v989
    %v1011 = vadd.f32 %v940, %v989
    %v1012 = vadd.f32 %v941, %v989
    %v1013 = vadd.f32 %v942, %v989
    %v1014 = vadd.f32 %v943, %v989
    %v1015 = vadd.f32 %v944, %v989
    %v1016 = vadd.f32 %v945, %v989
    %v1017 = vadd.f32 %v946, %v989
    %v1018 = vadd.f32 %v947, %v989
    %v1019 = vadd.f32 %v948, %v989
    %v1020 = vadd.f32 %v949, %v989
    %v1021 = vadd.f32 %v950, %v989
    %v1022 = vadd.f32 %v951, %v989
    %v1023 = vadd.f32 %v952, %v989
    %v1024 = vadd.f32 %v953, %v989
    %v1025 = vadd.f32 %v954, %v989
    %v1026 = vadd.f32 %v955, %v989
    %v1027 = vadd.f32 %v956, %v989
    %v1028 = vadd.f32 %v957, %v989
    %v1029 = vadd.f32 %v958, %v989
    %v1030 = vadd.f32 %v959, %v989
    %v1031 = vadd.f32 %v960, %v989
    %v1032 = vadd.f32 %v961, %v989
    %v1033 = vadd.f32 %v962, %v989
    %v1034 = vadd.f32 %v963, %v989
    %v1035 = vadd.f32 %v964, %v989
    %v1036 = vadd.f32 %v965, %v989
    %v1037 = vadd.f32 %v966, %v989
    %v1038 = vadd.f32 %v967, %v989
    %v1039 = vadd.f32 %v968, %v989
    %v1040 = vadd.f32 %v969, %v989
    %v1041 = vadd.f32 %v970, %v989
    %v1042 = vadd.f32 %v971, %v989
    %v1043 = vadd.f32 %v972, %v989
    %v1044 = vadd.f32 %v973, %v989
    %v1045 = vadd.f32 %v974, %v989
    %v1046 = vadd.f32 %v975, %v989
    %v1047 = vadd.f32 %v976, %v989
    %v1048 = vadd.f32 %v977, %v989
    %v1049 = vadd.f32 %v978, %v989
    %v1050 = vadd.f32 %v979, %v989
    %v1051 = vadd.f32 %v980, %v989
    %v1052 = vadd.f32 %v981, %v989
    %v1053 = vadd.f32 %v982, %v989
    %v1054 = vadd.f32 %v983, %v989
    %vm1055 = vcmp.ge.f32.partialorder %v991, 0.0
    %vm1056 = vcmp.ge.f32.partialorder %v992, 0.0
    %vm1057 = vcmp.ge.f32.partialorder %v993, 0.0
    %vm1058 = vcmp.ge.f32.partialorder %v994, 0.0
    %vm1059 = vcmp.ge.f32.partialorder %v995, 0.0
    %vm1060 = vcmp.ge.f32.partialorder %v996, 0.0
    %vm1061 = vcmp.ge.f32.partialorder %v997, 0.0
    %vm1062 = vcmp.ge.f32.partialorder %v998, 0.0
    %vm1063 = vcmp.ge.f32.partialorder %v999, 0.0
    %vm1064 = vcmp.ge.f32.partialorder %v1000, 0.0
    %vm1065 = vcmp.ge.f32.partialorder %v1001, 0.0
    %vm1066 = vcmp.ge.f32.partialorder %v1002, 0.0
    %vm1067 = vcmp.ge.f32.partialorder %v1003, 0.0
    %vm1068 = vcmp.ge.f32.partialorder %v1004, 0.0
    %vm1069 = vcmp.ge.f32.partialorder %v1005, 0.0
    %vm1070 = vcmp.ge.f32.partialorder %v1006, 0.0
    %vm1071 = vcmp.ge.f32.partialorder %v1007, 0.0
    %vm1072 = vcmp.ge.f32.partialorder %v1008, 0.0
    %vm1073 = vcmp.ge.f32.partialorder %v1009, 0.0
    %vm1074 = vcmp.ge.f32.partialorder %v1010, 0.0
    %vm1075 = vcmp.ge.f32.partialorder %v1011, 0.0
    %vm1076 = vcmp.ge.f32.partialorder %v1012, 0.0
    %vm1077 = vcmp.ge.f32.partialorder %v1013, 0.0
    %vm1078 = vcmp.ge.f32.partialorder %v1014, 0.0
    %vm1079 = vcmp.ge.f32.partialorder %v1015, 0.0
    %vm1080 = vcmp.ge.f32.partialorder %v1016, 0.0
    %vm1081 = vcmp.ge.f32.partialorder %v1017, 0.0
    %vm1082 = vcmp.ge.f32.partialorder %v1018, 0.0
    %vm1083 = vcmp.ge.f32.partialorder %v1019, 0.0
    %vm1084 = vcmp.ge.f32.partialorder %v1020, 0.0
    %vm1085 = vcmp.ge.f32.partialorder %v1021, 0.0
    %vm1086 = vcmp.ge.f32.partialorder %v1022, 0.0
    %vm1087 = vcmp.ge.f32.partialorder %v1023, 0.0
    %vm1088 = vcmp.ge.f32.partialorder %v1024, 0.0
    %vm1089 = vcmp.ge.f32.partialorder %v1025, 0.0
    %vm1090 = vcmp.ge.f32.partialorder %v1026, 0.0
    %vm1091 = vcmp.ge.f32.partialorder %v1027, 0.0
    %vm1092 = vcmp.ge.f32.partialorder %v1028, 0.0
    %vm1093 = vcmp.ge.f32.partialorder %v1029, 0.0
    %vm1094 = vcmp.ge.f32.partialorder %v1030, 0.0
    %vm1095 = vcmp.ge.f32.partialorder %v1031, 0.0
    %vm1096 = vcmp.ge.f32.partialorder %v1032, 0.0
    %vm1097 = vcmp.ge.f32.partialorder %v1033, 0.0
    %vm1098 = vcmp.ge.f32.partialorder %v1034, 0.0
    %vm1099 = vcmp.ge.f32.partialorder %v1035, 0.0
    %vm1100 = vcmp.ge.f32.partialorder %v1036, 0.0
    %vm1101 = vcmp.ge.f32.partialorder %v1037, 0.0
    %vm1102 = vcmp.ge.f32.partialorder %v1038, 0.0
    %vm1103 = vcmp.ge.f32.partialorder %v1039, 0.0
    %vm1104 = vcmp.ge.f32.partialorder %v1040, 0.0
    %vm1105 = vcmp.ge.f32.partialorder %v1041, 0.0
    %vm1106 = vcmp.ge.f32.partialorder %v1042, 0.0
    %vm1107 = vcmp.ge.f32.partialorder %v1043, 0.0
    %vm1108 = vcmp.ge.f32.partialorder %v1044, 0.0
    %vm1109 = vcmp.ge.f32.partialorder %v1045, 0.0
    %vm1110 = vcmp.ge.f32.partialorder %v1046, 0.0
    %vm1111 = vcmp.ge.f32.partialorder %v1047, 0.0
    %vm1112 = vcmp.ge.f32.partialorder %v1048, 0.0
    %vm1113 = vcmp.ge.f32.partialorder %v1049, 0.0
    %vm1114 = vcmp.ge.f32.partialorder %v1050, 0.0
    %vm1115 = vcmp.ge.f32.partialorder %v1051, 0.0
    %vm1116 = vcmp.ge.f32.partialorder %v1052, 0.0
    %vm1117 = vcmp.ge.f32.partialorder %v1053, 0.0
    %vm1118 = vcmp.ge.f32.partialorder %v1054, 0.0
    %v1119 = vmul.f32 %v991, 0.2
    %v1120 = vmul.f32 %v992, 0.2
    %v1121 = vmul.f32 %v993, 0.2
    %v1122 = vmul.f32 %v994, 0.2
    %v1123 = vmul.f32 %v995, 0.2
    %v1124 = vmul.f32 %v996, 0.2
    %v1125 = vmul.f32 %v997, 0.2
    %v1126 = vmul.f32 %v998, 0.2
    %v1127 = vmul.f32 %v999, 0.2
    %v1128 = vmul.f32 %v1000, 0.2
    %v1129 = vmul.f32 %v1001, 0.2
    %v1130 = vmul.f32 %v1002, 0.2
    %v1131 = vmul.f32 %v1003, 0.2
    %v1132 = vmul.f32 %v1004, 0.2
    %v1133 = vmul.f32 %v1005, 0.2
    %v1134 = vmul.f32 %v1006, 0.2
    %v1135 = vmul.f32 %v1007, 0.2
    %v1136 = vmul.f32 %v1008, 0.2
    %v1137 = vmul.f32 %v1009, 0.2
    %v1138 = vmul.f32 %v1010, 0.2
    %v1139 = vmul.f32 %v1011, 0.2
    %v1140 = vmul.f32 %v1012, 0.2
    %v1141 = vmul.f32 %v1013, 0.2
    %v1142 = vmul.f32 %v1014, 0.2
    %v1143 = vmul.f32 %v1015, 0.2
    %v1144 = vmul.f32 %v1016, 0.2
    %v1145 = vmul.f32 %v1017, 0.2
    %v1146 = vmul.f32 %v1018, 0.2
    %v1147 = vmul.f32 %v1019, 0.2
    %v1148 = vmul.f32 %v1020, 0.2
    %v1149 = vmul.f32 %v1021, 0.2
    %v1150 = vmul.f32 %v1022, 0.2
    %v1151 = vmul.f32 %v1023, 0.2
    %v1152 = vmul.f32 %v1024, 0.2
    %v1153 = vmul.f32 %v1025, 0.2
    %v1154 = vmul.f32 %v1026, 0.2
    %v1155 = vmul.f32 %v1027, 0.2
    %v1156 = vmul.f32 %v1028, 0.2
    %v1157 = vmul.f32 %v1029, 0.2
    %v1158 = vmul.f32 %v1030, 0.2
    %v1159 = vmul.f32 %v1031, 0.2
    %v1160 = vmul.f32 %v1032, 0.2
    %v1161 = vmul.f32 %v1033, 0.2
    %v1162 = vmul.f32 %v1034, 0.2
    %v1163 = vmul.f32 %v1035, 0.2
    %v1164 = vmul.f32 %v1036, 0.2
    %v1165 = vmul.f32 %v1037, 0.2
    %v1166 = vmul.f32 %v1038, 0.2
    %v1167 = vmul.f32 %v1039, 0.2
    %v1168 = vmul.f32 %v1040, 0.2
    %v1169 = vmul.f32 %v1041, 0.2
    %v1170 = vmul.f32 %v1042, 0.2
    %v1171 = vmul.f32 %v1043, 0.2
    %v1172 = vmul.f32 %v1044, 0.2
    %v1173 = vmul.f32 %v1045, 0.2
    %v1174 = vmul.f32 %v1046, 0.2
    %v1175 = vmul.f32 %v1047, 0.2
    %v1176 = vmul.f32 %v1048, 0.2
    %v1177 = vmul.f32 %v1049, 0.2
    %v1178 = vmul.f32 %v1050, 0.2
    %v1179 = vmul.f32 %v1051, 0.2
    %v1180 = vmul.f32 %v1052, 0.2
    %v1181 = vmul.f32 %v1053, 0.2
    %v1182 = vmul.f32 %v1054, 0.2
    %v1183 = vsel %vm1055, %v991, %v1119
    %v1184 = vsel %vm1056, %v992, %v1120
    %v1185 = vsel %vm1057, %v993, %v1121
    %v1186 = vsel %vm1058, %v994, %v1122
    %v1187 = vsel %vm1059, %v995, %v1123
    %v1188 = vsel %vm1060, %v996, %v1124
    %v1189 = vsel %vm1061, %v997, %v1125
    %v1190 = vsel %vm1062, %v998, %v1126
    %v1191 = vsel %vm1063, %v999, %v1127
    %v1192 = vsel %vm1064, %v1000, %v1128
    %v1193 = vsel %vm1065, %v1001, %v1129
    %v1194 = vsel %vm1066, %v1002, %v1130
    %v1195 = vsel %vm1067, %v1003, %v1131
    %v1196 = vsel %vm1068, %v1004, %v1132
    %v1197 = vsel %vm1069, %v1005, %v1133
    %v1198 = vsel %vm1070, %v1006, %v1134
    %v1199 = vsel %vm1071, %v1007, %v1135
    %v1200 = vsel %vm1072, %v1008, %v1136
    %v1201 = vsel %vm1073, %v1009, %v1137
    %v1202 = vsel %vm1074, %v1010, %v1138
    %v1203 = vsel %vm1075, %v1011, %v1139
    %v1204 = vsel %vm1076, %v1012, %v1140
    %v1205 = vsel %vm1077, %v1013, %v1141
    %v1206 = vsel %vm1078, %v1014, %v1142
    %v1207 = vsel %vm1079, %v1015, %v1143
    %v1208 = vsel %vm1080, %v1016, %v1144
    %v1209 = vsel %vm1081, %v1017, %v1145
    %v1210 = vsel %vm1082, %v1018, %v1146
    %v1211 = vsel %vm1083, %v1019, %v1147
    %v1212 = vsel %vm1084, %v1020, %v1148
    %v1213 = vsel %vm1085, %v1021, %v1149
    %v1214 = vsel %vm1086, %v1022, %v1150
    %v1215 = vsel %vm1087, %v1023, %v1151
    %v1216 = vsel %vm1088, %v1024, %v1152
    %v1217 = vsel %vm1089, %v1025, %v1153
    %v1218 = vsel %vm1090, %v1026, %v1154
    %v1219 = vsel %vm1091, %v1027, %v1155
    %v1220 = vsel %vm1092, %v1028, %v1156
    %v1221 = vsel %vm1093, %v1029, %v1157
    %v1222 = vsel %vm1094, %v1030, %v1158
    %v1223 = vsel %vm1095, %v1031, %v1159
    %v1224 = vsel %vm1096, %v1032, %v1160
    %v1225 = vsel %vm1097, %v1033, %v1161
    %v1226 = vsel %vm1098, %v1034, %v1162
    %v1227 = vsel %vm1099, %v1035, %v1163
    %v1228 = vsel %vm1100, %v1036, %v1164
    %v1229 = vsel %vm1101, %v1037, %v1165
    %v1230 = vsel %vm1102, %v1038, %v1166
    %v1231 = vsel %vm1103, %v1039, %v1167
    %v1232 = vsel %vm1104, %v1040, %v1168
    %v1233 = vsel %vm1105, %v1041, %v1169
    %v1234 = vsel %vm1106, %v1042, %v1170
    %v1235 = vsel %vm1107, %v1043, %v1171
    %v1236 = vsel %vm1108, %v1044, %v1172
    %v1237 = vsel %vm1109, %v1045, %v1173
    %v1238 = vsel %vm1110, %v1046, %v1174
    %v1239 = vsel %vm1111, %v1047, %v1175
    %v1240 = vsel %vm1112, %v1048, %v1176
    %v1241 = vsel %vm1113, %v1049, %v1177
    %v1242 = vsel %vm1114, %v1050, %v1178
    %v1243 = vsel %vm1115, %v1051, %v1179
    %v1244 = vsel %vm1116, %v1052, %v1180
    %v1245 = vsel %vm1117, %v1053, %v1181
    %v1246 = vsel %vm1118, %v1054, %v1182
    %v1247 = vpack.c.bf16 %v1184, %v1183
    %v1248 = vpack.c.bf16 %v1186, %v1185
    %v1249 = vpack.c.bf16 %v1188, %v1187
    %v1250 = vpack.c.bf16 %v1190, %v1189
    %v1251 = vpack.c.bf16 %v1192, %v1191
    %v1252 = vpack.c.bf16 %v1194, %v1193
    %v1253 = vpack.c.bf16 %v1196, %v1195
    %v1254 = vpack.c.bf16 %v1198, %v1197
    %v1255 = vpack.c.bf16 %v1200, %v1199
    %v1256 = vpack.c.bf16 %v1202, %v1201
    %v1257 = vpack.c.bf16 %v1204, %v1203
    %v1258 = vpack.c.bf16 %v1206, %v1205
    %v1259 = vpack.c.bf16 %v1208, %v1207
    %v1260 = vpack.c.bf16 %v1210, %v1209
    %v1261 = vpack.c.bf16 %v1212, %v1211
    %v1262 = vpack.c.bf16 %v1214, %v1213
    %v1263 = vpack.c.bf16 %v1216, %v1215
    %v1264 = vpack.c.bf16 %v1218, %v1217
    %v1265 = vpack.c.bf16 %v1220, %v1219
    %v1266 = vpack.c.bf16 %v1222, %v1221
    %v1267 = vpack.c.bf16 %v1224, %v1223
    %v1268 = vpack.c.bf16 %v1226, %v1225
    %v1269 = vpack.c.bf16 %v1228, %v1227
    %v1270 = vpack.c.bf16 %v1230, %v1229
    %v1271 = vpack.c.bf16 %v1232, %v1231
    %v1272 = vpack.c.bf16 %v1234, %v1233
    %v1273 = vpack.c.bf16 %v1236, %v1235
    %v1274 = vpack.c.bf16 %v1238, %v1237
    %v1275 = vpack.c.bf16 %v1240, %v1239
    %v1276 = vpack.c.bf16 %v1242, %v1241
    %v1277 = vpack.c.bf16 %v1244, %v1243
    %v1278 = vpack.c.bf16 %v1246, %v1245
    %v1311 = vunpack.c.l.b16 %v1247
    %v1312 = vunpack.c.h.b16 %v1247
    %v1313 = vunpack.c.l.b16 %v1248
    %v1314 = vunpack.c.h.b16 %v1248
    %v1315 = vunpack.c.l.b16 %v1249
    %v1316 = vunpack.c.h.b16 %v1249
    %v1317 = vunpack.c.l.b16 %v1250
    %v1318 = vunpack.c.h.b16 %v1250
    %v1319 = vunpack.c.l.b16 %v1251
    %v1320 = vunpack.c.h.b16 %v1251
    %v1321 = vunpack.c.l.b16 %v1252
    %v1322 = vunpack.c.h.b16 %v1252
    %v1323 = vunpack.c.l.b16 %v1253
    %v1324 = vunpack.c.h.b16 %v1253
    %v1325 = vunpack.c.l.b16 %v1254
    %v1326 = vunpack.c.h.b16 %v1254
    %v1327 = vunpack.c.l.b16 %v1255
    %v1328 = vunpack.c.h.b16 %v1255
    %v1329 = vunpack.c.l.b16 %v1256
    %v1330 = vunpack.c.h.b16 %v1256
    %v1331 = vunpack.c.l.b16 %v1257
    %v1332 = vunpack.c.h.b16 %v1257
    %v1333 = vunpack.c.l.b16 %v1258
    %v1334 = vunpack.c.h.b16 %v1258
    %v1335 = vunpack.c.l.b16 %v1259
    %v1336 = vunpack.c.h.b16 %v1259
    %v1337 = vunpack.c.l.b16 %v1260
    %v1338 = vunpack.c.h.b16 %v1260
    %v1339 = vunpack.c.l.b16 %v1261
    %v1340 = vunpack.c.h.b16 %v1261
    %v1341 = vunpack.c.l.b16 %v1262
    %v1342 = vunpack.c.h.b16 %v1262
    %v1343 = vunpack.c.l.b16 %v1263
    %v1344 = vunpack.c.h.b16 %v1263
    %v1345 = vunpack.c.l.b16 %v1264
    %v1346 = vunpack.c.h.b16 %v1264
    %v1347 = vunpack.c.l.b16 %v1265
    %v1348 = vunpack.c.h.b16 %v1265
    %v1349 = vunpack.c.l.b16 %v1266
    %v1350 = vunpack.c.h.b16 %v1266
    %v1351 = vunpack.c.l.b16 %v1267
    %v1352 = vunpack.c.h.b16 %v1267
    %v1353 = vunpack.c.l.b16 %v1268
    %v1354 = vunpack.c.h.b16 %v1268
    %v1355 = vunpack.c.l.b16 %v1269
    %v1356 = vunpack.c.h.b16 %v1269
    %v1357 = vunpack.c.l.b16 %v1270
    %v1358 = vunpack.c.h.b16 %v1270
    %v1359 = vunpack.c.l.b16 %v1271
    %v1360 = vunpack.c.h.b16 %v1271
    %v1361 = vunpack.c.l.b16 %v1272
    %v1362 = vunpack.c.h.b16 %v1272
    %v1363 = vunpack.c.l.b16 %v1273
    %v1364 = vunpack.c.h.b16 %v1273
    %v1365 = vunpack.c.l.b16 %v1274
    %v1366 = vunpack.c.h.b16 %v1274
    %v1367 = vunpack.c.l.b16 %v1275
    %v1368 = vunpack.c.h.b16 %v1275
    %v1369 = vunpack.c.l.b16 %v1276
    %v1370 = vunpack.c.h.b16 %v1276
    %v1371 = vunpack.c.l.b16 %v1277
    %v1372 = vunpack.c.h.b16 %v1277
    %v1373 = vunpack.c.l.b16 %v1278
    %v1374 = vunpack.c.h.b16 %v1278
    %v1375 = vpack.c.b16 %v1311, %v1311
    %v1376 = vpack.c.b16 %v1312, %v1312
    %v1377 = vpack.c.b16 %v1313, %v1313
    %v1378 = vpack.c.b16 %v1314, %v1314
    %v1379 = vpack.c.b16 %v1315, %v1315
    %v1380 = vpack.c.b16 %v1316, %v1316
    %v1381 = vpack.c.b16 %v1317, %v1317
    %v1382 = vpack.c.b16 %v1318, %v1318
    %v1383 = vpack.c.b16 %v1319, %v1319
    %v1384 = vpack.c.b16 %v1320, %v1320
    %v1385 = vpack.c.b16 %v1321, %v1321
    %v1386 = vpack.c.b16 %v1322, %v1322
    %v1387 = vpack.c.b16 %v1323, %v1323
    %v1388 = vpack.c.b16 %v1324, %v1324
    %v1389 = vpack.c.b16 %v1325, %v1325
    %v1390 = vpack.c.b16 %v1326, %v1326
    %v1391 = vpack.c.b16 %v1327, %v1327
    %v1392 = vpack.c.b16 %v1328, %v1328
    %v1393 = vpack.c.b16 %v1329, %v1329
    %v1394 = vpack.c.b16 %v1330, %v1330
    %v1395 = vpack.c.b16 %v1331, %v1331
    %v1396 = vpack.c.b16 %v1332, %v1332
    %v1397 = vpack.c.b16 %v1333, %v1333
    %v1398 = vpack.c.b16 %v1334, %v1334
    %v1399 = vpack.c.b16 %v1335, %v1335
    %v1400 = vpack.c.b16 %v1336, %v1336
    %v1401 = vpack.c.b16 %v1337, %v1337
    %v1402 = vpack.c.b16 %v1338, %v1338
    %v1403 = vpack.c.b16 %v1339, %v1339
    %v1404 = vpack.c.b16 %v1340, %v1340
    %v1405 = vpack.c.b16 %v1341, %v1341
    %v1406 = vpack.c.b16 %v1342, %v1342
    %v1407 = vpack.c.b16 %v1343, %v1343
    %v1408 = vpack.c.b16 %v1344, %v1344
    %v1409 = vpack.c.b16 %v1345, %v1345
    %v1410 = vpack.c.b16 %v1346, %v1346
    %v1411 = vpack.c.b16 %v1347, %v1347
    %v1412 = vpack.c.b16 %v1348, %v1348
    %v1413 = vpack.c.b16 %v1349, %v1349
    %v1414 = vpack.c.b16 %v1350, %v1350
    %v1415 = vpack.c.b16 %v1351, %v1351
    %v1416 = vpack.c.b16 %v1352, %v1352
    %v1417 = vpack.c.b16 %v1353, %v1353
    %v1418 = vpack.c.b16 %v1354, %v1354
    %v1419 = vpack.c.b16 %v1355, %v1355
    %v1420 = vpack.c.b16 %v1356, %v1356
    %v1421 = vpack.c.b16 %v1357, %v1357
    %v1422 = vpack.c.b16 %v1358, %v1358
    %v1423 = vpack.c.b16 %v1359, %v1359
    %v1424 = vpack.c.b16 %v1360, %v1360
    %v1425 = vpack.c.b16 %v1361, %v1361
    %v1426 = vpack.c.b16 %v1362, %v1362
    %v1427 = vpack.c.b16 %v1363, %v1363
    %v1428 = vpack.c.b16 %v1364, %v1364
    %v1429 = vpack.c.b16 %v1365, %v1365
    %v1430 = vpack.c.b16 %v1366, %v1366
    %v1431 = vpack.c.b16 %v1367, %v1367
    %v1432 = vpack.c.b16 %v1368, %v1368
    %v1433 = vpack.c.b16 %v1369, %v1369
    %v1434 = vpack.c.b16 %v1370, %v1370
    %v1435 = vpack.c.b16 %v1371, %v1371
    %v1436 = vpack.c.b16 %v1372, %v1372
    %v1437 = vpack.c.b16 %v1373, %v1373
    %v1438 = vpack.c.b16 %v1374, %v1374
    %1503 = vst [vmem:[%s3] sm:$0xf] %v1375
    %1504 = vst [vmem:[%s3 + $0x4] sm:$0xf] %v1376
    %1505 = vst [vmem:[%s3 + $0x8] sm:$0xf] %v1377
    %1506 = vst [vmem:[%s3 + $0xc] sm:$0xf] %v1378
    %1507 = vst [vmem:[%s3 + $0x10] sm:$0xf] %v1379
    %1508 = vst [vmem:[%s3 + $0x14] sm:$0xf] %v1380
    %1509 = vst [vmem:[%s3 + $0x18] sm:$0xf] %v1381
    %1510 = vst [vmem:[%s3 + $0x1c] sm:$0xf] %v1382
    %1511 = vst [vmem:[%s3 + $0x20] sm:$0xf] %v1383
    %1512 = vst [vmem:[%s3 + $0x24] sm:$0xf] %v1384
    %1513 = vst [vmem:[%s3 + $0x28] sm:$0xf] %v1385
    %1514 = vst [vmem:[%s3 + $0x2c] sm:$0xf] %v1386
    %1515 = vst [vmem:[%s3 + $0x30] sm:$0xf] %v1387
    %1516 = vst [vmem:[%s3 + $0x34] sm:$0xf] %v1388
    %1517 = vst [vmem:[%s3 + $0x38] sm:$0xf] %v1389
    %1518 = vst [vmem:[%s3 + $0x3c] sm:$0xf] %v1390
    %1519 = vst [vmem:[%s3 + $0x40] sm:$0xf] %v1391
    %1520 = vst [vmem:[%s3 + $0x44] sm:$0xf] %v1392
    %1521 = vst [vmem:[%s3 + $0x48] sm:$0xf] %v1393
    %1522 = vst [vmem:[%s3 + $0x4c] sm:$0xf] %v1394
    %1523 = vst [vmem:[%s3 + $0x50] sm:$0xf] %v1395
    %1524 = vst [vmem:[%s3 + $0x54] sm:$0xf] %v1396
    %1525 = vst [vmem:[%s3 + $0x58] sm:$0xf] %v1397
    %1526 = vst [vmem:[%s3 + $0x5c] sm:$0xf] %v1398
    %1527 = vst [vmem:[%s3 + $0x60] sm:$0xf] %v1399
    %1528 = vst [vmem:[%s3 + $0x64] sm:$0xf] %v1400
    %1529 = vst [vmem:[%s3 + $0x68] sm:$0xf] %v1401
    %1530 = vst [vmem:[%s3 + $0x6c] sm:$0xf] %v1402
    %1531 = vst [vmem:[%s3 + $0x70] sm:$0xf] %v1403
    %1532 = vst [vmem:[%s3 + $0x74] sm:$0xf] %v1404
    %1533 = vst [vmem:[%s3 + $0x78] sm:$0xf] %v1405
    %1534 = vst [vmem:[%s3 + $0x7c] sm:$0xf] %v1406
    %1535 = vst [vmem:[%s3 + $0x80] sm:$0xf] %v1407
    %1536 = vst [vmem:[%s3 + $0x84] sm:$0xf] %v1408
    %1537 = vst [vmem:[%s3 + $0x88] sm:$0xf] %v1409
    %1538 = vst [vmem:[%s3 + $0x8c] sm:$0xf] %v1410
    %1539 = vst [vmem:[%s3 + $0x90] sm:$0xf] %v1411
    %1540 = vst [vmem:[%s3 + $0x94] sm:$0xf] %v1412
    %1541 = vst [vmem:[%s3 + $0x98] sm:$0xf] %v1413
    %1542 = vst [vmem:[%s3 + $0x9c] sm:$0xf] %v1414
    %1543 = vst [vmem:[%s3 + $0xa0] sm:$0xf] %v1415
    %1544 = vst [vmem:[%s3 + $0xa4] sm:$0xf] %v1416
    %1545 = vst [vmem:[%s3 + $0xa8] sm:$0xf] %v1417
    %1546 = vst [vmem:[%s3 + $0xac] sm:$0xf] %v1418
    %1547 = vst [vmem:[%s3 + $0xb0] sm:$0xf] %v1419
    %1548 = vst [vmem:[%s3 + $0xb4] sm:$0xf] %v1420
    %1549 = vst [vmem:[%s3 + $0xb8] sm:$0xf] %v1421
    %1550 = vst [vmem:[%s3 + $0xbc] sm:$0xf] %v1422
    %1551 = vst [vmem:[%s3 + $0xc0] sm:$0xf] %v1423
    %1552 = vst [vmem:[%s3 + $0xc4] sm:$0xf] %v1424
    %1553 = vst [vmem:[%s3 + $0xc8] sm:$0xf] %v1425
    %1554 = vst [vmem:[%s3 + $0xcc] sm:$0xf] %v1426
    %1555 = vst [vmem:[%s3 + $0xd0] sm:$0xf] %v1427
    %1556 = vst [vmem:[%s3 + $0xd4] sm:$0xf] %v1428
    %1557 = vst [vmem:[%s3 + $0xd8] sm:$0xf] %v1429
    %1558 = vst [vmem:[%s3 + $0xdc] sm:$0xf] %v1430
    %1559 = vst [vmem:[%s3 + $0xe0] sm:$0xf] %v1431
    %1560 = vst [vmem:[%s3 + $0xe4] sm:$0xf] %v1432
    %1561 = vst [vmem:[%s3 + $0xe8] sm:$0xf] %v1433
    %1562 = vst [vmem:[%s3 + $0xec] sm:$0xf] %v1434
    %1563 = vst [vmem:[%s3 + $0xf0] sm:$0xf] %v1435
    %1564 = vst [vmem:[%s3 + $0xf4] sm:$0xf] %v1436
    %1565 = vst [vmem:[%s3 + $0xf8] sm:$0xf] %v1437
    %1566 = vst [vmem:[%s3 + $0xfc] sm:$0xf] %v1438
  $region21: #{discriminator_forward.5} parent=0 // pred_fallthru
    _
  // Predicated region
  $region22: #{discriminator_forward.5} parent=0 // pred_check
    _
  $region23: #{discriminator_forward.5} parent=0 // pred_check_branch
    %1568 = sbr.rel (0) target = $region25
  $region24: #{discriminator_forward.5} parent=0 // pred_region
    _
  $region25: #{discriminator_forward.5} parent=0 // pred_fallthru
    _
  // Predicated region
  $region26: #{discriminator_forward.5} parent=0 // pred_check
    _
  $region27: #{discriminator_forward.5} parent=0 // pred_check_branch
    %1570 = sbr.rel (0) target = $region29
  $region28: #{discriminator_forward.5} parent=0 // pred_region
    _
  $region29: #{discriminator_forward.5} parent=0 // pred_fallthru
    _

// kernel: discriminator_forward.6
$region0: #{discriminator_forward.6}
  #allocation0 [shape = 'u32[]', space=smem, size = 0x4, offset = 0x4, fixed_abs, tag = 'smem constant byte address 0x4 - core index']
  #allocation1 [shape = 'u32[144,128]{1,0:T(1,128)}', space=vmem, size = 0x12000, scoped, tag = 'internal scratch']
  #allocation2 [shape = 'f32[128,128]{1,0:T(8,128)}', space=vmem, size = 0x10000, scoped, tag = 'scratch operand']
  %s0 = inlined_call_operand.vmem [shape: bf16[128,1024], index: 0, kind: input, shape index: {}]
  %s1 = inlined_call_operand.vmem [shape: bf16[1024,128], index: 1, kind: input, shape index: {}]
  %s2 = inlined_call_operand.vmem [shape: f32[1,128], index: 2, kind: input, shape index: {}]
  %s3 = inlined_call_operand.vmem [shape: f32[1,128], index: 3, kind: input, shape index: {}]
  %s4 = inlined_call_operand.vmem [shape: bf16[128,128], index: 4, kind: output, shape index: {}]
  %s5 = sld [smem:[#allocation0]]
  $region80: #{discriminator_forward.6} parent=0
    _
  %s7 = ssub.s32 1, %s5
  %s8 = scalar_select 0, %s7, %s5
  $region1: #{discriminator_forward.6} parent=0
    #allocation3 [shape = 'u8[262144]{0}', space=vmem, size = 0x40000, scoped, tag = 'input window, operand 0']
    loop: start=0, step=1, limit=4
    $region2: #{discriminator_forward.6} parent=1 // loop_pre_header
      _
    $region3: #{discriminator_forward.6} parent=1 // loop_header
      %s10 = sphi 0, %s14
      %p11 = scmp.ge.s32.totalorder %s10, 4
      %s20 = sphi 0, %s22
      %s23 = sphi 0, %s20
      %s24 = sphi 0, %s23
      %s40 = sphi 0, %s24
      %s46 = sphi 0, %s48
      %s49 = sphi 0, %s46
      %s50 = sphi 0, %s49
      %s66 = sphi 0, %s50
      %s70 = sphi 0, %s70
      %s72 = sphi 0, %s70
      %s73 = sphi 0, %s72
      %s87 = sphi 0, %s73
      %s91 = sphi 0, %s91
      %s93 = sphi 0, %s91
      %s94 = sphi 0, %s93
      %s108 = sphi 0, %s94
      %s112 = sphi 0, %s112
      %s114 = sphi 0, %s112
      %s115 = sphi 0, %s114
      %s129 = sphi 0, %s115
    $region4: #{discriminator_forward.6} parent=1 // loop_header_branch
      %13 = sbr.rel (%p11) target = $region8
    $region5: #{discriminator_forward.6} parent=1 // loop_body
      %s15 = ssub.s32 %s10, 1
      %s16 = ssub.s32 %s10, 2
      %s17 = sadd.s32 %s10, 1
      %s18 = ssub.s32 %s10, %s17
      %p19 = scmp.eq.s32.totalorder %s18, 0
      %s21 = sadd.s32 %s20, 1
      %s22 = scalar_select %p19, %s20, %s21
      %p25 = pneg %p19
      %p26 = scmp.eq.s32.totalorder %s10, 1
      %p27 = por %p25, %p26
      %p28 = scmp.ne.s32.totalorder %s20, %s23
      %p29 = scmp.eq.s32.totalorder %s10, 0
      %p30 = por %p28, %p29
      %p31 = scmp.ne.s32.totalorder %s20, %s23
      %p32 = scmp.eq.s32.totalorder %s15, 1
      %p33 = por %p31, %p32
      %p34 = scmp.ne.s32.totalorder %s23, %s24
      %p35 = scmp.eq.s32.totalorder %s15, 0
      %p36 = por %p34, %p35
      %p37 = scmp.ne.s32.totalorder %s23, %s24
      %p38 = scmp.eq.s32.totalorder %s16, 1
      %p39 = por %p37, %p38
      %p41 = scmp.ne.s32.totalorder %s24, %s40
      %p42 = scmp.eq.s32.totalorder %s16, 0
      %p43 = por %p41, %p42
      %s44 = ssub.s32 %s10, %s17
      %p45 = scmp.eq.s32.totalorder %s44, 0
      %s47 = sadd.s32 %s46, 1
      %s48 = scalar_select %p45, %s46, %s47
      %p51 = pneg %p45
      %p52 = scmp.eq.s32.totalorder %s10, 1
      %p53 = por %p51, %p52
      %p54 = scmp.ne.s32.totalorder %s46, %s49
      %p55 = scmp.eq.s32.totalorder %s10, 0
      %p56 = por %p54, %p55
      %p57 = scmp.ne.s32.totalorder %s46, %s49
      %p58 = scmp.eq.s32.totalorder %s15, 1
      %p59 = por %p57, %p58
      %p60 = scmp.ne.s32.totalorder %s49, %s50
      %p61 = scmp.eq.s32.totalorder %s15, 0
      %p62 = por %p60, %p61
      %p63 = scmp.ne.s32.totalorder %s49, %s50
      %p64 = scmp.eq.s32.totalorder %s16, 1
      %p65 = por %p63, %p64
      %p67 = scmp.ne.s32.totalorder %s50, %s66
      %p68 = scmp.eq.s32.totalorder %s16, 0
      %p69 = por %p67, %p68
      %s71 = sadd.s32 %s70, 1
      %p74 = scmp.eq.s32.totalorder %s10, 1
      %p75 = scmp.ne.s32.totalorder %s70, %s72
      %p76 = scmp.eq.s32.totalorder %s10, 0
      %p77 = por %p75, %p76
      %p78 = scmp.ne.s32.totalorder %s70, %s72
      %p79 = scmp.eq.s32.totalorder %s15, 1
      %p80 = por %p78, %p79
      %p81 = scmp.ne.s32.totalorder %s72, %s73
      %p82 = scmp.eq.s32.totalorder %s15, 0
      %p83 = por %p81, %p82
      %p84 = scmp.ne.s32.totalorder %s72, %s73
      %p85 = scmp.eq.s32.totalorder %s16, 1
      %p86 = por %p84, %p85
      %p88 = scmp.ne.s32.totalorder %s73, %s87
      %p89 = scmp.eq.s32.totalorder %s16, 0
      %p90 = por %p88, %p89
      %s92 = sadd.s32 %s91, 1
      %p95 = scmp.eq.s32.totalorder %s10, 1
      %p96 = scmp.ne.s32.totalorder %s91, %s93
      %p97 = scmp.eq.s32.totalorder %s10, 0
      %p98 = por %p96, %p97
      %p99 = scmp.ne.s32.totalorder %s91, %s93
      %p100 = scmp.eq.s32.totalorder %s15, 1
      %p101 = por %p99, %p100
      %p102 = scmp.ne.s32.totalorder %s93, %s94
      %p103 = scmp.eq.s32.totalorder %s15, 0
      %p104 = por %p102, %p103
      %p105 = scmp.ne.s32.totalorder %s93, %s94
      %p106 = scmp.eq.s32.totalorder %s16, 1
      %p107 = por %p105, %p106
      %p109 = scmp.ne.s32.totalorder %s94, %s108
      %p110 = scmp.eq.s32.totalorder %s16, 0
      %p111 = por %p109, %p110
      %s113 = sadd.s32 %s112, 1
      %p116 = scmp.eq.s32.totalorder %s10, 1
      %p117 = scmp.ne.s32.totalorder %s112, %s114
      %p118 = scmp.eq.s32.totalorder %s10, 0
      %p119 = por %p117, %p118
      %p120 = scmp.ne.s32.totalorder %s112, %s114
      %p121 = scmp.eq.s32.totalorder %s15, 1
      %p122 = por %p120, %p121
      %p123 = scmp.ne.s32.totalorder %s114, %s115
      %p124 = scmp.eq.s32.totalorder %s15, 0
      %p125 = por %p123, %p124
      %p126 = scmp.ne.s32.totalorder %s114, %s115
      %p127 = scmp.eq.s32.totalorder %s16, 1
      %p128 = por %p126, %p127
      %p130 = scmp.ne.s32.totalorder %s115, %s129
      %p131 = scmp.eq.s32.totalorder %s16, 0
      %p132 = por %p130, %p131
      %p133 = scmp.le.s32.totalorder 1, %s10
      %p134 = scmp.lt.s32.totalorder %s10, 3
      %p135 = pnand %p133, %p134
      %p136 = pneg %p135
      // Predicated region
      $region9: #{discriminator_forward.6} parent=5 // pred_check
        _
      $region10: #{discriminator_forward.6} parent=5 // pred_check_branch
        %138 = sbr.rel (%p135) target = $region12
      $region11: #{discriminator_forward.6} parent=5 // pred_region
        %s139 = ssub.s32 %s10, 1
        // Predicated region
        $region13: #{discriminator_forward.6} parent=11 // pred_check
          %p140 = pneg %p83
        $region14: #{discriminator_forward.6} parent=11 // pred_check_branch
          %142 = sbr.rel (%p140) target = $region16
        $region15: #{discriminator_forward.6} parent=11 // pred_region
          _
        $region16: #{discriminator_forward.6} parent=11 // pred_fallthru
          _
        // Predicated region
        $region17: #{discriminator_forward.6} parent=11 // pred_check
          %p143 = pneg %p104
        $region18: #{discriminator_forward.6} parent=11 // pred_check_branch
          %145 = sbr.rel (%p143) target = $region20
        $region19: #{discriminator_forward.6} parent=11 // pred_region
          _
        $region20: #{discriminator_forward.6} parent=11 // pred_fallthru
          _
      $region12: #{discriminator_forward.6} parent=5 // pred_fallthru
        _
      %p146 = scmp.lt.s32.totalorder %s10, 2
      // Predicated region
      $region21: #{discriminator_forward.6} parent=5 // pred_check
        %p147 = pneg %p146
      $region22: #{discriminator_forward.6} parent=5 // pred_check_branch
        %149 = sbr.rel (%p147) target = $region24
      $region23: #{discriminator_forward.6} parent=5 // pred_region
        // Predicated region
        $region25: #{discriminator_forward.6} parent=23 // pred_check
          %p150 = pneg %p30
        $region26: #{discriminator_forward.6} parent=23 // pred_check_branch
          %152 = sbr.rel (%p150) target = $region28
        $region27: #{discriminator_forward.6} parent=23 // pred_region
          %s153 = sand.u32 %s20, 1
          %s154 = sand.u32 %s20, 1
          %s155 = smul.addr %s154, 256
          %s156 = scalar_lea.vmem [#allocation3], %s155
          %s157 = smul.u32 4, %s10
          %s158 = smul.addr %s157, 4
          %s159 = scalar_lea.vmem %s0, %s158
          // Predicated region
          $region29: #{discriminator_forward.6} parent=27 // pred_check
            _
          $region30: #{discriminator_forward.6} parent=27 // pred_check_branch
            %161 = sbr.rel (0) target = $region32
          $region31: #{discriminator_forward.6} parent=27 // pred_region
            // Predicated region
            $region33: #{discriminator_forward.6} parent=31 // pred_check
              _
            $region34: #{discriminator_forward.6} parent=31 // pred_check_branch
              %163 = sbr.rel (0) target = $region36
            $region35: #{discriminator_forward.6} parent=31 // pred_region
              loop: start=0, step=1, limit=1
              $region37: #{discriminator_forward.6} parent=35 // loop_pre_header
                _
              $region38: #{discriminator_forward.6} parent=35 // loop_header
                %s165 = sphi 0, %s169
                %p166 = scmp.ge.s32.totalorder %s165, 1
                %s170 = sphi %s159, %s159
                %s171 = sphi %s156, %s156
              $region39: #{discriminator_forward.6} parent=35 // loop_header_branch
                %168 = sbr.rel (%p166) target = $region43
              $region40: #{discriminator_forward.6} parent=35 // loop_body
                %v172 = vld [vmem:[%s170] sm:$0xff]
                %173 = vst [vmem:[%s171] sm:$0xff] %v172
                %v174 = vld [vmem:[%s170 + $0x8] sm:$0xff]
                %175 = vst [vmem:[%s171 + $0x8] sm:$0xff] %v174
                %v176 = vld [vmem:[%s170 + $0x20] sm:$0xff]
                %177 = vst [vmem:[%s171 + $0x10] sm:$0xff] %v176
                %v178 = vld [vmem:[%s170 + $0x28] sm:$0xff]
                %179 = vst [vmem:[%s171 + $0x18] sm:$0xff] %v178
                %v180 = vld [vmem:[%s170 + $0x40] sm:$0xff]
                %181 = vst [vmem:[%s171 + $0x20] sm:$0xff] %v180
                %v182 = vld [vmem:[%s170 + $0x48] sm:$0xff]
                %183 = vst [vmem:[%s171 + $0x28] sm:$0xff] %v182
                %v184 = vld [vmem:[%s170 + $0x60] sm:$0xff]
                %185 = vst [vmem:[%s171 + $0x30] sm:$0xff] %v184
                %v186 = vld [vmem:[%s170 + $0x68] sm:$0xff]
                %187 = vst [vmem:[%s171 + $0x38] sm:$0xff] %v186
                %v188 = vld [vmem:[%s170 + $0x80] sm:$0xff]
                %189 = vst [vmem:[%s171 + $0x40] sm:$0xff] %v188
                %v190 = vld [vmem:[%s170 + $0x88] sm:$0xff]
                %191 = vst [vmem:[%s171 + $0x48] sm:$0xff] %v190
                %v192 = vld [vmem:[%s170 + $0xa0] sm:$0xff]
                %193 = vst [vmem:[%s171 + $0x50] sm:$0xff] %v192
                %v194 = vld [vmem:[%s170 + $0xa8] sm:$0xff]
                %195 = vst [vmem:[%s171 + $0x58] sm:$0xff] %v194
                %v196 = vld [vmem:[%s170 + $0xc0] sm:$0xff]
                %197 = vst [vmem:[%s171 + $0x60] sm:$0xff] %v196
                %v198 = vld [vmem:[%s170 + $0xc8] sm:$0xff]
                %199 = vst [vmem:[%s171 + $0x68] sm:$0xff] %v198
                %v200 = vld [vmem:[%s170 + $0xe0] sm:$0xff]
                %201 = vst [vmem:[%s171 + $0x70] sm:$0xff] %v200
                %v202 = vld [vmem:[%s170 + $0xe8] sm:$0xff]
                %203 = vst [vmem:[%s171 + $0x78] sm:$0xff] %v202
                %v204 = vld [vmem:[%s170 + $0x100] sm:$0xff]
                %205 = vst [vmem:[%s171 + $0x80] sm:$0xff] %v204
                %v206 = vld [vmem:[%s170 + $0x108] sm:$0xff]
                %207 = vst [vmem:[%s171 + $0x88] sm:$0xff] %v206
                %v208 = vld [vmem:[%s170 + $0x120] sm:$0xff]
                %209 = vst [vmem:[%s171 + $0x90] sm:$0xff] %v208
                %v210 = vld [vmem:[%s170 + $0x128] sm:$0xff]
                %211 = vst [vmem:[%s171 + $0x98] sm:$0xff] %v210
                %v212 = vld [vmem:[%s170 + $0x140] sm:$0xff]
                %213 = vst [vmem:[%s171 + $0xa0] sm:$0xff] %v212
                %v214 = vld [vmem:[%s170 + $0x148] sm:$0xff]
                %215 = vst [vmem:[%s171 + $0xa8] sm:$0xff] %v214
                %v216 = vld [vmem:[%s170 + $0x160] sm:$0xff]
                %217 = vst [vmem:[%s171 + $0xb0] sm:$0xff] %v216
                %v218 = vld [vmem:[%s170 + $0x168] sm:$0xff]
                %219 = vst [vmem:[%s171 + $0xb8] sm:$0xff] %v218
                %v220 = vld [vmem:[%s170 + $0x180] sm:$0xff]
                %221 = vst [vmem:[%s171 + $0xc0] sm:$0xff] %v220
                %v222 = vld [vmem:[%s170 + $0x188] sm:$0xff]
                %223 = vst [vmem:[%s171 + $0xc8] sm:$0xff] %v222
                %v224 = vld [vmem:[%s170 + $0x1a0] sm:$0xff]
                %225 = vst [vmem:[%s171 + $0xd0] sm:$0xff] %v224
                %v226 = vld [vmem:[%s170 + $0x1a8] sm:$0xff]
                %227 = vst [vmem:[%s171 + $0xd8] sm:$0xff] %v226
                %v228 = vld [vmem:[%s170 + $0x1c0] sm:$0xff]
                %229 = vst [vmem:[%s171 + $0xe0] sm:$0xff] %v228
                %v230 = vld [vmem:[%s170 + $0x1c8] sm:$0xff]
                %231 = vst [vmem:[%s171 + $0xe8] sm:$0xff] %v230
                %v232 = vld [vmem:[%s170 + $0x1e0] sm:$0xff]
                %233 = vst [vmem:[%s171 + $0xf0] sm:$0xff] %v232
                %v234 = vld [vmem:[%s170 + $0x1e8] sm:$0xff]
                %235 = vst [vmem:[%s171 + $0xf8] sm:$0xff] %v234
              $region41: #{discriminator_forward.6} parent=35 // loop_footer
                %s169 = sadd.s32 1, %s165
              $region42: #{discriminator_forward.6} parent=35 // loop_footer_branch
                %164 = sbr.rel target = $region38
              $region43: #{discriminator_forward.6} parent=35 // loop_exit
                _
            $region36: #{discriminator_forward.6} parent=31 // pred_fallthru
              _
            // Predicated region
            $region44: #{discriminator_forward.6} parent=31 // pred_check
              _
            $region45: #{discriminator_forward.6} parent=31 // pred_check_branch
              %237 = sbr.rel target = $region47
            $region46: #{discriminator_forward.6} parent=31 // pred_region
              _
            $region47: #{discriminator_forward.6} parent=31 // pred_fallthru
              _
          $region32: #{discriminator_forward.6} parent=27 // pred_fallthru
            _
          %238 = vnop
        $region28: #{discriminator_forward.6} parent=23 // pred_fallthru
          _
        // Predicated region
        $region48: #{discriminator_forward.6} parent=23 // pred_check
          %p239 = pneg %p56
        $region49: #{discriminator_forward.6} parent=23 // pred_check_branch
          %241 = sbr.rel (%p239) target = $region51
        $region50: #{discriminator_forward.6} parent=23 // pred_region
          %s242 = smul.u32 64, %s10
          %p243 = scmp.lt.s32.totalorder %s242, 127
          %s244 = scalar_select %p243, %s242, 127
          %s245 = smul.addr %s244, 4
          %s246 = scalar_lea.vmem %s1, %s245
          %s247 = smul.u32 64, %s10
        $region51: #{discriminator_forward.6} parent=23 // pred_fallthru
          _
      $region24: #{discriminator_forward.6} parent=5 // pred_fallthru
        _
      %p248 = scmp.le.s32.totalorder 1, %s10
      %p249 = scmp.lt.s32.totalorder %s10, 3
      %p250 = pnand %p248, %p249
      %p251 = pneg %p250
      // Predicated region
      $region52: #{discriminator_forward.6} parent=5 // pred_check
        _
      $region53: #{discriminator_forward.6} parent=5 // pred_check_branch
        %253 = sbr.rel (%p250) target = $region55
      $region54: #{discriminator_forward.6} parent=5 // pred_region
        %s254 = ssub.s32 %s10, 1
        %s255 = sand.u32 %s23, 1
        %s256 = sand.u32 %s23, 1
        %s257 = smul.addr %s256, 256
        %s258 = scalar_lea.vmem [#allocation3], %s257
        // Predicated region
        $region56: #{discriminator_forward.6} parent=54 // pred_check
          %p259 = pneg %p36
        $region57: #{discriminator_forward.6} parent=54 // pred_check_branch
          %261 = sbr.rel (%p259) target = $region59
        $region58: #{discriminator_forward.6} parent=54 // pred_region
          _
        $region59: #{discriminator_forward.6} parent=54 // pred_fallthru
          _
        %s262 = sand.u32 %s23, 1
        %s263 = sand.u32 %s23, 1
        %s264 = smul.addr %s263, 256
        %s265 = scalar_lea.vmem [#allocation3], %s264
        %p266 = pneg %p36
        %p267 = pneg %p33
        %s268 = smul.u32 64, %s15
        %p269 = scmp.lt.s32.totalorder %s268, 127
        %s270 = scalar_select %p269, %s268, 127
        %s271 = smul.addr %s270, 4
        %s272 = scalar_lea.vmem %s1, %s271
        %p273 = pneg %p62
        %p274 = pneg %p59
        %p275 = pneg %p83
        %p276 = pneg %p80
        %p277 = pneg %p104
        %p278 = pneg %p101
        %p279 = pneg %p125
        %p280 = pneg %p122
        %s281 = smul.u32 4, %s15
        %s282 = smul.u32 64, %s15
        %p283 = scmp.lt.s32.totalorder %s282, 127
        %s284 = scalar_select %p283, %s282, 127
        %s285 = smul.addr %s284, 4
        %s286 = scalar_lea.vmem %s1, %s285
        %s287 = smul.u32 64, %s15
        %p289 = scmp.eq.s32.totalorder %s15, 0
        // Predicated region
        $region60: #{discriminator_forward.6} parent=54 // pred_check
          %p290 = pneg %p289
        $region61: #{discriminator_forward.6} parent=54 // pred_check_branch
          %292 = sbr.rel (%p290) target = $region63
        $region62: #{discriminator_forward.6} parent=54 // pred_region
          %293 = vst [vmem:[#allocation2] sm:$0xff] 0.0
          %294 = vst [vmem:[#allocation2 + $0x8] sm:$0xff] 0.0
          %295 = vst [vmem:[#allocation2 + $0x10] sm:$0xff] 0.0
          %296 = vst [vmem:[#allocation2 + $0x18] sm:$0xff] 0.0
          %297 = vst [vmem:[#allocation2 + $0x20] sm:$0xff] 0.0
          %298 = vst [vmem:[#allocation2 + $0x28] sm:$0xff] 0.0
          %299 = vst [vmem:[#allocation2 + $0x30] sm:$0xff] 0.0
          %300 = vst [vmem:[#allocation2 + $0x38] sm:$0xff] 0.0
          %301 = vst [vmem:[#allocation2 + $0x40] sm:$0xff] 0.0
          %302 = vst [vmem:[#allocation2 + $0x48] sm:$0xff] 0.0
          %303 = vst [vmem:[#allocation2 + $0x50] sm:$0xff] 0.0
          %304 = vst [vmem:[#allocation2 + $0x58] sm:$0xff] 0.0
          %305 = vst [vmem:[#allocation2 + $0x60] sm:$0xff] 0.0
          %306 = vst [vmem:[#allocation2 + $0x68] sm:$0xff] 0.0
          %307 = vst [vmem:[#allocation2 + $0x70] sm:$0xff] 0.0
          %308 = vst [vmem:[#allocation2 + $0x78] sm:$0xff] 0.0
        $region63: #{discriminator_forward.6} parent=54 // pred_fallthru
          _
        %v309 = vld [vmem:[#allocation2] sm:$0xff]
        %v310 = vld [vmem:[#allocation2 + $0x8] sm:$0xff]
        %v311 = vld [vmem:[#allocation2 + $0x10] sm:$0xff]
        %v312 = vld [vmem:[#allocation2 + $0x18] sm:$0xff]
        %v313 = vld [vmem:[#allocation2 + $0x20] sm:$0xff]
        %v314 = vld [vmem:[#allocation2 + $0x28] sm:$0xff]
        %v315 = vld [vmem:[#allocation2 + $0x30] sm:$0xff]
        %v316 = vld [vmem:[#allocation2 + $0x38] sm:$0xff]
        %v317 = vld [vmem:[#allocation2 + $0x40] sm:$0xff]
        %v318 = vld [vmem:[#allocation2 + $0x48] sm:$0xff]
        %v319 = vld [vmem:[#allocation2 + $0x50] sm:$0xff]
        %v320 = vld [vmem:[#allocation2 + $0x58] sm:$0xff]
        %v321 = vld [vmem:[#allocation2 + $0x60] sm:$0xff]
        %v322 = vld [vmem:[#allocation2 + $0x68] sm:$0xff]
        %v323 = vld [vmem:[#allocation2 + $0x70] sm:$0xff]
        %v324 = vld [vmem:[#allocation2 + $0x78] sm:$0xff]
        %v325 = vld [vmem:[%s258] sm:$0xff]
        %v326 = vld [vmem:[%s258 + $0x8] sm:$0xff]
        %v327 = vld [vmem:[%s258 + $0x10] sm:$0xff]
        %v328 = vld [vmem:[%s258 + $0x18] sm:$0xff]
        %v329 = vld [vmem:[%s258 + $0x20] sm:$0xff]
        %v330 = vld [vmem:[%s258 + $0x28] sm:$0xff]
        %v331 = vld [vmem:[%s258 + $0x30] sm:$0xff]
        %v332 = vld [vmem:[%s258 + $0x38] sm:$0xff]
        %v333 = vld [vmem:[%s258 + $0x40] sm:$0xff]
        %v334 = vld [vmem:[%s258 + $0x48] sm:$0xff]
        %v335 = vld [vmem:[%s258 + $0x50] sm:$0xff]
        %v336 = vld [vmem:[%s258 + $0x58] sm:$0xff]
        %v337 = vld [vmem:[%s258 + $0x60] sm:$0xff]
        %v338 = vld [vmem:[%s258 + $0x68] sm:$0xff]
        %v339 = vld [vmem:[%s258 + $0x70] sm:$0xff]
        %v340 = vld [vmem:[%s258 + $0x78] sm:$0xff]
        %v341 = vld [vmem:[%s258 + $0x80] sm:$0xff]
        %v342 = vld [vmem:[%s258 + $0x88] sm:$0xff]
        %v343 = vld [vmem:[%s258 + $0x90] sm:$0xff]
        %v344 = vld [vmem:[%s258 + $0x98] sm:$0xff]
        %v345 = vld [vmem:[%s258 + $0xa0] sm:$0xff]
        %v346 = vld [vmem:[%s258 + $0xa8] sm:$0xff]
        %v347 = vld [vmem:[%s258 + $0xb0] sm:$0xff]
        %v348 = vld [vmem:[%s258 + $0xb8] sm:$0xff]
        %v349 = vld [vmem:[%s258 + $0xc0] sm:$0xff]
        %v350 = vld [vmem:[%s258 + $0xc8] sm:$0xff]
        %v351 = vld [vmem:[%s258 + $0xd0] sm:$0xff]
        %v352 = vld [vmem:[%s258 + $0xd8] sm:$0xff]
        %v353 = vld [vmem:[%s258 + $0xe0] sm:$0xff]
        %v354 = vld [vmem:[%s258 + $0xe8] sm:$0xff]
        %v355 = vld [vmem:[%s258 + $0xf0] sm:$0xff]
        %v356 = vld [vmem:[%s258 + $0xf8] sm:$0xff]
        %v357 = vld [vmem:[%s286] sm:$0xf]
        %v358 = vld [vmem:[%s286 + $0x4] sm:$0xf]
        %v359 = vld [vmem:[%s286 + $0x8] sm:$0xf]
        %v360 = vld [vmem:[%s286 + $0xc] sm:$0xf]
        %v361 = vld [vmem:[%s286 + $0x10] sm:$0xf]
        %v362 = vld [vmem:[%s286 + $0x14] sm:$0xf]
        %v363 = vld [vmem:[%s286 + $0x18] sm:$0xf]
        %v364 = vld [vmem:[%s286 + $0x1c] sm:$0xf]
        %v365 = vld [vmem:[%s286 + $0x20] sm:$0xf]
        %v366 = vld [vmem:[%s286 + $0x24] sm:$0xf]
        %v367 = vld [vmem:[%s286 + $0x28] sm:$0xf]
        %v368 = vld [vmem:[%s286 + $0x2c] sm:$0xf]
        %v369 = vld [vmem:[%s286 + $0x30] sm:$0xf]
        %v370 = vld [vmem:[%s286 + $0x34] sm:$0xf]
        %v371 = vld [vmem:[%s286 + $0x38] sm:$0xf]
        %v372 = vld [vmem:[%s286 + $0x3c] sm:$0xf]
        %v373 = vld [vmem:[%s286 + $0x40] sm:$0xf]
        %v374 = vld [vmem:[%s286 + $0x44] sm:$0xf]
        %v375 = vld [vmem:[%s286 + $0x48] sm:$0xf]
        %v376 = vld [vmem:[%s286 + $0x4c] sm:$0xf]
        %v377 = vld [vmem:[%s286 + $0x50] sm:$0xf]
        %v378 = vld [vmem:[%s286 + $0x54] sm:$0xf]
        %v379 = vld [vmem:[%s286 + $0x58] sm:$0xf]
        %v380 = vld [vmem:[%s286 + $0x5c] sm:$0xf]
        %v381 = vld [vmem:[%s286 + $0x60] sm:$0xf]
        %v382 = vld [vmem:[%s286 + $0x64] sm:$0xf]
        %v383 = vld [vmem:[%s286 + $0x68] sm:$0xf]
        %v384 = vld [vmem:[%s286 + $0x6c] sm:$0xf]
        %v385 = vld [vmem:[%s286 + $0x70] sm:$0xf]
        %v386 = vld [vmem:[%s286 + $0x74] sm:$0xf]
        %v387 = vld [vmem:[%s286 + $0x78] sm:$0xf]
        %v388 = vld [vmem:[%s286 + $0x7c] sm:$0xf]
        %v389 = vld [vmem:[%s286 + $0x80] sm:$0xf]
        %v390 = vld [vmem:[%s286 + $0x84] sm:$0xf]
        %v391 = vld [vmem:[%s286 + $0x88] sm:$0xf]
        %v392 = vld [vmem:[%s286 + $0x8c] sm:$0xf]
        %v393 = vld [vmem:[%s286 + $0x90] sm:$0xf]
        %v394 = vld [vmem:[%s286 + $0x94] sm:$0xf]
        %v395 = vld [vmem:[%s286 + $0x98] sm:$0xf]
        %v396 = vld [vmem:[%s286 + $0x9c] sm:$0xf]
        %v397 = vld [vmem:[%s286 + $0xa0] sm:$0xf]
        %v398 = vld [vmem:[%s286 + $0xa4] sm:$0xf]
        %v399 = vld [vmem:[%s286 + $0xa8] sm:$0xf]
        %v400 = vld [vmem:[%s286 + $0xac] sm:$0xf]
        %v401 = vld [vmem:[%s286 + $0xb0] sm:$0xf]
        %v402 = vld [vmem:[%s286 + $0xb4] sm:$0xf]
        %v403 = vld [vmem:[%s286 + $0xb8] sm:$0xf]
        %v404 = vld [vmem:[%s286 + $0xbc] sm:$0xf]
        %v405 = vld [vmem:[%s286 + $0xc0] sm:$0xf]
        %v406 = vld [vmem:[%s286 + $0xc4] sm:$0xf]
        %v407 = vld [vmem:[%s286 + $0xc8] sm:$0xf]
        %v408 = vld [vmem:[%s286 + $0xcc] sm:$0xf]
        %v409 = vld [vmem:[%s286 + $0xd0] sm:$0xf]
        %v410 = vld [vmem:[%s286 + $0xd4] sm:$0xf]
        %v411 = vld [vmem:[%s286 + $0xd8] sm:$0xf]
        %v412 = vld [vmem:[%s286 + $0xdc] sm:$0xf]
        %v413 = vld [vmem:[%s286 + $0xe0] sm:$0xf]
        %v414 = vld [vmem:[%s286 + $0xe4] sm:$0xf]
        %v415 = vld [vmem:[%s286 + $0xe8] sm:$0xf]
        %v416 = vld [vmem:[%s286 + $0xec] sm:$0xf]
        %v417 = vld [vmem:[%s286 + $0xf0] sm:$0xf]
        %v418 = vld [vmem:[%s286 + $0xf4] sm:$0xf]
        %v419 = vld [vmem:[%s286 + $0xf8] sm:$0xf]
        %v420 = vld [vmem:[%s286 + $0xfc] sm:$0xf]
        %v453 = vunpack.c.l.b16 %v325
        %v454 = vunpack.c.h.b16 %v325
        %v455 = vunpack.c.l.b16 %v326
        %v456 = vunpack.c.h.b16 %v326
        %v457 = vunpack.c.l.b16 %v327
        %v458 = vunpack.c.h.b16 %v327
        %v459 = vunpack.c.l.b16 %v328
        %v460 = vunpack.c.h.b16 %v328
        %v461 = vunpack.c.l.b16 %v329
        %v462 = vunpack.c.h.b16 %v329
        %v463 = vunpack.c.l.b16 %v330
        %v464 = vunpack.c.h.b16 %v330
        %v465 = vunpack.c.l.b16 %v331
        %v466 = vunpack.c.h.b16 %v331
        %v467 = vunpack.c.l.b16 %v332
        %v468 = vunpack.c.h.b16 %v332
        %v469 = vunpack.c.l.b16 %v333
        %v470 = vunpack.c.h.b16 %v333
        %v471 = vunpack.c.l.b16 %v334
        %v472 = vunpack.c.h.b16 %v334
        %v473 = vunpack.c.l.b16 %v335
        %v474 = vunpack.c.h.b16 %v335
        %v475 = vunpack.c.l.b16 %v336
        %v476 = vunpack.c.h.b16 %v336
        %v477 = vunpack.c.l.b16 %v337
        %v478 = vunpack.c.h.b16 %v337
        %v479 = vunpack.c.l.b16 %v338
        %v480 = vunpack.c.h.b16 %v338
        %v481 = vunpack.c.l.b16 %v339
        %v482 = vunpack.c.h.b16 %v339
        %v483 = vunpack.c.l.b16 %v340
        %v484 = vunpack.c.h.b16 %v340
        %v485 = vunpack.c.l.b16 %v341
        %v486 = vunpack.c.h.b16 %v341
        %v487 = vunpack.c.l.b16 %v342
        %v488 = vunpack.c.h.b16 %v342
        %v489 = vunpack.c.l.b16 %v343
        %v490 = vunpack.c.h.b16 %v343
        %v491 = vunpack.c.l.b16 %v344
        %v492 = vunpack.c.h.b16 %v344
        %v493 = vunpack.c.l.b16 %v345
        %v494 = vunpack.c.h.b16 %v345
        %v495 = vunpack.c.l.b16 %v346
        %v496 = vunpack.c.h.b16 %v346
        %v497 = vunpack.c.l.b16 %v347
        %v498 = vunpack.c.h.b16 %v347
        %v499 = vunpack.c.l.b16 %v348
        %v500 = vunpack.c.h.b16 %v348
        %v501 = vunpack.c.l.b16 %v349
        %v502 = vunpack.c.h.b16 %v349
        %v503 = vunpack.c.l.b16 %v350
        %v504 = vunpack.c.h.b16 %v350
        %v505 = vunpack.c.l.b16 %v351
        %v506 = vunpack.c.h.b16 %v351
        %v507 = vunpack.c.l.b16 %v352
        %v508 = vunpack.c.h.b16 %v352
        %v509 = vunpack.c.l.b16 %v353
        %v510 = vunpack.c.h.b16 %v353
        %v511 = vunpack.c.l.b16 %v354
        %v512 = vunpack.c.h.b16 %v354
        %v513 = vunpack.c.l.b16 %v355
        %v514 = vunpack.c.h.b16 %v355
        %v515 = vunpack.c.l.b16 %v356
        %v516 = vunpack.c.h.b16 %v356
        %v517 = vpack.c.b16 %v457, %v453
        %v518 = vpack.c.b16 %v458, %v454
        %v519 = vpack.c.b16 %v459, %v455
        %v520 = vpack.c.b16 %v460, %v456
        %v521 = vpack.c.b16 %v465, %v461
        %v522 = vpack.c.b16 %v466, %v462
        %v523 = vpack.c.b16 %v467, %v463
        %v524 = vpack.c.b16 %v468, %v464
        %v525 = vpack.c.b16 %v473, %v469
        %v526 = vpack.c.b16 %v474, %v470
        %v527 = vpack.c.b16 %v475, %v471
        %v528 = vpack.c.b16 %v476, %v472
        %v529 = vpack.c.b16 %v481, %v477
        %v530 = vpack.c.b16 %v482, %v478
        %v531 = vpack.c.b16 %v483, %v479
        %v532 = vpack.c.b16 %v484, %v480
        %v533 = vpack.c.b16 %v489, %v485
        %v534 = vpack.c.b16 %v490, %v486
        %v535 = vpack.c.b16 %v491, %v487
        %v536 = vpack.c.b16 %v492, %v488
        %v537 = vpack.c.b16 %v497, %v493
        %v538 = vpack.c.b16 %v498, %v494
        %v539 = vpack.c.b16 %v499, %v495
        %v540 = vpack.c.b16 %v500, %v496
        %v541 = vpack.c.b16 %v505, %v501
        %v542 = vpack.c.b16 %v506, %v502
        %v543 = vpack.c.b16 %v507, %v503
        %v544 = vpack.c.b16 %v508, %v504
        %v545 = vpack.c.b16 %v513, %v509
        %v546 = vpack.c.b16 %v514, %v510
        %v547 = vpack.c.b16 %v515, %v511
        %v548 = vpack.c.b16 %v516, %v512
        %v645 = vunpack.c.l.b16 %v357
        %v646 = vunpack.c.l.b16 %v358
        %v647 = vunpack.c.l.b16 %v359
        %v648 = vunpack.c.l.b16 %v360
        %v649 = vunpack.c.l.b16 %v361
        %v650 = vunpack.c.l.b16 %v362
        %v651 = vunpack.c.l.b16 %v363
        %v652 = vunpack.c.l.b16 %v364
        %v653 = vunpack.c.l.b16 %v365
        %v654 = vunpack.c.l.b16 %v366
        %v655 = vunpack.c.l.b16 %v367
        %v656 = vunpack.c.l.b16 %v368
        %v657 = vunpack.c.l.b16 %v369
        %v658 = vunpack.c.l.b16 %v370
        %v659 = vunpack.c.l.b16 %v371
        %v660 = vunpack.c.l.b16 %v372
        %v661 = vunpack.c.l.b16 %v373
        %v662 = vunpack.c.l.b16 %v374
        %v663 = vunpack.c.l.b16 %v375
        %v664 = vunpack.c.l.b16 %v376
        %v665 = vunpack.c.l.b16 %v377
        %v666 = vunpack.c.l.b16 %v378
        %v667 = vunpack.c.l.b16 %v379
        %v668 = vunpack.c.l.b16 %v380
        %v669 = vunpack.c.l.b16 %v381
        %v670 = vunpack.c.l.b16 %v382
        %v671 = vunpack.c.l.b16 %v383
        %v672 = vunpack.c.l.b16 %v384
        %v673 = vunpack.c.l.b16 %v385
        %v674 = vunpack.c.l.b16 %v386
        %v675 = vunpack.c.l.b16 %v387
        %v676 = vunpack.c.l.b16 %v388
        %v677 = vunpack.c.l.b16 %v389
        %v678 = vunpack.c.l.b16 %v390
        %v679 = vunpack.c.l.b16 %v391
        %v680 = vunpack.c.l.b16 %v392
        %v681 = vunpack.c.l.b16 %v393
        %v682 = vunpack.c.l.b16 %v394
        %v683 = vunpack.c.l.b16 %v395
        %v684 = vunpack.c.l.b16 %v396
        %v685 = vunpack.c.l.b16 %v397
        %v686 = vunpack.c.l.b16 %v398
        %v687 = vunpack.c.l.b16 %v399
        %v688 = vunpack.c.l.b16 %v400
        %v689 = vunpack.c.l.b16 %v401
        %v690 = vunpack.c.l.b16 %v402
        %v691 = vunpack.c.l.b16 %v403
        %v692 = vunpack.c.l.b16 %v404
        %v693 = vunpack.c.l.b16 %v405
        %v694 = vunpack.c.l.b16 %v406
        %v695 = vunpack.c.l.b16 %v407
        %v696 = vunpack.c.l.b16 %v408
        %v697 = vunpack.c.l.b16 %v409
        %v698 = vunpack.c.l.b16 %v410
        %v699 = vunpack.c.l.b16 %v411
        %v700 = vunpack.c.l.b16 %v412
        %v701 = vunpack.c.l.b16 %v413
        %v702 = vunpack.c.l.b16 %v414
        %v703 = vunpack.c.l.b16 %v415
        %v704 = vunpack.c.l.b16 %v416
        %v705 = vunpack.c.l.b16 %v417
        %v706 = vunpack.c.l.b16 %v418
        %v707 = vunpack.c.l.b16 %v419
        %v708 = vunpack.c.l.b16 %v420
        %v709 = vpack.c.b16 %v646, %v645
        %v710 = vpack.c.b16 %v648, %v647
        %v711 = vpack.c.b16 %v650, %v649
        %v712 = vpack.c.b16 %v652, %v651
        %v713 = vpack.c.b16 %v654, %v653
        %v714 = vpack.c.b16 %v656, %v655
        %v715 = vpack.c.b16 %v658, %v657
        %v716 = vpack.c.b16 %v660, %v659
        %v717 = vpack.c.b16 %v662, %v661
        %v718 = vpack.c.b16 %v664, %v663
        %v719 = vpack.c.b16 %v666, %v665
        %v720 = vpack.c.b16 %v668, %v667
        %v721 = vpack.c.b16 %v670, %v669
        %v722 = vpack.c.b16 %v672, %v671
        %v723 = vpack.c.b16 %v674, %v673
        %v724 = vpack.c.b16 %v676, %v675
        %v725 = vpack.c.b16 %v678, %v677
        %v726 = vpack.c.b16 %v680, %v679
        %v727 = vpack.c.b16 %v682, %v681
        %v728 = vpack.c.b16 %v684, %v683
        %v729 = vpack.c.b16 %v686, %v685
        %v730 = vpack.c.b16 %v688, %v687
        %v731 = vpack.c.b16 %v690, %v689
        %v732 = vpack.c.b16 %v692, %v691
        %v733 = vpack.c.b16 %v694, %v693
        %v734 = vpack.c.b16 %v696, %v695
        %v735 = vpack.c.b16 %v698, %v697
        %v736 = vpack.c.b16 %v700, %v699
        %v737 = vpack.c.b16 %v702, %v701
        %v738 = vpack.c.b16 %v704, %v703
        %v739 = vpack.c.b16 %v706, %v705
        %v740 = vpack.c.b16 %v708, %v707
        %773 = vmatprep.subr.bf16.mxu0 0
        %774 = vmatpush1.bf16.msra.mxu0 %v709
        %775 = vmatprep.subr.bf16.mxu0 0
        %776 = vmatpush1.bf16.msra.mxu0 %v710
        %777 = vmatprep.subr.bf16.mxu0 0
        %778 = vmatpush1.bf16.msra.mxu0 %v711
        %779 = vmatprep.subr.bf16.mxu0 0
        %780 = vmatpush1.bf16.msra.mxu0 %v712
        %781 = vmatprep.subr.bf16.mxu0 0
        %782 = vmatpush1.bf16.msra.mxu0 %v713
        %783 = vmatprep.subr.bf16.mxu0 0
        %784 = vmatpush1.bf16.msra.mxu0 %v714
        %785 = vmatprep.subr.bf16.mxu0 0
        %786 = vmatpush1.bf16.msra.mxu0 %v715
        %787 = vmatprep.subr.bf16.mxu0 0
        %788 = vmatpush1.bf16.msra.mxu0 %v716
        %789 = vmatprep.subr.bf16.mxu0 0
        %790 = vmatpush1.bf16.msra.mxu0 %v717
        %791 = vmatprep.subr.bf16.mxu0 0
        %792 = vmatpush1.bf16.msra.mxu0 %v718
        %793 = vmatprep.subr.bf16.mxu0 0
        %794 = vmatpush1.bf16.msra.mxu0 %v719
        %795 = vmatprep.subr.bf16.mxu0 0
        %796 = vmatpush1.bf16.msra.mxu0 %v720
        %797 = vmatprep.subr.bf16.mxu0 0
        %798 = vmatpush1.bf16.msra.mxu0 %v721
        %799 = vmatprep.subr.bf16.mxu0 0
        %800 = vmatpush1.bf16.msra.mxu0 %v722
        %801 = vmatprep.subr.bf16.mxu0 0
        %802 = vmatpush1.bf16.msra.mxu0 %v723
        %803 = vmatprep.subr.bf16.mxu0 0
        %804 = vmatpush1.bf16.msra.mxu0 %v724
        %805 = vmatprep.mubr.bf16.mxu0 %v518
        %806 = vmatmul.mubr.bf16.gmra.mrb[0].mxu0 %v517
        %v807 = vpop.f32.mrb[0].mxu0
        %v808 = vadd.f32 0.0, %v807
        %v809 = vpop.f32.mrb[0].mxu0
        %v810 = vpop.f32.mrb[0].mxu0
        %v811 = vadd.f32 0.0, %v810
        %v812 = vpop.f32.mrb[0].mxu0
        %813 = vmatprep.mubr.bf16.mxu0 %v522
        %814 = vmatmul.mubr.bf16.gmra.mrb[0].mxu0 %v521
        %v815 = vpop.f32.mrb[0].mxu0
        %v816 = vadd.f32 0.0, %v815
        %v817 = vpop.f32.mrb[0].mxu0
        %v818 = vpop.f32.mrb[0].mxu0
        %v819 = vadd.f32 0.0, %v818
        %v820 = vpop.f32.mrb[0].mxu0
        %821 = vmatprep.mubr.bf16.mxu0 %v526
        %822 = vmatmul.mubr.bf16.gmra.mrb[0].mxu0 %v525
        %v823 = vpop.f32.mrb[0].mxu0
        %v824 = vadd.f32 0.0, %v823
        %v825 = vpop.f32.mrb[0].mxu0
        %v826 = vpop.f32.mrb[0].mxu0
        %v827 = vadd.f32 0.0, %v826
        %v828 = vpop.f32.mrb[0].mxu0
        %829 = vmatprep.mubr.bf16.mxu0 %v530
        %830 = vmatmul.mubr.bf16.gmra.mrb[0].mxu0 %v529
        %v831 = vpop.f32.mrb[0].mxu0
        %v832 = vadd.f32 0.0, %v831
        %v833 = vpop.f32.mrb[0].mxu0
        %v834 = vpop.f32.mrb[0].mxu0
        %v835 = vadd.f32 0.0, %v834
        %v836 = vpop.f32.mrb[0].mxu0
        %837 = vmatprep.mubr.bf16.mxu0 %v534
        %838 = vmatmul.mubr.bf16.gmra.mrb[0].mxu0 %v533
        %v839 = vpop.f32.mrb[0].mxu0
        %v840 = vadd.f32 0.0, %v839
        %v841 = vpop.f32.mrb[0].mxu0
        %v842 = vpop.f32.mrb[0].mxu0
        %v843 = vadd.f32 0.0, %v842
        %v844 = vpop.f32.mrb[0].mxu0
        %845 = vmatprep.mubr.bf16.mxu0 %v538
        %846 = vmatmul.mubr.bf16.gmra.mrb[0].mxu0 %v537
        %v847 = vpop.f32.mrb[0].mxu0
        %v848 = vadd.f32 0.0, %v847
        %v849 = vpop.f32.mrb[0].mxu0
        %v850 = vpop.f32.mrb[0].mxu0
        %v851 = vadd.f32 0.0, %v850
        %v852 = vpop.f32.mrb[0].mxu0
        %853 = vmatprep.mubr.bf16.mxu0 %v542
        %854 = vmatmul.mubr.bf16.gmra.mrb[0].mxu0 %v541
        %v855 = vpop.f32.mrb[0].mxu0
        %v856 = vadd.f32 0.0, %v855
        %v857 = vpop.f32.mrb[0].mxu0
        %v858 = vpop.f32.mrb[0].mxu0
        %v859 = vadd.f32 0.0, %v858
        %v860 = vpop.f32.mrb[0].mxu0
        %861 = vmatprep.mubr.bf16.mxu0 %v546
        %862 = vmatmul.mubr.bf16.gmra.mrb[0].mxu0 %v545
        %v863 = vpop.f32.mrb[0].mxu0
        %v864 = vadd.f32 0.0, %v863
        %v865 = vpop.f32.mrb[0].mxu0
        %v866 = vpop.f32.mrb[0].mxu0
        %v867 = vadd.f32 0.0, %v866
        %v868 = vpop.f32.mrb[0].mxu0
        %869 = vdwg.mxu0
        %870 = vmatprep.subr.bf16.mxu0 0
        %871 = vmatpush1.bf16.msra.mxu0 %v725
        %872 = vmatprep.subr.bf16.mxu0 0
        %873 = vmatpush1.bf16.msra.mxu0 %v726
        %874 = vmatprep.subr.bf16.mxu0 0
        %875 = vmatpush1.bf16.msra.mxu0 %v727
        %876 = vmatprep.subr.bf16.mxu0 0
        %877 = vmatpush1.bf16.msra.mxu0 %v728
        %878 = vmatprep.subr.bf16.mxu0 0
        %879 = vmatpush1.bf16.msra.mxu0 %v729
        %880 = vmatprep.subr.bf16.mxu0 0
        %881 = vmatpush1.bf16.msra.mxu0 %v730
        %882 = vmatprep.subr.bf16.mxu0 0
        %883 = vmatpush1.bf16.msra.mxu0 %v731
        %884 = vmatprep.subr.bf16.mxu0 0
        %885 = vmatpush1.bf16.msra.mxu0 %v732
        %886 = vmatprep.subr.bf16.mxu0 0
        %887 = vmatpush1.bf16.msra.mxu0 %v733
        %888 = vmatprep.subr.bf16.mxu0 0
        %889 = vmatpush1.bf16.msra.mxu0 %v734
        %890 = vmatprep.subr.bf16.mxu0 0
        %891 = vmatpush1.bf16.msra.mxu0 %v735
        %892 = vmatprep.subr.bf16.mxu0 0
        %893 = vmatpush1.bf16.msra.mxu0 %v736
        %894 = vmatprep.subr.bf16.mxu0 0
        %895 = vmatpush1.bf16.msra.mxu0 %v737
        %896 = vmatprep.subr.bf16.mxu0 0
        %897 = vmatpush1.bf16.msra.mxu0 %v738
        %898 = vmatprep.subr.bf16.mxu0 0
        %899 = vmatpush1.bf16.msra.mxu0 %v739
        %900 = vmatprep.subr.bf16.mxu0 0
        %901 = vmatpush1.bf16.msra.mxu0 %v740
        %902 = vmatprep.mubr.bf16.mxu0 %v520
        %903 = vmatmul.mubr.bf16.gmra.mrb[0].mxu0 %v519
        %v904 = vpop.f32.mrb[0].mxu0
        %v905 = vadd.f32 %v808, %v904
        %v906 = vpop.f32.mrb[0].mxu0
        %v907 = vpop.f32.mrb[0].mxu0
        %v908 = vadd.f32 %v811, %v907
        %v909 = vpop.f32.mrb[0].mxu0
        %910 = vmatprep.mubr.bf16.mxu0 %v524
        %911 = vmatmul.mubr.bf16.gmra.mrb[0].mxu0 %v523
        %v912 = vpop.f32.mrb[0].mxu0
        %v913 = vadd.f32 %v816, %v912
        %v914 = vpop.f32.mrb[0].mxu0
        %v915 = vpop.f32.mrb[0].mxu0
        %v916 = vadd.f32 %v819, %v915
        %v917 = vpop.f32.mrb[0].mxu0
        %918 = vmatprep.mubr.bf16.mxu0 %v528
        %919 = vmatmul.mubr.bf16.gmra.mrb[0].mxu0 %v527
        %v920 = vpop.f32.mrb[0].mxu0
        %v921 = vadd.f32 %v824, %v920
        %v922 = vpop.f32.mrb[0].mxu0
        %v923 = vpop.f32.mrb[0].mxu0
        %v924 = vadd.f32 %v827, %v923
        %v925 = vpop.f32.mrb[0].mxu0
        %926 = vmatprep.mubr.bf16.mxu0 %v532
        %927 = vmatmul.mubr.bf16.gmra.mrb[0].mxu0 %v531
        %v928 = vpop.f32.mrb[0].mxu0
        %v929 = vadd.f32 %v832, %v928
        %v930 = vpop.f32.mrb[0].mxu0
        %v931 = vpop.f32.mrb[0].mxu0
        %v932 = vadd.f32 %v835, %v931
        %v933 = vpop.f32.mrb[0].mxu0
        %934 = vmatprep.mubr.bf16.mxu0 %v536
        %935 = vmatmul.mubr.bf16.gmra.mrb[0].mxu0 %v535
        %v936 = vpop.f32.mrb[0].mxu0
        %v937 = vadd.f32 %v840, %v936
        %v938 = vpop.f32.mrb[0].mxu0
        %v939 = vpop.f32.mrb[0].mxu0
        %v940 = vadd.f32 %v843, %v939
        %v941 = vpop.f32.mrb[0].mxu0
        %942 = vmatprep.mubr.bf16.mxu0 %v540
        %943 = vmatmul.mubr.bf16.gmra.mrb[0].mxu0 %v539
        %v944 = vpop.f32.mrb[0].mxu0
        %v945 = vadd.f32 %v848, %v944
        %v946 = vpop.f32.mrb[0].mxu0
        %v947 = vpop.f32.mrb[0].mxu0
        %v948 = vadd.f32 %v851, %v947
        %v949 = vpop.f32.mrb[0].mxu0
        %950 = vmatprep.mubr.bf16.mxu0 %v544
        %951 = vmatmul.mubr.bf16.gmra.mrb[0].mxu0 %v543
        %v952 = vpop.f32.mrb[0].mxu0
        %v953 = vadd.f32 %v856, %v952
        %v954 = vpop.f32.mrb[0].mxu0
        %v955 = vpop.f32.mrb[0].mxu0
        %v956 = vadd.f32 %v859, %v955
        %v957 = vpop.f32.mrb[0].mxu0
        %958 = vmatprep.mubr.bf16.mxu0 %v548
        %959 = vmatmul.mubr.bf16.gmra.mrb[0].mxu0 %v547
        %v960 = vpop.f32.mrb[0].mxu0
        %v961 = vadd.f32 %v864, %v960
        %v962 = vpop.f32.mrb[0].mxu0
        %v963 = vpop.f32.mrb[0].mxu0
        %v964 = vadd.f32 %v867, %v963
        %v965 = vpop.f32.mrb[0].mxu0
        %966 = vdwg.mxu0
        %v967 = vadd.f32 %v309, %v905
        %v968 = vadd.f32 %v310, %v908
        %v969 = vadd.f32 %v311, %v913
        %v970 = vadd.f32 %v312, %v916
        %v971 = vadd.f32 %v313, %v921
        %v972 = vadd.f32 %v314, %v924
        %v973 = vadd.f32 %v315, %v929
        %v974 = vadd.f32 %v316, %v932
        %v975 = vadd.f32 %v317, %v937
        %v976 = vadd.f32 %v318, %v940
        %v977 = vadd.f32 %v319, %v945
        %v978 = vadd.f32 %v320, %v948
        %v979 = vadd.f32 %v321, %v953
        %v980 = vadd.f32 %v322, %v956
        %v981 = vadd.f32 %v323, %v961
        %v982 = vadd.f32 %v324, %v964
        %983 = vst [vmem:[#allocation2] sm:$0xff] %v967
        %984 = vst [vmem:[#allocation2 + $0x8] sm:$0xff] %v968
        %985 = vst [vmem:[#allocation2 + $0x10] sm:$0xff] %v969
        %986 = vst [vmem:[#allocation2 + $0x18] sm:$0xff] %v970
        %987 = vst [vmem:[#allocation2 + $0x20] sm:$0xff] %v971
        %988 = vst [vmem:[#allocation2 + $0x28] sm:$0xff] %v972
        %989 = vst [vmem:[#allocation2 + $0x30] sm:$0xff] %v973
        %990 = vst [vmem:[#allocation2 + $0x38] sm:$0xff] %v974
        %991 = vst [vmem:[#allocation2 + $0x40] sm:$0xff] %v975
        %992 = vst [vmem:[#allocation2 + $0x48] sm:$0xff] %v976
        %993 = vst [vmem:[#allocation2 + $0x50] sm:$0xff] %v977
        %994 = vst [vmem:[#allocation2 + $0x58] sm:$0xff] %v978
        %995 = vst [vmem:[#allocation2 + $0x60] sm:$0xff] %v979
        %996 = vst [vmem:[#allocation2 + $0x68] sm:$0xff] %v980
        %997 = vst [vmem:[#allocation2 + $0x70] sm:$0xff] %v981
        %998 = vst [vmem:[#allocation2 + $0x78] sm:$0xff] %v982
        %p999 = scmp.eq.s32.totalorder %s15, 1
        // Predicated region
        $region64: #{discriminator_forward.6} parent=54 // pred_check
          %p1000 = pneg %p999
        $region65: #{discriminator_forward.6} parent=54 // pred_check_branch
          %1002 = sbr.rel (%p1000) target = $region67
        $region66: #{discriminator_forward.6} parent=54 // pred_region
          %v1003 = vld [vmem:[#allocation2] sm:$0xff]
          %v1004 = vld [vmem:[#allocation2 + $0x8] sm:$0xff]
          %v1005 = vld [vmem:[#allocation2 + $0x10] sm:$0xff]
          %v1006 = vld [vmem:[#allocation2 + $0x18] sm:$0xff]
          %v1007 = vld [vmem:[#allocation2 + $0x20] sm:$0xff]
          %v1008 = vld [vmem:[#allocation2 + $0x28] sm:$0xff]
          %v1009 = vld [vmem:[#allocation2 + $0x30] sm:$0xff]
          %v1010 = vld [vmem:[#allocation2 + $0x38] sm:$0xff]
          %v1011 = vld [vmem:[#allocation2 + $0x40] sm:$0xff]
          %v1012 = vld [vmem:[#allocation2 + $0x48] sm:$0xff]
          %v1013 = vld [vmem:[#allocation2 + $0x50] sm:$0xff]
          %v1014 = vld [vmem:[#allocation2 + $0x58] sm:$0xff]
          %v1015 = vld [vmem:[#allocation2 + $0x60] sm:$0xff]
          %v1016 = vld [vmem:[#allocation2 + $0x68] sm:$0xff]
          %v1017 = vld [vmem:[#allocation2 + $0x70] sm:$0xff]
          %v1018 = vld [vmem:[#allocation2 + $0x78] sm:$0xff]
          %v1019 = vadd.f32 %v1003, %v1004
          %v1020 = vadd.f32 %v1019, %v1005
          %v1021 = vadd.f32 %v1020, %v1006
          %v1022 = vadd.f32 %v1021, %v1007
          %v1023 = vadd.f32 %v1022, %v1008
          %v1024 = vadd.f32 %v1023, %v1009
          %v1025 = vadd.f32 %v1024, %v1010
          %v1026 = vadd.f32 %v1025, %v1011
          %v1027 = vadd.f32 %v1026, %v1012
          %v1028 = vadd.f32 %v1027, %v1013
          %v1029 = vadd.f32 %v1028, %v1014
          %v1030 = vadd.f32 %v1029, %v1015
          %v1031 = vadd.f32 %v1030, %v1016
          %v1032 = vadd.f32 %v1031, %v1017
          %v1033 = vadd.f32 %v1032, %v1018
          %v1034 = vrot.slane %v1033, 4
          %v1035 = vadd.f32 %v1033, %v1034
          %v1036 = vrot.slane %v1035, 2
          %v1037 = vadd.f32 %v1035, %v1036
          %v1038 = vrot.slane %v1037, 1
          %v1039 = vadd.f32 %v1037, %v1038
          %v1040 = vmul.f32 %v1039, 0.0078125
          %v1041 = vmul.f32 %v1003, %v1003
          %v1042 = vmul.f32 %v1004, %v1004
          %v1043 = vmul.f32 %v1005, %v1005
          %v1044 = vmul.f32 %v1006, %v1006
          %v1045 = vmul.f32 %v1007, %v1007
          %v1046 = vmul.f32 %v1008, %v1008
          %v1047 = vmul.f32 %v1009, %v1009
          %v1048 = vmul.f32 %v1010, %v1010
          %v1049 = vmul.f32 %v1011, %v1011
          %v1050 = vmul.f32 %v1012, %v1012
          %v1051 = vmul.f32 %v1013, %v1013
          %v1052 = vmul.f32 %v1014, %v1014
          %v1053 = vmul.f32 %v1015, %v1015
          %v1054 = vmul.f32 %v1016, %v1016
          %v1055 = vmul.f32 %v1017, %v1017
          %v1056 = vmul.f32 %v1018, %v1018
          %v1057 = vadd.f32 %v1041, %v1042
          %v1058 = vadd.f32 %v1057, %v1043
          %v1059 = vadd.f32 %v1058, %v1044
          %v1060 = vadd.f32 %v1059, %v1045
          %v1061 = vadd.f32 %v1060, %v1046
          %v1062 = vadd.f32 %v1061, %v1047
          %v1063 = vadd.f32 %v1062, %v1048
          %v1064 = vadd.f32 %v1063, %v1049
          %v1065 = vadd.f32 %v1064, %v1050
          %v1066 = vadd.f32 %v1065, %v1051
          %v1067 = vadd.f32 %v1066, %v1052
          %v1068 = vadd.f32 %v1067, %v1053
          %v1069 = vadd.f32 %v1068, %v1054
          %v1070 = vadd.f32 %v1069, %v1055
          %v1071 = vadd.f32 %v1070, %v1056
          %v1072 = vrot.slane %v1071, 4
          %v1073 = vadd.f32 %v1071, %v1072
          %v1074 = vrot.slane %v1073, 2
          %v1075 = vadd.f32 %v1073, %v1074
          %v1076 = vrot.slane %v1075, 1
          %v1077 = vadd.f32 %v1075, %v1076
          %v1078 = vmul.f32 %v1077, 0.0078125
          %v1079 = vmul.f32 %v1040, %v1040
          %v1080 = vsub.f32 %v1078, %v1079
          %v1081 = vmax.f32 %v1080, 0.0
          %v1082 = vld [vmem:[%s2] sm:$0x1]
          %v1083 = vadd.f32 %v1081, 1e-05
          %v1084 = vrsqrt.pop %v1083
          %v1085 = vmul.f32 %v1082, %v1084
          %v1086 = vld [vmem:[%s3] sm:$0x1]
          %v1087 = vmul.f32 %v1040, %v1085
          %v1088 = vsub.f32 %v1086, %v1087
          %v1090 = vlaneseq
          %v1091 = vshrl.u32 %v1090, 7
          %v1092 = vsub.s32 0, %v1091
          %v1093 = vrot.slane %v1085, %v1092
          %v1095 = vmul.f32 %v1003, %v1093
          %v1096 = vmul.f32 %v1004, %v1093
          %v1097 = vmul.f32 %v1005, %v1093
          %v1098 = vmul.f32 %v1006, %v1093
          %v1099 = vmul.f32 %v1007, %v1093
          %v1100 = vmul.f32 %v1008, %v1093
          %v1101 = vmul.f32 %v1009, %v1093
          %v1102 = vmul.f32 %v1010, %v1093
          %v1103 = vmul.f32 %v1011, %v1093
          %v1104 = vmul.f32 %v1012, %v1093
          %v1105 = vmul.f32 %v1013, %v1093
          %v1106 = vmul.f32 %v1014, %v1093
          %v1107 = vmul.f32 %v1015, %v1093
          %v1108 = vmul.f32 %v1016, %v1093
          %v1109 = vmul.f32 %v1017, %v1093
          %v1110 = vmul.f32 %v1018, %v1093
          %v1112 = vlaneseq
          %v1113 = vshrl.u32 %v1112, 7
          %v1114 = vsub.s32 0, %v1113
          %v1115 = vrot.slane %v1088, %v1114
          %v1117 = vadd.f32 %v1095, %v1115
          %v1118 = vadd.f32 %v1096, %v1115
          %v1119 = vadd.f32 %v1097, %v1115
          %v1120 = vadd.f32 %v1098, %v1115
          %v1121 = vadd.f32 %v1099, %v1115
          %v1122 = vadd.f32 %v1100, %v1115
          %v1123 = vadd.f32 %v1101, %v1115
          %v1124 = vadd.f32 %v1102, %v1115
          %v1125 = vadd.f32 %v1103, %v1115
          %v1126 = vadd.f32 %v1104, %v1115
          %v1127 = vadd.f32 %v1105, %v1115
          %v1128 = vadd.f32 %v1106, %v1115
          %v1129 = vadd.f32 %v1107, %v1115
          %v1130 = vadd.f32 %v1108, %v1115
          %v1131 = vadd.f32 %v1109, %v1115
          %v1132 = vadd.f32 %v1110, %v1115
          %vm1133 = vcmp.ge.f32.partialorder %v1117, 0.0
          %vm1134 = vcmp.ge.f32.partialorder %v1118, 0.0
          %vm1135 = vcmp.ge.f32.partialorder %v1119, 0.0
          %vm1136 = vcmp.ge.f32.partialorder %v1120, 0.0
          %vm1137 = vcmp.ge.f32.partialorder %v1121, 0.0
          %vm1138 = vcmp.ge.f32.partialorder %v1122, 0.0
          %vm1139 = vcmp.ge.f32.partialorder %v1123, 0.0
          %vm1140 = vcmp.ge.f32.partialorder %v1124, 0.0
          %vm1141 = vcmp.ge.f32.partialorder %v1125, 0.0
          %vm1142 = vcmp.ge.f32.partialorder %v1126, 0.0
          %vm1143 = vcmp.ge.f32.partialorder %v1127, 0.0
          %vm1144 = vcmp.ge.f32.partialorder %v1128, 0.0
          %vm1145 = vcmp.ge.f32.partialorder %v1129, 0.0
          %vm1146 = vcmp.ge.f32.partialorder %v1130, 0.0
          %vm1147 = vcmp.ge.f32.partialorder %v1131, 0.0
          %vm1148 = vcmp.ge.f32.partialorder %v1132, 0.0
          %v1149 = vmul.f32 %v1117, 0.2
          %v1150 = vmul.f32 %v1118, 0.2
          %v1151 = vmul.f32 %v1119, 0.2
          %v1152 = vmul.f32 %v1120, 0.2
          %v1153 = vmul.f32 %v1121, 0.2
          %v1154 = vmul.f32 %v1122, 0.2
          %v1155 = vmul.f32 %v1123, 0.2
          %v1156 = vmul.f32 %v1124, 0.2
          %v1157 = vmul.f32 %v1125, 0.2
          %v1158 = vmul.f32 %v1126, 0.2
          %v1159 = vmul.f32 %v1127, 0.2
          %v1160 = vmul.f32 %v1128, 0.2
          %v1161 = vmul.f32 %v1129, 0.2
          %v1162 = vmul.f32 %v1130, 0.2
          %v1163 = vmul.f32 %v1131, 0.2
          %v1164 = vmul.f32 %v1132, 0.2
          %v1165 = vsel %vm1133, %v1117, %v1149
          %v1166 = vsel %vm1134, %v1118, %v1150
          %v1167 = vsel %vm1135, %v1119, %v1151
          %v1168 = vsel %vm1136, %v1120, %v1152
          %v1169 = vsel %vm1137, %v1121, %v1153
          %v1170 = vsel %vm1138, %v1122, %v1154
          %v1171 = vsel %vm1139, %v1123, %v1155
          %v1172 = vsel %vm1140, %v1124, %v1156
          %v1173 = vsel %vm1141, %v1125, %v1157
          %v1174 = vsel %vm1142, %v1126, %v1158
          %v1175 = vsel %vm1143, %v1127, %v1159
          %v1176 = vsel %vm1144, %v1128, %v1160
          %v1177 = vsel %vm1145, %v1129, %v1161
          %v1178 = vsel %vm1146, %v1130, %v1162
          %v1179 = vsel %vm1147, %v1131, %v1163
          %v1180 = vsel %vm1148, %v1132, %v1164
          %v1181 = vpack.c.bf16 %v1166, %v1165
          %v1182 = vpack.c.bf16 %v1168, %v1167
          %v1183 = vpack.c.bf16 %v1170, %v1169
          %v1184 = vpack.c.bf16 %v1172, %v1171
          %v1185 = vpack.c.bf16 %v1174, %v1173
          %v1186 = vpack.c.bf16 %v1176, %v1175
          %v1187 = vpack.c.bf16 %v1178, %v1177
          %v1188 = vpack.c.bf16 %v1180, %v1179
          %v1197 = vunpack.c.l.b16 %v1181
          %v1198 = vunpack.c.h.b16 %v1181
          %v1199 = vunpack.c.l.b16 %v1182
          %v1200 = vunpack.c.h.b16 %v1182
          %v1201 = vunpack.c.l.b16 %v1183
          %v1202 = vunpack.c.h.b16 %v1183
          %v1203 = vunpack.c.l.b16 %v1184
          %v1204 = vunpack.c.h.b16 %v1184
          %v1205 = vunpack.c.l.b16 %v1185
          %v1206 = vunpack.c.h.b16 %v1185
          %v1207 = vunpack.c.l.b16 %v1186
          %v1208 = vunpack.c.h.b16 %v1186
          %v1209 = vunpack.c.l.b16 %v1187
          %v1210 = vunpack.c.h.b16 %v1187
          %v1211 = vunpack.c.l.b16 %v1188
          %v1212 = vunpack.c.h.b16 %v1188
          %v1213 = vpack.c.b16 %v1197, %v1197
          %v1214 = vpack.c.b16 %v1198, %v1198
          %v1215 = vpack.c.b16 %v1199, %v1199
          %v1216 = vpack.c.b16 %v1200, %v1200
          %v1217 = vpack.c.b16 %v1201, %v1201
          %v1218 = vpack.c.b16 %v1202, %v1202
          %v1219 = vpack.c.b16 %v1203, %v1203
          %v1220 = vpack.c.b16 %v1204, %v1204
          %v1221 = vpack.c.b16 %v1205, %v1205
          %v1222 = vpack.c.b16 %v1206, %v1206
          %v1223 = vpack.c.b16 %v1207, %v1207
          %v1224 = vpack.c.b16 %v1208, %v1208
          %v1225 = vpack.c.b16 %v1209, %v1209
          %v1226 = vpack.c.b16 %v1210, %v1210
          %v1227 = vpack.c.b16 %v1211, %v1211
          %v1228 = vpack.c.b16 %v1212, %v1212
          %1245 = vst [vmem:[%s4] sm:$0xf] %v1213
          %1246 = vst [vmem:[%s4 + $0x4] sm:$0xf] %v1214
          %1247 = vst [vmem:[%s4 + $0x8] sm:$0xf] %v1215
          %1248 = vst [vmem:[%s4 + $0xc] sm:$0xf] %v1216
          %1249 = vst [vmem:[%s4 + $0x10] sm:$0xf] %v1217
          %1250 = vst [vmem:[%s4 + $0x14] sm:$0xf] %v1218
          %1251 = vst [vmem:[%s4 + $0x18] sm:$0xf] %v1219
          %1252 = vst [vmem:[%s4 + $0x1c] sm:$0xf] %v1220
          %1253 = vst [vmem:[%s4 + $0x20] sm:$0xf] %v1221
          %1254 = vst [vmem:[%s4 + $0x24] sm:$0xf] %v1222
          %1255 = vst [vmem:[%s4 + $0x28] sm:$0xf] %v1223
          %1256 = vst [vmem:[%s4 + $0x2c] sm:$0xf] %v1224
          %1257 = vst [vmem:[%s4 + $0x30] sm:$0xf] %v1225
          %1258 = vst [vmem:[%s4 + $0x34] sm:$0xf] %v1226
          %1259 = vst [vmem:[%s4 + $0x38] sm:$0xf] %v1227
          %1260 = vst [vmem:[%s4 + $0x3c] sm:$0xf] %v1228
        $region67: #{discriminator_forward.6} parent=54 // pred_fallthru
          _
        // Predicated region
        $region68: #{discriminator_forward.6} parent=54 // pred_check
          %p1261 = pneg %p122
        $region69: #{discriminator_forward.6} parent=54 // pred_check_branch
          %1263 = sbr.rel (%p1261) target = $region71
        $region70: #{discriminator_forward.6} parent=54 // pred_region
          _
        $region71: #{discriminator_forward.6} parent=54 // pred_fallthru
          _
        // Predicated region
        $region72: #{discriminator_forward.6} parent=54 // pred_check
          %p1264 = pneg %p122
        $region73: #{discriminator_forward.6} parent=54 // pred_check_branch
          %1266 = sbr.rel (%p1264) target = $region75
        $region74: #{discriminator_forward.6} parent=54 // pred_region
          _
        $region75: #{discriminator_forward.6} parent=54 // pred_fallthru
          _
      $region55: #{discriminator_forward.6} parent=5 // pred_fallthru
        _
      %p1267 = scmp.le.s32.totalorder 2, %s10
      // Predicated region
      $region76: #{discriminator_forward.6} parent=5 // pred_check
        %p1268 = pneg %p1267
      $region77: #{discriminator_forward.6} parent=5 // pred_check_branch
        %1270 = sbr.rel (%p1268) target = $region79
      $region78: #{discriminator_forward.6} parent=5 // pred_region
        %s1271 = ssub.s32 %s10, 2
      $region79: #{discriminator_forward.6} parent=5 // pred_fallthru
        _
    $region6: #{discriminator_forward.6} parent=1 // loop_footer
      %s14 = sadd.s32 1, %s10
    $region7: #{discriminator_forward.6} parent=1 // loop_footer_branch
      %9 = sbr.rel target = $region3
    $region8: #{discriminator_forward.6} parent=1 // loop_exit
      _

// kernel: discriminator_forward.7
$region0: #{discriminator_forward.7}
  #allocation0 [shape = 'u32[]', space=smem, size = 0x4, offset = 0x4, fixed_abs, tag = 'smem constant byte address 0x4 - core index']
  #allocation1 [shape = 'u32[144,128]{1,0:T(1,128)}', space=vmem, size = 0x12000, scoped, tag = 'internal scratch']
  #allocation2 [shape = 'f32[32,256]{1,0:T(8,128)}', space=vmem, size = 0x8000, scoped, tag = 'scratch operand']
  %s0 = inlined_call_operand.vmem [shape: bf16[32,2048], index: 0, kind: input, shape index: {}]
  %s1 = inlined_call_operand.vmem [shape: bf16[2048,256], index: 1, kind: input, shape index: {}]
  %s2 = inlined_call_operand.vmem [shape: f32[1,256], index: 2, kind: input, shape index: {}]
  %s3 = inlined_call_operand.vmem [shape: f32[1,256], index: 3, kind: input, shape index: {}]
  %s4 = inlined_call_operand.vmem [shape: bf16[32,256], index: 4, kind: output, shape index: {}]
  %s5 = sld [smem:[#allocation0]]
  $region80: #{discriminator_forward.7} parent=0
    _
  %s7 = ssub.s32 1, %s5
  %s8 = scalar_select 0, %s7, %s5
  $region1: #{discriminator_forward.7} parent=0
    #allocation3 [shape = 'u8[65536]{0}', space=vmem, size = 0x10000, scoped, tag = 'input window, operand 0']
    loop: start=0, step=1, limit=6
    $region2: #{discriminator_forward.7} parent=1 // loop_pre_header
      _
    $region3: #{discriminator_forward.7} parent=1 // loop_header
      %s10 = sphi 0, %s14
      %p11 = scmp.ge.s32.totalorder %s10, 6
      %s20 = sphi 0, %s22
      %s23 = sphi 0, %s20
      %s24 = sphi 0, %s23
      %s40 = sphi 0, %s24
      %s46 = sphi 0, %s48
      %s49 = sphi 0, %s46
      %s50 = sphi 0, %s49
      %s66 = sphi 0, %s50
      %s70 = sphi 0, %s70
      %s72 = sphi 0, %s70
      %s73 = sphi 0, %s72
      %s87 = sphi 0, %s73
      %s91 = sphi 0, %s91
      %s93 = sphi 0, %s91
      %s94 = sphi 0, %s93
      %s108 = sphi 0, %s94
      %s112 = sphi 0, %s112
      %s114 = sphi 0, %s112
      %s115 = sphi 0, %s114
      %s129 = sphi 0, %s115
    $region4: #{discriminator_forward.7} parent=1 // loop_header_branch
      %13 = sbr.rel (%p11) target = $region8
    $region5: #{discriminator_forward.7} parent=1 // loop_body
      %s15 = ssub.s32 %s10, 1
      %s16 = ssub.s32 %s10, 2
      %s17 = sadd.s32 %s10, 1
      %s18 = ssub.s32 %s10, %s17
      %p19 = scmp.eq.s32.totalorder %s18, 0
      %s21 = sadd.s32 %s20, 1
      %s22 = scalar_select %p19, %s20, %s21
      %p25 = pneg %p19
      %p26 = scmp.eq.s32.totalorder %s10, 3
      %p27 = por %p25, %p26
      %p28 = scmp.ne.s32.totalorder %s20, %s23
      %p29 = scmp.eq.s32.totalorder %s10, 0
      %p30 = por %p28, %p29
      %p31 = scmp.ne.s32.totalorder %s20, %s23
      %p32 = scmp.eq.s32.totalorder %s15, 3
      %p33 = por %p31, %p32
      %p34 = scmp.ne.s32.totalorder %s23, %s24
      %p35 = scmp.eq.s32.totalorder %s15, 0
      %p36 = por %p34, %p35
      %p37 = scmp.ne.s32.totalorder %s23, %s24
      %p38 = scmp.eq.s32.totalorder %s16, 3
      %p39 = por %p37, %p38
      %p41 = scmp.ne.s32.totalorder %s24, %s40
      %p42 = scmp.eq.s32.totalorder %s16, 0
      %p43 = por %p41, %p42
      %s44 = ssub.s32 %s10, %s17
      %p45 = scmp.eq.s32.totalorder %s44, 0
      %s47 = sadd.s32 %s46, 1
      %s48 = scalar_select %p45, %s46, %s47
      %p51 = pneg %p45
      %p52 = scmp.eq.s32.totalorder %s10, 3
      %p53 = por %p51, %p52
      %p54 = scmp.ne.s32.totalorder %s46, %s49
      %p55 = scmp.eq.s32.totalorder %s10, 0
      %p56 = por %p54, %p55
      %p57 = scmp.ne.s32.totalorder %s46, %s49
      %p58 = scmp.eq.s32.totalorder %s15, 3
      %p59 = por %p57, %p58
      %p60 = scmp.ne.s32.totalorder %s49, %s50
      %p61 = scmp.eq.s32.totalorder %s15, 0
      %p62 = por %p60, %p61
      %p63 = scmp.ne.s32.totalorder %s49, %s50
      %p64 = scmp.eq.s32.totalorder %s16, 3
      %p65 = por %p63, %p64
      %p67 = scmp.ne.s32.totalorder %s50, %s66
      %p68 = scmp.eq.s32.totalorder %s16, 0
      %p69 = por %p67, %p68
      %s71 = sadd.s32 %s70, 1
      %p74 = scmp.eq.s32.totalorder %s10, 3
      %p75 = scmp.ne.s32.totalorder %s70, %s72
      %p76 = scmp.eq.s32.totalorder %s10, 0
      %p77 = por %p75, %p76
      %p78 = scmp.ne.s32.totalorder %s70, %s72
      %p79 = scmp.eq.s32.totalorder %s15, 3
      %p80 = por %p78, %p79
      %p81 = scmp.ne.s32.totalorder %s72, %s73
      %p82 = scmp.eq.s32.totalorder %s15, 0
      %p83 = por %p81, %p82
      %p84 = scmp.ne.s32.totalorder %s72, %s73
      %p85 = scmp.eq.s32.totalorder %s16, 3
      %p86 = por %p84, %p85
      %p88 = scmp.ne.s32.totalorder %s73, %s87
      %p89 = scmp.eq.s32.totalorder %s16, 0
      %p90 = por %p88, %p89
      %s92 = sadd.s32 %s91, 1
      %p95 = scmp.eq.s32.totalorder %s10, 3
      %p96 = scmp.ne.s32.totalorder %s91, %s93
      %p97 = scmp.eq.s32.totalorder %s10, 0
      %p98 = por %p96, %p97
      %p99 = scmp.ne.s32.totalorder %s91, %s93
      %p100 = scmp.eq.s32.totalorder %s15, 3
      %p101 = por %p99, %p100
      %p102 = scmp.ne.s32.totalorder %s93, %s94
      %p103 = scmp.eq.s32.totalorder %s15, 0
      %p104 = por %p102, %p103
      %p105 = scmp.ne.s32.totalorder %s93, %s94
      %p106 = scmp.eq.s32.totalorder %s16, 3
      %p107 = por %p105, %p106
      %p109 = scmp.ne.s32.totalorder %s94, %s108
      %p110 = scmp.eq.s32.totalorder %s16, 0
      %p111 = por %p109, %p110
      %s113 = sadd.s32 %s112, 1
      %p116 = scmp.eq.s32.totalorder %s10, 3
      %p117 = scmp.ne.s32.totalorder %s112, %s114
      %p118 = scmp.eq.s32.totalorder %s10, 0
      %p119 = por %p117, %p118
      %p120 = scmp.ne.s32.totalorder %s112, %s114
      %p121 = scmp.eq.s32.totalorder %s15, 3
      %p122 = por %p120, %p121
      %p123 = scmp.ne.s32.totalorder %s114, %s115
      %p124 = scmp.eq.s32.totalorder %s15, 0
      %p125 = por %p123, %p124
      %p126 = scmp.ne.s32.totalorder %s114, %s115
      %p127 = scmp.eq.s32.totalorder %s16, 3
      %p128 = por %p126, %p127
      %p130 = scmp.ne.s32.totalorder %s115, %s129
      %p131 = scmp.eq.s32.totalorder %s16, 0
      %p132 = por %p130, %p131
      %p133 = scmp.le.s32.totalorder 1, %s10
      %p134 = scmp.lt.s32.totalorder %s10, 5
      %p135 = pnand %p133, %p134
      %p136 = pneg %p135
      // Predicated region
      $region9: #{discriminator_forward.7} parent=5 // pred_check
        _
      $region10: #{discriminator_forward.7} parent=5 // pred_check_branch
        %138 = sbr.rel (%p135) target = $region12
      $region11: #{discriminator_forward.7} parent=5 // pred_region
        %s139 = ssub.s32 %s10, 1
        // Predicated region
        $region13: #{discriminator_forward.7} parent=11 // pred_check
          %p140 = pneg %p83
        $region14: #{discriminator_forward.7} parent=11 // pred_check_branch
          %142 = sbr.rel (%p140) target = $region16
        $region15: #{discriminator_forward.7} parent=11 // pred_region
          _
        $region16: #{discriminator_forward.7} parent=11 // pred_fallthru
          _
        // Predicated region
        $region17: #{discriminator_forward.7} parent=11 // pred_check
          %p143 = pneg %p104
        $region18: #{discriminator_forward.7} parent=11 // pred_check_branch
          %145 = sbr.rel (%p143) target = $region20
        $region19: #{discriminator_forward.7} parent=11 // pred_region
          _
        $region20: #{discriminator_forward.7} parent=11 // pred_fallthru
          _
      $region12: #{discriminator_forward.7} parent=5 // pred_fallthru
        _
      %p146 = scmp.lt.s32.totalorder %s10, 4
      // Predicated region
      $region21: #{discriminator_forward.7} parent=5 // pred_check
        %p147 = pneg %p146
      $region22: #{discriminator_forward.7} parent=5 // pred_check_branch
        %149 = sbr.rel (%p147) target = $region24
      $region23: #{discriminator_forward.7} parent=5 // pred_region
        // Predicated region
        $region25: #{discriminator_forward.7} parent=23 // pred_check
          %p150 = pneg %p30
        $region26: #{discriminator_forward.7} parent=23 // pred_check_branch
          %152 = sbr.rel (%p150) target = $region28
        $region27: #{discriminator_forward.7} parent=23 // pred_region
          %s153 = sand.u32 %s20, 1
          %s154 = sand.u32 %s20, 1
          %s155 = smul.addr %s154, 64
          %s156 = scalar_lea.vmem [#allocation3], %s155
          %s157 = smul.u32 4, %s10
          %s158 = smul.addr %s157, 4
          %s159 = scalar_lea.vmem %s0, %s158
          // Predicated region
          $region29: #{discriminator_forward.7} parent=27 // pred_check
            _
          $region30: #{discriminator_forward.7} parent=27 // pred_check_branch
            %161 = sbr.rel (0) target = $region32
          $region31: #{discriminator_forward.7} parent=27 // pred_region
            // Predicated region
            $region33: #{discriminator_forward.7} parent=31 // pred_check
              _
            $region34: #{discriminator_forward.7} parent=31 // pred_check_branch
              %163 = sbr.rel (0) target = $region36
            $region35: #{discriminator_forward.7} parent=31 // pred_region
              loop: start=0, step=1, limit=1
              $region37: #{discriminator_forward.7} parent=35 // loop_pre_header
                _
              $region38: #{discriminator_forward.7} parent=35 // loop_header
                %s165 = sphi 0, %s169
                %p166 = scmp.ge.s32.totalorder %s165, 1
                %s170 = sphi %s159, %s159
                %s171 = sphi %s156, %s156
              $region39: #{discriminator_forward.7} parent=35 // loop_header_branch
                %168 = sbr.rel (%p166) target = $region43
              $region40: #{discriminator_forward.7} parent=35 // loop_body
                %v172 = vld [vmem:[%s170] sm:$0xff]
                %173 = vst [vmem:[%s171] sm:$0xff] %v172
                %v174 = vld [vmem:[%s170 + $0x8] sm:$0xff]
                %175 = vst [vmem:[%s171 + $0x8] sm:$0xff] %v174
                %v176 = vld [vmem:[%s170 + $0x40] sm:$0xff]
                %177 = vst [vmem:[%s171 + $0x10] sm:$0xff] %v176
                %v178 = vld [vmem:[%s170 + $0x48] sm:$0xff]
                %179 = vst [vmem:[%s171 + $0x18] sm:$0xff] %v178
                %v180 = vld [vmem:[%s170 + $0x80] sm:$0xff]
                %181 = vst [vmem:[%s171 + $0x20] sm:$0xff] %v180
                %v182 = vld [vmem:[%s170 + $0x88] sm:$0xff]
                %183 = vst [vmem:[%s171 + $0x28] sm:$0xff] %v182
                %v184 = vld [vmem:[%s170 + $0xc0] sm:$0xff]
                %185 = vst [vmem:[%s171 + $0x30] sm:$0xff] %v184
                %v186 = vld [vmem:[%s170 + $0xc8] sm:$0xff]
                %187 = vst [vmem:[%s171 + $0x38] sm:$0xff] %v186
              $region41: #{discriminator_forward.7} parent=35 // loop_footer
                %s169 = sadd.s32 1, %s165
              $region42: #{discriminator_forward.7} parent=35 // loop_footer_branch
                %164 = sbr.rel target = $region38
              $region43: #{discriminator_forward.7} parent=35 // loop_exit
                _
            $region36: #{discriminator_forward.7} parent=31 // pred_fallthru
              _
            // Predicated region
            $region44: #{discriminator_forward.7} parent=31 // pred_check
              _
            $region45: #{discriminator_forward.7} parent=31 // pred_check_branch
              %189 = sbr.rel target = $region47
            $region46: #{discriminator_forward.7} parent=31 // pred_region
              _
            $region47: #{discriminator_forward.7} parent=31 // pred_fallthru
              _
          $region32: #{discriminator_forward.7} parent=27 // pred_fallthru
            _
          %190 = vnop
        $region28: #{discriminator_forward.7} parent=23 // pred_fallthru
          _
        // Predicated region
        $region48: #{discriminator_forward.7} parent=23 // pred_check
          %p191 = pneg %p56
        $region49: #{discriminator_forward.7} parent=23 // pred_check_branch
          %193 = sbr.rel (%p191) target = $region51
        $region50: #{discriminator_forward.7} parent=23 // pred_region
          %s194 = smul.u32 64, %s10
          %p195 = scmp.lt.s32.totalorder %s194, 255
          %s196 = scalar_select %p195, %s194, 255
          %s197 = smul.addr %s196, 2
          %s198 = smul.addr %s197, 4
          %s199 = scalar_lea.vmem %s1, %s198
          %s200 = smul.u32 64, %s10
        $region51: #{discriminator_forward.7} parent=23 // pred_fallthru
          _
      $region24: #{discriminator_forward.7} parent=5 // pred_fallthru
        _
      %p201 = scmp.le.s32.totalorder 1, %s10
      %p202 = scmp.lt.s32.totalorder %s10, 5
      %p203 = pnand %p201, %p202
      %p204 = pneg %p203
      // Predicated region
      $region52: #{discriminator_forward.7} parent=5 // pred_check
        _
      $region53: #{discriminator_forward.7} parent=5 // pred_check_branch
        %206 = sbr.rel (%p203) target = $region55
      $region54: #{discriminator_forward.7} parent=5 // pred_region
        %s207 = ssub.s32 %s10, 1
        %s208 = sand.u32 %s23, 1
        %s209 = sand.u32 %s23, 1
        %s210 = smul.addr %s209, 64
        %s211 = scalar_lea.vmem [#allocation3], %s210
        // Predicated region
        $region56: #{discriminator_forward.7} parent=54 // pred_check
          %p212 = pneg %p36
        $region57: #{discriminator_forward.7} parent=54 // pred_check_branch
          %214 = sbr.rel (%p212) target = $region59
        $region58: #{discriminator_forward.7} parent=54 // pred_region
          _
        $region59: #{discriminator_forward.7} parent=54 // pred_fallthru
          _
        %s215 = sand.u32 %s23, 1
        %s216 = sand.u32 %s23, 1
        %s217 = smul.addr %s216, 64
        %s218 = scalar_lea.vmem [#allocation3], %s217
        %p219 = pneg %p36
        %p220 = pneg %p33
        %s221 = smul.u32 64, %s15
        %p222 = scmp.lt.s32.totalorder %s221, 255
        %s223 = scalar_select %p222, %s221, 255
        %s224 = smul.addr %s223, 2
        %s225 = smul.addr %s224, 4
        %s226 = scalar_lea.vmem %s1, %s225
        %p227 = pneg %p62
        %p228 = pneg %p59
        %p229 = pneg %p83
        %p230 = pneg %p80
        %p231 = pneg %p104
        %p232 = pneg %p101
        %p233 = pneg %p125
        %p234 = pneg %p122
        %s235 = smul.u32 4, %s15
        %s236 = smul.u32 64, %s15
        %p237 = scmp.lt.s32.totalorder %s236, 255
        %s238 = scalar_select %p237, %s236, 255
        %s239 = smul.addr %s238, 2
        %s240 = smul.addr %s239, 4
        %s241 = scalar_lea.vmem %s1, %s240
        %s242 = smul.u32 64, %s15
        %p243 = scmp.eq.s32.totalorder %s15, 0
        // Predicated region
        $region60: #{discriminator_forward.7} parent=54 // pred_check
          %p244 = pneg %p243
        $region61: #{discriminator_forward.7} parent=54 // pred_check_branch
          %246 = sbr.rel (%p244) target = $region63
        $region62: #{discriminator_forward.7} parent=54 // pred_region
          %247 = vst [vmem:[#allocation2] sm:$0xff] 0.0
          %248 = vst [vmem:[#allocation2 + $0x8] sm:$0xff] 0.0
          %249 = vst [vmem:[#allocation2 + $0x10] sm:$0xff] 0.0
          %250 = vst [vmem:[#allocation2 + $0x18] sm:$0xff] 0.0
          %251 = vst [vmem:[#allocation2 + $0x20] sm:$0xff] 0.0
          %252 = vst [vmem:[#allocation2 + $0x28] sm:$0xff] 0.0
          %253 = vst [vmem:[#allocation2 + $0x30] sm:$0xff] 0.0
          %254 = vst [vmem:[#allocation2 + $0x38] sm:$0xff] 0.0
        $region63: #{discriminator_forward.7} parent=54 // pred_fallthru
          _
        %v255 = vld [vmem:[#allocation2] sm:$0xff]
        %v256 = vld [vmem:[#allocation2 + $0x8] sm:$0xff]
        %v257 = vld [vmem:[#allocation2 + $0x10] sm:$0xff]
        %v258 = vld [vmem:[#allocation2 + $0x18] sm:$0xff]
        %v259 = vld [vmem:[#allocation2 + $0x20] sm:$0xff]
        %v260 = vld [vmem:[#allocation2 + $0x28] sm:$0xff]
        %v261 = vld [vmem:[#allocation2 + $0x30] sm:$0xff]
        %v262 = vld [vmem:[#allocation2 + $0x38] sm:$0xff]
        %v263 = vld [vmem:[%s211] sm:$0xff]
        %v264 = vld [vmem:[%s211 + $0x8] sm:$0xff]
        %v265 = vld [vmem:[%s211 + $0x10] sm:$0xff]
        %v266 = vld [vmem:[%s211 + $0x18] sm:$0xff]
        %v267 = vld [vmem:[%s211 + $0x20] sm:$0xff]
        %v268 = vld [vmem:[%s211 + $0x28] sm:$0xff]
        %v269 = vld [vmem:[%s211 + $0x30] sm:$0xff]
        %v270 = vld [vmem:[%s211 + $0x38] sm:$0xff]
        %v271 = vld [vmem:[%s241] sm:$0xff]
        %v272 = vld [vmem:[%s241 + $0x8] sm:$0xff]
        %v273 = vld [vmem:[%s241 + $0x10] sm:$0xff]
        %v274 = vld [vmem:[%s241 + $0x18] sm:$0xff]
        %v275 = vld [vmem:[%s241 + $0x20] sm:$0xff]
        %v276 = vld [vmem:[%s241 + $0x28] sm:$0xff]
        %v277 = vld [vmem:[%s241 + $0x30] sm:$0xff]
        %v278 = vld [vmem:[%s241 + $0x38] sm:$0xff]
        %v279 = vld [vmem:[%s241 + $0x40] sm:$0xff]
        %v280 = vld [vmem:[%s241 + $0x48] sm:$0xff]
        %v281 = vld [vmem:[%s241 + $0x50] sm:$0xff]
        %v282 = vld [vmem:[%s241 + $0x58] sm:$0xff]
        %v283 = vld [vmem:[%s241 + $0x60] sm:$0xff]
        %v284 = vld [vmem:[%s241 + $0x68] sm:$0xff]
        %v285 = vld [vmem:[%s241 + $0x70] sm:$0xff]
        %v286 = vld [vmem:[%s241 + $0x78] sm:$0xff]
        %v287 = vld [vmem:[%s241 + $0x80] sm:$0xff]
        %v288 = vld [vmem:[%s241 + $0x88] sm:$0xff]
        %v289 = vld [vmem:[%s241 + $0x90] sm:$0xff]
        %v290 = vld [vmem:[%s241 + $0x98] sm:$0xff]
        %v291 = vld [vmem:[%s241 + $0xa0] sm:$0xff]
        %v292 = vld [vmem:[%s241 + $0xa8] sm:$0xff]
        %v293 = vld [vmem:[%s241 + $0xb0] sm:$0xff]
        %v294 = vld [vmem:[%s241 + $0xb8] sm:$0xff]
        %v295 = vld [vmem:[%s241 + $0xc0] sm:$0xff]
        %v296 = vld [vmem:[%s241 + $0xc8] sm:$0xff]
        %v297 = vld [vmem:[%s241 + $0xd0] sm:$0xff]
        %v298 = vld [vmem:[%s241 + $0xd8] sm:$0xff]
        %v299 = vld [vmem:[%s241 + $0xe0] sm:$0xff]
        %v300 = vld [vmem:[%s241 + $0xe8] sm:$0xff]
        %v301 = vld [vmem:[%s241 + $0xf0] sm:$0xff]
        %v302 = vld [vmem:[%s241 + $0xf8] sm:$0xff]
        %v303 = vld [vmem:[%s241 + $0x100] sm:$0xff]
        %v304 = vld [vmem:[%s241 + $0x108] sm:$0xff]
        %v305 = vld [vmem:[%s241 + $0x110] sm:$0xff]
        %v306 = vld [vmem:[%s241 + $0x118] sm:$0xff]
        %v307 = vld [vmem:[%s241 + $0x120] sm:$0xff]
        %v308 = vld [vmem:[%s241 + $0x128] sm:$0xff]
        %v309 = vld [vmem:[%s241 + $0x130] sm:$0xff]
        %v310 = vld [vmem:[%s241 + $0x138] sm:$0xff]
        %v311 = vld [vmem:[%s241 + $0x140] sm:$0xff]
        %v312 = vld [vmem:[%s241 + $0x148] sm:$0xff]
        %v313 = vld [vmem:[%s241 + $0x150] sm:$0xff]
        %v314 = vld [vmem:[%s241 + $0x158] sm:$0xff]
        %v315 = vld [vmem:[%s241 + $0x160] sm:$0xff]
        %v316 = vld [vmem:[%s241 + $0x168] sm:$0xff]
        %v317 = vld [vmem:[%s241 + $0x170] sm:$0xff]
        %v318 = vld [vmem:[%s241 + $0x178] sm:$0xff]
        %v319 = vld [vmem:[%s241 + $0x180] sm:$0xff]
        %v320 = vld [vmem:[%s241 + $0x188] sm:$0xff]
        %v321 = vld [vmem:[%s241 + $0x190] sm:$0xff]
        %v322 = vld [vmem:[%s241 + $0x198] sm:$0xff]
        %v323 = vld [vmem:[%s241 + $0x1a0] sm:$0xff]
        %v324 = vld [vmem:[%s241 + $0x1a8] sm:$0xff]
        %v325 = vld [vmem:[%s241 + $0x1b0] sm:$0xff]
        %v326 = vld [vmem:[%s241 + $0x1b8] sm:$0xff]
        %v327 = vld [vmem:[%s241 + $0x1c0] sm:$0xff]
        %v328 = vld [vmem:[%s241 + $0x1c8] sm:$0xff]
        %v329 = vld [vmem:[%s241 + $0x1d0] sm:$0xff]
        %v330 = vld [vmem:[%s241 + $0x1d8] sm:$0xff]
        %v331 = vld [vmem:[%s241 + $0x1e0] sm:$0xff]
        %v332 = vld [vmem:[%s241 + $0x1e8] sm:$0xff]
        %v333 = vld [vmem:[%s241 + $0x1f0] sm:$0xff]
        %v334 = vld [vmem:[%s241 + $0x1f8] sm:$0xff]
        %v343 = vunpack.c.l.b16 %v263
        %v344 = vunpack.c.h.b16 %v263
        %v345 = vunpack.c.l.b16 %v264
        %v346 = vunpack.c.h.b16 %v264
        %v347 = vunpack.c.l.b16 %v265
        %v348 = vunpack.c.h.b16 %v265
        %v349 = vunpack.c.l.b16 %v266
        %v350 = vunpack.c.h.b16 %v266
        %v351 = vunpack.c.l.b16 %v267
        %v352 = vunpack.c.h.b16 %v267
        %v353 = vunpack.c.l.b16 %v268
        %v354 = vunpack.c.h.b16 %v268
        %v355 = vunpack.c.l.b16 %v269
        %v356 = vunpack.c.h.b16 %v269
        %v357 = vunpack.c.l.b16 %v270
        %v358 = vunpack.c.h.b16 %v270
        %v359 = vpack.c.b16 %v347, %v343
        %v360 = vpack.c.b16 %v348, %v344
        %v361 = vpack.c.b16 %v349, %v345
        %v362 = vpack.c.b16 %v350, %v346
        %v363 = vpack.c.b16 %v355, %v351
        %v364 = vpack.c.b16 %v356, %v352
        %v365 = vpack.c.b16 %v357, %v353
        %v366 = vpack.c.b16 %v358, %v354
        %v439 = vunpack.c.l.b16 %v271
        %v440 = vunpack.c.h.b16 %v271
        %v441 = vunpack.c.l.b16 %v272
        %v442 = vunpack.c.h.b16 %v272
        %v443 = vunpack.c.l.b16 %v273
        %v444 = vunpack.c.h.b16 %v273
        %v445 = vunpack.c.l.b16 %v274
        %v446 = vunpack.c.h.b16 %v274
        %v447 = vunpack.c.l.b16 %v275
        %v448 = vunpack.c.h.b16 %v275
        %v449 = vunpack.c.l.b16 %v276
        %v450 = vunpack.c.h.b16 %v276
        %v451 = vunpack.c.l.b16 %v277
        %v452 = vunpack.c.h.b16 %v277
        %v453 = vunpack.c.l.b16 %v278
        %v454 = vunpack.c.h.b16 %v278
        %v455 = vunpack.c.l.b16 %v279
        %v456 = vunpack.c.h.b16 %v279
        %v457 = vunpack.c.l.b16 %v280
        %v458 = vunpack.c.h.b16 %v280
        %v459 = vunpack.c.l.b16 %v281
        %v460 = vunpack.c.h.b16 %v281
        %v461 = vunpack.c.l.b16 %v282
        %v462 = vunpack.c.h.b16 %v282
        %v463 = vunpack.c.l.b16 %v283
        %v464 = vunpack.c.h.b16 %v283
        %v465 = vunpack.c.l.b16 %v284
        %v466 = vunpack.c.h.b16 %v284
        %v467 = vunpack.c.l.b16 %v285
        %v468 = vunpack.c.h.b16 %v285
        %v469 = vunpack.c.l.b16 %v286
        %v470 = vunpack.c.h.b16 %v286
        %v471 = vunpack.c.l.b16 %v287
        %v472 = vunpack.c.h.b16 %v287
        %v473 = vunpack.c.l.b16 %v288
        %v474 = vunpack.c.h.b16 %v288
        %v475 = vunpack.c.l.b16 %v289
        %v476 = vunpack.c.h.b16 %v289
        %v477 = vunpack.c.l.b16 %v290
        %v478 = vunpack.c.h.b16 %v290
        %v479 = vunpack.c.l.b16 %v291
        %v480 = vunpack.c.h.b16 %v291
        %v481 = vunpack.c.l.b16 %v292
        %v482 = vunpack.c.h.b16 %v292
        %v483 = vunpack.c.l.b16 %v293
        %v484 = vunpack.c.h.b16 %v293
        %v485 = vunpack.c.l.b16 %v294
        %v486 = vunpack.c.h.b16 %v294
        %v487 = vunpack.c.l.b16 %v295
        %v488 = vunpack.c.h.b16 %v295
        %v489 = vunpack.c.l.b16 %v296
        %v490 = vunpack.c.h.b16 %v296
        %v491 = vunpack.c.l.b16 %v297
        %v492 = vunpack.c.h.b16 %v297
        %v493 = vunpack.c.l.b16 %v298
        %v494 = vunpack.c.h.b16 %v298
        %v495 = vunpack.c.l.b16 %v299
        %v496 = vunpack.c.h.b16 %v299
        %v497 = vunpack.c.l.b16 %v300
        %v498 = vunpack.c.h.b16 %v300
        %v499 = vunpack.c.l.b16 %v301
        %v500 = vunpack.c.h.b16 %v301
        %v501 = vunpack.c.l.b16 %v302
        %v502 = vunpack.c.h.b16 %v302
        %v503 = vunpack.c.l.b16 %v303
        %v504 = vunpack.c.h.b16 %v303
        %v505 = vunpack.c.l.b16 %v304
        %v506 = vunpack.c.h.b16 %v304
        %v507 = vunpack.c.l.b16 %v305
        %v508 = vunpack.c.h.b16 %v305
        %v509 = vunpack.c.l.b16 %v306
        %v510 = vunpack.c.h.b16 %v306
        %v511 = vunpack.c.l.b16 %v307
        %v512 = vunpack.c.h.b16 %v307
        %v513 = vunpack.c.l.b16 %v308
        %v514 = vunpack.c.h.b16 %v308
        %v515 = vunpack.c.l.b16 %v309
        %v516 = vunpack.c.h.b16 %v309
        %v517 = vunpack.c.l.b16 %v310
        %v518 = vunpack.c.h.b16 %v310
        %v519 = vunpack.c.l.b16 %v311
        %v520 = vunpack.c.h.b16 %v311
        %v521 = vunpack.c.l.b16 %v312
        %v522 = vunpack.c.h.b16 %v312
        %v523 = vunpack.c.l.b16 %v313
        %v524 = vunpack.c.h.b16 %v313
        %v525 = vunpack.c.l.b16 %v314
        %v526 = vunpack.c.h.b16 %v314
        %v527 = vunpack.c.l.b16 %v315
        %v528 = vunpack.c.h.b16 %v315
        %v529 = vunpack.c.l.b16 %v316
        %v530 = vunpack.c.h.b16 %v316
        %v531 = vunpack.c.l.b16 %v317
        %v532 = vunpack.c.h.b16 %v317
        %v533 = vunpack.c.l.b16 %v318
        %v534 = vunpack.c.h.b16 %v318
        %v535 = vunpack.c.l.b16 %v319
        %v536 = vunpack.c.h.b16 %v319
        %v537 = vunpack.c.l.b16 %v320
        %v538 = vunpack.c.h.b16 %v320
        %v539 = vunpack.c.l.b16 %v321
        %v540 = vunpack.c.h.b16 %v321
        %v541 = vunpack.c.l.b16 %v322
        %v542 = vunpack.c.h.b16 %v322
        %v543 = vunpack.c.l.b16 %v323
        %v544 = vunpack.c.h.b16 %v323
        %v545 = vunpack.c.l.b16 %v324
        %v546 = vunpack.c.h.b16 %v324
        %v547 = vunpack.c.l.b16 %v325
        %v548 = vunpack.c.h.b16 %v325
        %v549 = vunpack.c.l.b16 %v326
        %v550 = vunpack.c.h.b16 %v326
        %v551 = vunpack.c.l.b16 %v327
        %v552 = vunpack.c.h.b16 %v327
        %v553 = vunpack.c.l.b16 %v328
        %v554 = vunpack.c.h.b16 %v328
        %v555 = vunpack.c.l.b16 %v329
        %v556 = vunpack.c.h.b16 %v329
        %v557 = vunpack.c.l.b16 %v330
        %v558 = vunpack.c.h.b16 %v330
        %v559 = vunpack.c.l.b16 %v331
        %v560 = vunpack.c.h.b16 %v331
        %v561 = vunpack.c.l.b16 %v332
        %v562 = vunpack.c.h.b16 %v332
        %v563 = vunpack.c.l.b16 %v333
        %v564 = vunpack.c.h.b16 %v333
        %v565 = vunpack.c.l.b16 %v334
        %v566 = vunpack.c.h.b16 %v334
        %v567 = vpack.c.b16 %v441, %v439
        %v568 = vpack.c.b16 %v442, %v440
        %v569 = vpack.c.b16 %v445, %v443
        %v570 = vpack.c.b16 %v446, %v444
        %v571 = vpack.c.b16 %v449, %v447
        %v572 = vpack.c.b16 %v450, %v448
        %v573 = vpack.c.b16 %v453, %v451
        %v574 = vpack.c.b16 %v454, %v452
        %v575 = vpack.c.b16 %v457, %v455
        %v576 = vpack.c.b16 %v458, %v456
        %v577 = vpack.c.b16 %v461, %v459
        %v578 = vpack.c.b16 %v462, %v460
        %v579 = vpack.c.b16 %v465, %v463
        %v580 = vpack.c.b16 %v466, %v464
        %v581 = vpack.c.b16 %v469, %v467
        %v582 = vpack.c.b16 %v470, %v468
        %v583 = vpack.c.b16 %v473, %v471
        %v584 = vpack.c.b16 %v474, %v472
        %v585 = vpack.c.b16 %v477, %v475
        %v586 = vpack.c.b16 %v478, %v476
        %v587 = vpack.c.b16 %v481, %v479
        %v588 = vpack.c.b16 %v482, %v480
        %v589 = vpack.c.b16 %v485, %v483
        %v590 = vpack.c.b16 %v486, %v484
        %v591 = vpack.c.b16 %v489, %v487
        %v592 = vpack.c.b16 %v490, %v488
        %v593 = vpack.c.b16 %v493, %v491
        %v594 = vpack.c.b16 %v494, %v492
        %v595 = vpack.c.b16 %v497, %v495
        %v596 = vpack.c.b16 %v498, %v496
        %v597 = vpack.c.b16 %v501, %v499
        %v598 = vpack.c.b16 %v502, %v500
        %v599 = vpack.c.b16 %v505, %v503
        %v600 = vpack.c.b16 %v506, %v504
        %v601 = vpack.c.b16 %v509, %v507
        %v602 = vpack.c.b16 %v510, %v508
        %v603 = vpack.c.b16 %v513, %v511
        %v604 = vpack.c.b16 %v514, %v512
        %v605 = vpack.c.b16 %v517, %v515
        %v606 = vpack.c.b16 %v518, %v516
        %v607 = vpack.c.b16 %v521, %v519
        %v608 = vpack.c.b16 %v522, %v520
        %v609 = vpack.c.b16 %v525, %v523
        %v610 = vpack.c.b16 %v526, %v524
        %v611 = vpack.c.b16 %v529, %v527
        %v612 = vpack.c.b16 %v530, %v528
        %v613 = vpack.c.b16 %v533, %v531
        %v614 = vpack.c.b16 %v534, %v532
        %v615 = vpack.c.b16 %v537, %v535
        %v616 = vpack.c.b16 %v538, %v536
        %v617 = vpack.c.b16 %v541, %v539
        %v618 = vpack.c.b16 %v542, %v540
        %v619 = vpack.c.b16 %v545, %v543
        %v620 = vpack.c.b16 %v546, %v544
        %v621 = vpack.c.b16 %v549, %v547
        %v622 = vpack.c.b16 %v550, %v548
        %v623 = vpack.c.b16 %v553, %v551
        %v624 = vpack.c.b16 %v554, %v552
        %v625 = vpack.c.b16 %v557, %v555
        %v626 = vpack.c.b16 %v558, %v556
        %v627 = vpack.c.b16 %v561, %v559
        %v628 = vpack.c.b16 %v562, %v560
        %v629 = vpack.c.b16 %v565, %v563
        %v630 = vpack.c.b16 %v566, %v564
        %695 = vmatprep.subr.bf16.mxu0 %v568
        %696 = vmatpush1.bf16.msra.mxu0 %v567
        %697 = vmatprep.subr.bf16.mxu0 %v570
        %698 = vmatpush1.bf16.msra.mxu0 %v569
        %699 = vmatprep.subr.bf16.mxu0 %v572
        %700 = vmatpush1.bf16.msra.mxu0 %v571
        %701 = vmatprep.subr.bf16.mxu0 %v574
        %702 = vmatpush1.bf16.msra.mxu0 %v573
        %703 = vmatprep.subr.bf16.mxu0 %v576
        %704 = vmatpush1.bf16.msra.mxu0 %v575
        %705 = vmatprep.subr.bf16.mxu0 %v578
        %706 = vmatpush1.bf16.msra.mxu0 %v577
        %707 = vmatprep.subr.bf16.mxu0 %v580
        %708 = vmatpush1.bf16.msra.mxu0 %v579
        %709 = vmatprep.subr.bf16.mxu0 %v582
        %710 = vmatpush1.bf16.msra.mxu0 %v581
        %711 = vmatprep.subr.bf16.mxu0 %v584
        %712 = vmatpush1.bf16.msra.mxu0 %v583
        %713 = vmatprep.subr.bf16.mxu0 %v586
        %714 = vmatpush1.bf16.msra.mxu0 %v585
        %715 = vmatprep.subr.bf16.mxu0 %v588
        %716 = vmatpush1.bf16.msra.mxu0 %v587
        %717 = vmatprep.subr.bf16.mxu0 %v590
        %718 = vmatpush1.bf16.msra.mxu0 %v589
        %719 = vmatprep.subr.bf16.mxu0 %v592
        %720 = vmatpush1.bf16.msra.mxu0 %v591
        %721 = vmatprep.subr.bf16.mxu0 %v594
        %722 = vmatpush1.bf16.msra.mxu0 %v593
        %723 = vmatprep.subr.bf16.mxu0 %v596
        %724 = vmatpush1.bf16.msra.mxu0 %v595
        %725 = vmatprep.subr.bf16.mxu0 %v598
        %726 = vmatpush1.bf16.msra.mxu0 %v597
        %727 = vmatprep.mubr.bf16.mxu0 %v360
        %728 = vmatmul.mubr.bf16.gmra.mrb[0].mxu0 %v359
        %v729 = vpop.f32.mrb[0].mxu0
        %v730 = vadd.f32 0.0, %v729
        %v731 = vpop.f32.mrb[0].mxu0
        %v732 = vadd.f32 0.0, %v731
        %v733 = vpop.f32.mrb[0].mxu0
        %v734 = vadd.f32 0.0, %v733
        %v735 = vpop.f32.mrb[0].mxu0
        %v736 = vadd.f32 0.0, %v735
        %737 = vmatprep.mubr.bf16.mxu0 %v364
        %738 = vmatmul.mubr.bf16.gmra.mrb[0].mxu0 %v363
        %v739 = vpop.f32.mrb[0].mxu0
        %v740 = vadd.f32 0.0, %v739
        %v741 = vpop.f32.mrb[0].mxu0
        %v742 = vadd.f32 0.0, %v741
        %v743 = vpop.f32.mrb[0].mxu0
        %v744 = vadd.f32 0.0, %v743
        %v745 = vpop.f32.mrb[0].mxu0
        %v746 = vadd.f32 0.0, %v745
        %747 = vdwg.mxu0
        %748 = vmatprep.subr.bf16.mxu0 %v600
        %749 = vmatpush1.bf16.msra.mxu0 %v599
        %750 = vmatprep.subr.bf16.mxu0 %v602
        %751 = vmatpush1.bf16.msra.mxu0 %v601
        %752 = vmatprep.subr.bf16.mxu0 %v604
        %753 = vmatpush1.bf16.msra.mxu0 %v603
        %754 = vmatprep.subr.bf16.mxu0 %v606
        %755 = vmatpush1.bf16.msra.mxu0 %v605
        %756 = vmatprep.subr.bf16.mxu0 %v608
        %757 = vmatpush1.bf16.msra.mxu0 %v607
        %758 = vmatprep.subr.bf16.mxu0 %v610
        %759 = vmatpush1.bf16.msra.mxu0 %v609
        %760 = vmatprep.subr.bf16.mxu0 %v612
        %761 = vmatpush1.bf16.msra.mxu0 %v611
        %762 = vmatprep.subr.bf16.mxu0 %v614
        %763 = vmatpush1.bf16.msra.mxu0 %v613
        %764 = vmatprep.subr.bf16.mxu0 %v616
        %765 = vmatpush1.bf16.msra.mxu0 %v615
        %766 = vmatprep.subr.bf16.mxu0 %v618
        %767 = vmatpush1.bf16.msra.mxu0 %v617
        %768 = vmatprep.subr.bf16.mxu0 %v620
        %769 = vmatpush1.bf16.msra.mxu0 %v619
        %770 = vmatprep.subr.bf16.mxu0 %v622
        %771 = vmatpush1.bf16.msra.mxu0 %v621
        %772 = vmatprep.subr.bf16.mxu0 %v624
        %773 = vmatpush1.bf16.msra.mxu0 %v623
        %774 = vmatprep.subr.bf16.mxu0 %v626
        %775 = vmatpush1.bf16.msra.mxu0 %v625
        %776 = vmatprep.subr.bf16.mxu0 %v628
        %777 = vmatpush1.bf16.msra.mxu0 %v627
        %778 = vmatprep.subr.bf16.mxu0 %v630
        %779 = vmatpush1.bf16.msra.mxu0 %v629
        %780 = vmatprep.mubr.bf16.mxu0 %v362
        %781 = vmatmul.mubr.bf16.gmra.mrb[0].mxu0 %v361
        %v782 = vpop.f32.mrb[0].mxu0
        %v783 = vadd.f32 %v730, %v782
        %v784 = vpop.f32.mrb[0].mxu0
        %v785 = vadd.f32 %v732, %v784
        %v786 = vpop.f32.mrb[0].mxu0
        %v787 = vadd.f32 %v734, %v786
        %v788 = vpop.f32.mrb[0].mxu0
        %v789 = vadd.f32 %v736, %v788
        %790 = vmatprep.mubr.bf16.mxu0 %v366
        %791 = vmatmul.mubr.bf16.gmra.mrb[0].mxu0 %v365
        %v792 = vpop.f32.mrb[0].mxu0
        %v793 = vadd.f32 %v740, %v792
        %v794 = vpop.f32.mrb[0].mxu0
        %v795 = vadd.f32 %v742, %v794
        %v796 = vpop.f32.mrb[0].mxu0
        %v797 = vadd.f32 %v744, %v796
        %v798 = vpop.f32.mrb[0].mxu0
        %v799 = vadd.f32 %v746, %v798
        %800 = vdwg.mxu0
        %v801 = vadd.f32 %v255, %v783
        %v802 = vadd.f32 %v256, %v785
        %v803 = vadd.f32 %v257, %v787
        %v804 = vadd.f32 %v258, %v789
        %v805 = vadd.f32 %v259, %v793
        %v806 = vadd.f32 %v260, %v795
        %v807 = vadd.f32 %v261, %v797
        %v808 = vadd.f32 %v262, %v799
        %809 = vst [vmem:[#allocation2] sm:$0xff] %v801
        %810 = vst [vmem:[#allocation2 + $0x8] sm:$0xff] %v802
        %811 = vst [vmem:[#allocation2 + $0x10] sm:$0xff] %v803
        %812 = vst [vmem:[#allocation2 + $0x18] sm:$0xff] %v804
        %813 = vst [vmem:[#allocation2 + $0x20] sm:$0xff] %v805
        %814 = vst [vmem:[#allocation2 + $0x28] sm:$0xff] %v806
        %815 = vst [vmem:[#allocation2 + $0x30] sm:$0xff] %v807
        %816 = vst [vmem:[#allocation2 + $0x38] sm:$0xff] %v808
        %p817 = scmp.eq.s32.totalorder %s15, 3
        // Predicated region
        $region64: #{discriminator_forward.7} parent=54 // pred_check
          %p818 = pneg %p817
        $region65: #{discriminator_forward.7} parent=54 // pred_check_branch
          %820 = sbr.rel (%p818) target = $region67
        $region66: #{discriminator_forward.7} parent=54 // pred_region
          %v821 = vld [vmem:[#allocation2] sm:$0xff]
          %v822 = vld [vmem:[#allocation2 + $0x8] sm:$0xff]
          %v823 = vld [vmem:[#allocation2 + $0x10] sm:$0xff]
          %v824 = vld [vmem:[#allocation2 + $0x18] sm:$0xff]
          %v825 = vld [vmem:[#allocation2 + $0x20] sm:$0xff]
          %v826 = vld [vmem:[#allocation2 + $0x28] sm:$0xff]
          %v827 = vld [vmem:[#allocation2 + $0x30] sm:$0xff]
          %v828 = vld [vmem:[#allocation2 + $0x38] sm:$0xff]
          %v829 = vadd.f32 %v821, %v823
          %v830 = vadd.f32 %v829, %v825
          %v831 = vadd.f32 %v830, %v827
          %v832 = vrot.slane %v831, 4
          %v833 = vadd.f32 %v831, %v832
          %v834 = vrot.slane %v833, 2
          %v835 = vadd.f32 %v833, %v834
          %v836 = vrot.slane %v835, 1
          %v837 = vadd.f32 %v835, %v836
          %v838 = vadd.f32 %v822, %v824
          %v839 = vadd.f32 %v838, %v826
          %v840 = vadd.f32 %v839, %v828
          %v841 = vrot.slane %v840, 4
          %v842 = vadd.f32 %v840, %v841
          %v843 = vrot.slane %v842, 2
          %v844 = vadd.f32 %v842, %v843
          %v845 = vrot.slane %v844, 1
          %v846 = vadd.f32 %v844, %v845
          %v847 = vmul.f32 %v837, 0.03125
          %v848 = vmul.f32 %v846, 0.03125
          %v849 = vmul.f32 %v821, %v821
          %v850 = vmul.f32 %v822, %v822
          %v851 = vmul.f32 %v823, %v823
          %v852 = vmul.f32 %v824, %v824
          %v853 = vmul.f32 %v825, %v825
          %v854 = vmul.f32 %v826, %v826
          %v855 = vmul.f32 %v827, %v827
          %v856 = vmul.f32 %v828, %v828
          %v857 = vadd.f32 %v849, %v851
          %v858 = vadd.f32 %v857, %v853
          %v859 = vadd.f32 %v858, %v855
          %v860 = vrot.slane %v859, 4
          %v861 = vadd.f32 %v859, %v860
          %v862 = vrot.slane %v861, 2
          %v863 = vadd.f32 %v861, %v862
          %v864 = vrot.slane %v863, 1
          %v865 = vadd.f32 %v863, %v864
          %v866 = vadd.f32 %v850, %v852
          %v867 = vadd.f32 %v866, %v854
          %v868 = vadd.f32 %v867, %v856
          %v869 = vrot.slane %v868, 4
          %v870 = vadd.f32 %v868, %v869
          %v871 = vrot.slane %v870, 2
          %v872 = vadd.f32 %v870, %v871
          %v873 = vrot.slane %v872, 1
          %v874 = vadd.f32 %v872, %v873
          %v875 = vmul.f32 %v865, 0.03125
          %v876 = vmul.f32 %v874, 0.03125
          %v877 = vmul.f32 %v847, %v847
          %v878 = vmul.f32 %v848, %v848
          %v879 = vsub.f32 %v875, %v877
          %v880 = vsub.f32 %v876, %v878
          %v881 = vmax.f32 %v879, 0.0
          %v882 = vmax.f32 %v880, 0.0
          %v883 = vld [vmem:[%s2] sm:$0x3]
          %v884 = vadd.f32 %v881, 1e-05
          %v885 = vadd.f32 %v882, 1e-05
          %v886 = vrsqrt.pop %v884
          %v887 = vrsqrt.pop %v885
          %v890 = vcombine.low %v886, %v887
          %v892 = vunpack.c.l.s4 1966171168
          %v893 = vunpack.c.0.s8 %v892
          %v894 = vlaneseq
          %v895 = vshrl.u32 %v894, 7
          %v896 = vsub.s32 %v893, %v895
          %v897 = vrot.slane %v890, %v896
          %v899 = vunpack.c.l.s4 1966171168
          %v900 = vunpack.c.0.s8 %v899
          %v901 = vlaneseq
          %v902 = vshrl.u32 %v901, 7
          %v903 = vsub.s32 %v900, %v902
          %v904 = vrot.slane %v897, %v903
          %v906 = vmul.f32 %v883, %v904
          %v907 = vld [vmem:[%s3] sm:$0x3]
          %v909 = vlaneseq
          %v910 = vshrl.u32 %v909, 7
          %v911 = vsub.s32 0, %v910
          %v912 = vrot.slane %v906, %v911
          %v913 = vlaneseq
          %v914 = vshrl.u32 %v913, 7
          %v915 = vsub.s32 1, %v914
          %v916 = vrot.slane %v906, %v915
          %v919 = vmul.f32 %v847, %v912
          %v920 = vmul.f32 %v848, %v916
          %v923 = vcombine.low %v919, %v920
          %v925 = vunpack.c.l.s4 1966171168
          %v926 = vunpack.c.0.s8 %v925
          %v927 = vlaneseq
          %v928 = vshrl.u32 %v927, 7
          %v929 = vsub.s32 %v926, %v928
          %v930 = vrot.slane %v923, %v929
          %v932 = vunpack.c.l.s4 1966171168
          %v933 = vunpack.c.0.s8 %v932
          %v934 = vlaneseq
          %v935 = vshrl.u32 %v934, 7
          %v936 = vsub.s32 %v933, %v935
          %v937 = vrot.slane %v930, %v936
          %v939 = vsub.f32 %v907, %v937
          %v940 = vmul.f32 %v821, %v912
          %v941 = vmul.f32 %v822, %v916
          %v942 = vmul.f32 %v823, %v912
          %v943 = vmul.f32 %v824, %v916
          %v944 = vmul.f32 %v825, %v912
          %v945 = vmul.f32 %v826, %v916
          %v946 = vmul.f32 %v827, %v912
          %v947 = vmul.f32 %v828, %v916
          %v949 = vlaneseq
          %v950 = vshrl.u32 %v949, 7
          %v951 = vsub.s32 0, %v950
          %v952 = vrot.slane %v939, %v951
          %v953 = vlaneseq
          %v954 = vshrl.u32 %v953, 7
          %v955 = vsub.s32 1, %v954
          %v956 = vrot.slane %v939, %v955
          %v959 = vadd.f32 %v940, %v952
          %v960 = vadd.f32 %v941, %v956
          %v961 = vadd.f32 %v942, %v952
          %v962 = vadd.f32 %v943, %v956
          %v963 = vadd.f32 %v944, %v952
          %v964 = vadd.f32 %v945, %v956
          %v965 = vadd.f32 %v946, %v952
          %v966 = vadd.f32 %v947, %v956
          %vm967 = vcmp.ge.f32.partialorder %v959, 0.0
          %vm968 = vcmp.ge.f32.partialorder %v960, 0.0
          %vm969 = vcmp.ge.f32.partialorder %v961, 0.0
          %vm970 = vcmp.ge.f32.partialorder %v962, 0.0
          %vm971 = vcmp.ge.f32.partialorder %v963, 0.0
          %vm972 = vcmp.ge.f32.partialorder %v964, 0.0
          %vm973 = vcmp.ge.f32.partialorder %v965, 0.0
          %vm974 = vcmp.ge.f32.partialorder %v966, 0.0
          %v975 = vmul.f32 %v959, 0.2
          %v976 = vmul.f32 %v960, 0.2
          %v977 = vmul.f32 %v961, 0.2
          %v978 = vmul.f32 %v962, 0.2
          %v979 = vmul.f32 %v963, 0.2
          %v980 = vmul.f32 %v964, 0.2
          %v981 = vmul.f32 %v965, 0.2
          %v982 = vmul.f32 %v966, 0.2
          %v983 = vsel %vm967, %v959, %v975
          %v984 = vsel %vm968, %v960, %v976
          %v985 = vsel %vm969, %v961, %v977
          %v986 = vsel %vm970, %v962, %v978
          %v987 = vsel %vm971, %v963, %v979
          %v988 = vsel %vm972, %v964, %v980
          %v989 = vsel %vm973, %v965, %v981
          %v990 = vsel %vm974, %v966, %v982
          %v991 = vpack.c.bf16 %v985, %v983
          %v992 = vpack.c.bf16 %v986, %v984
          %v993 = vpack.c.bf16 %v989, %v987
          %v994 = vpack.c.bf16 %v990, %v988
          %v999 = vunpack.c.l.b16 %v991
          %v1000 = vunpack.c.l.b16 %v992
          %v1001 = vunpack.c.h.b16 %v991
          %v1002 = vunpack.c.h.b16 %v992
          %v1003 = vunpack.c.l.b16 %v993
          %v1004 = vunpack.c.l.b16 %v994
          %v1005 = vunpack.c.h.b16 %v993
          %v1006 = vunpack.c.h.b16 %v994
          %v1007 = vpack.c.b16 %v1000, %v999
          %v1008 = vpack.c.b16 %v1002, %v1001
          %v1009 = vpack.c.b16 %v1004, %v1003
          %v1010 = vpack.c.b16 %v1006, %v1005
          %1015 = vst [vmem:[%s4] sm:$0xff] %v1007
          %1016 = vst [vmem:[%s4 + $0x8] sm:$0xff] %v1008
          %1017 = vst [vmem:[%s4 + $0x10] sm:$0xff] %v1009
          %1018 = vst [vmem:[%s4 + $0x18] sm:$0xff] %v1010
        $region67: #{discriminator_forward.7} parent=54 // pred_fallthru
          _
        // Predicated region
        $region68: #{discriminator_forward.7} parent=54 // pred_check
          %p1019 = pneg %p122
        $region69: #{discriminator_forward.7} parent=54 // pred_check_branch
          %1021 = sbr.rel (%p1019) target = $region71
        $region70: #{discriminator_forward.7} parent=54 // pred_region
          _
        $region71: #{discriminator_forward.7} parent=54 // pred_fallthru
          _
        // Predicated region
        $region72: #{discriminator_forward.7} parent=54 // pred_check
          %p1022 = pneg %p122
        $region73: #{discriminator_forward.7} parent=54 // pred_check_branch
          %1024 = sbr.rel (%p1022) target = $region75
        $region74: #{discriminator_forward.7} parent=54 // pred_region
          _
        $region75: #{discriminator_forward.7} parent=54 // pred_fallthru
          _
      $region55: #{discriminator_forward.7} parent=5 // pred_fallthru
        _
      %p1025 = scmp.le.s32.totalorder 2, %s10
      // Predicated region
      $region76: #{discriminator_forward.7} parent=5 // pred_check
        %p1026 = pneg %p1025
      $region77: #{discriminator_forward.7} parent=5 // pred_check_branch
        %1028 = sbr.rel (%p1026) target = $region79
      $region78: #{discriminator_forward.7} parent=5 // pred_region
        %s1029 = ssub.s32 %s10, 2
      $region79: #{discriminator_forward.7} parent=5 // pred_fallthru
        _
    $region6: #{discriminator_forward.7} parent=1 // loop_footer
      %s14 = sadd.s32 1, %s10
    $region7: #{discriminator_forward.7} parent=1 // loop_footer_branch
      %9 = sbr.rel target = $region3
    $region8: #{discriminator_forward.7} parent=1 // loop_exit
      _

// kernel: discriminator_forward.8
$region0: #{discriminator_forward.8}
  #allocation0 [shape = 'u32[]', space=smem, size = 0x4, offset = 0x4, fixed_abs, tag = 'smem constant byte address 0x4 - core index']
  #allocation1 [shape = 'u32[144,128]{1,0:T(1,128)}', space=vmem, size = 0x12000, scoped, tag = 'internal scratch']
  #allocation2 [shape = 'f32[32,512]{1,0:T(8,128)}', space=vmem, size = 0x10000, scoped, tag = 'scratch operand']
  %s0 = inlined_call_operand.vmem [shape: bf16[32,4096], index: 0, kind: input, shape index: {}]
  %s1 = inlined_call_operand.vmem [shape: bf16[4096,512], index: 1, kind: input, shape index: {}]
  %s2 = inlined_call_operand.vmem [shape: f32[1,512], index: 2, kind: input, shape index: {}]
  %s3 = inlined_call_operand.vmem [shape: f32[1,512], index: 3, kind: input, shape index: {}]
  %s4 = inlined_call_operand.vmem [shape: bf16[32,512], index: 4, kind: output, shape index: {}]
  %s5 = sld [smem:[#allocation0]]
  $region80: #{discriminator_forward.8} parent=0
    _
  %s7 = ssub.s32 1, %s5
  %s8 = scalar_select 0, %s7, %s5
  $region1: #{discriminator_forward.8} parent=0
    #allocation3 [shape = 'u8[65536]{0}', space=vmem, size = 0x10000, scoped, tag = 'input window, operand 0']
    loop: start=0, step=1, limit=10
    $region2: #{discriminator_forward.8} parent=1 // loop_pre_header
      _
    $region3: #{discriminator_forward.8} parent=1 // loop_header
      %s10 = sphi 0, %s14
      %p11 = scmp.ge.s32.totalorder %s10, 10
      %s20 = sphi 0, %s22
      %s23 = sphi 0, %s20
      %s24 = sphi 0, %s23
      %s40 = sphi 0, %s24
      %s46 = sphi 0, %s48
      %s49 = sphi 0, %s46
      %s50 = sphi 0, %s49
      %s66 = sphi 0, %s50
      %s70 = sphi 0, %s70
      %s72 = sphi 0, %s70
      %s73 = sphi 0, %s72
      %s87 = sphi 0, %s73
      %s91 = sphi 0, %s91
      %s93 = sphi 0, %s91
      %s94 = sphi 0, %s93
      %s108 = sphi 0, %s94
      %s112 = sphi 0, %s112
      %s114 = sphi 0, %s112
      %s115 = sphi 0, %s114
      %s129 = sphi 0, %s115
    $region4: #{discriminator_forward.8} parent=1 // loop_header_branch
      %13 = sbr.rel (%p11) target = $region8
    $region5: #{discriminator_forward.8} parent=1 // loop_body
      %s15 = ssub.s32 %s10, 1
      %s16 = ssub.s32 %s10, 2
      %s17 = sadd.s32 %s10, 1
      %s18 = ssub.s32 %s10, %s17
      %p19 = scmp.eq.s32.totalorder %s18, 0
      %s21 = sadd.s32 %s20, 1
      %s22 = scalar_select %p19, %s20, %s21
      %p25 = pneg %p19
      %p26 = scmp.eq.s32.totalorder %s10, 7
      %p27 = por %p25, %p26
      %p28 = scmp.ne.s32.totalorder %s20, %s23
      %p29 = scmp.eq.s32.totalorder %s10, 0
      %p30 = por %p28, %p29
      %p31 = scmp.ne.s32.totalorder %s20, %s23
      %p32 = scmp.eq.s32.totalorder %s15, 7
      %p33 = por %p31, %p32
      %p34 = scmp.ne.s32.totalorder %s23, %s24
      %p35 = scmp.eq.s32.totalorder %s15, 0
      %p36 = por %p34, %p35
      %p37 = scmp.ne.s32.totalorder %s23, %s24
      %p38 = scmp.eq.s32.totalorder %s16, 7
      %p39 = por %p37, %p38
      %p41 = scmp.ne.s32.totalorder %s24, %s40
      %p42 = scmp.eq.s32.totalorder %s16, 0
      %p43 = por %p41, %p42
      %s44 = ssub.s32 %s10, %s17
      %p45 = scmp.eq.s32.totalorder %s44, 0
      %s47 = sadd.s32 %s46, 1
      %s48 = scalar_select %p45, %s46, %s47
      %p51 = pneg %p45
      %p52 = scmp.eq.s32.totalorder %s10, 7
      %p53 = por %p51, %p52
      %p54 = scmp.ne.s32.totalorder %s46, %s49
      %p55 = scmp.eq.s32.totalorder %s10, 0
      %p56 = por %p54, %p55
      %p57 = scmp.ne.s32.totalorder %s46, %s49
      %p58 = scmp.eq.s32.totalorder %s15, 7
      %p59 = por %p57, %p58
      %p60 = scmp.ne.s32.totalorder %s49, %s50
      %p61 = scmp.eq.s32.totalorder %s15, 0
      %p62 = por %p60, %p61
      %p63 = scmp.ne.s32.totalorder %s49, %s50
      %p64 = scmp.eq.s32.totalorder %s16, 7
      %p65 = por %p63, %p64
      %p67 = scmp.ne.s32.totalorder %s50, %s66
      %p68 = scmp.eq.s32.totalorder %s16, 0
      %p69 = por %p67, %p68
      %s71 = sadd.s32 %s70, 1
      %p74 = scmp.eq.s32.totalorder %s10, 7
      %p75 = scmp.ne.s32.totalorder %s70, %s72
      %p76 = scmp.eq.s32.totalorder %s10, 0
      %p77 = por %p75, %p76
      %p78 = scmp.ne.s32.totalorder %s70, %s72
      %p79 = scmp.eq.s32.totalorder %s15, 7
      %p80 = por %p78, %p79
      %p81 = scmp.ne.s32.totalorder %s72, %s73
      %p82 = scmp.eq.s32.totalorder %s15, 0
      %p83 = por %p81, %p82
      %p84 = scmp.ne.s32.totalorder %s72, %s73
      %p85 = scmp.eq.s32.totalorder %s16, 7
      %p86 = por %p84, %p85
      %p88 = scmp.ne.s32.totalorder %s73, %s87
      %p89 = scmp.eq.s32.totalorder %s16, 0
      %p90 = por %p88, %p89
      %s92 = sadd.s32 %s91, 1
      %p95 = scmp.eq.s32.totalorder %s10, 7
      %p96 = scmp.ne.s32.totalorder %s91, %s93
      %p97 = scmp.eq.s32.totalorder %s10, 0
      %p98 = por %p96, %p97
      %p99 = scmp.ne.s32.totalorder %s91, %s93
      %p100 = scmp.eq.s32.totalorder %s15, 7
      %p101 = por %p99, %p100
      %p102 = scmp.ne.s32.totalorder %s93, %s94
      %p103 = scmp.eq.s32.totalorder %s15, 0
      %p104 = por %p102, %p103
      %p105 = scmp.ne.s32.totalorder %s93, %s94
      %p106 = scmp.eq.s32.totalorder %s16, 7
      %p107 = por %p105, %p106
      %p109 = scmp.ne.s32.totalorder %s94, %s108
      %p110 = scmp.eq.s32.totalorder %s16, 0
      %p111 = por %p109, %p110
      %s113 = sadd.s32 %s112, 1
      %p116 = scmp.eq.s32.totalorder %s10, 7
      %p117 = scmp.ne.s32.totalorder %s112, %s114
      %p118 = scmp.eq.s32.totalorder %s10, 0
      %p119 = por %p117, %p118
      %p120 = scmp.ne.s32.totalorder %s112, %s114
      %p121 = scmp.eq.s32.totalorder %s15, 7
      %p122 = por %p120, %p121
      %p123 = scmp.ne.s32.totalorder %s114, %s115
      %p124 = scmp.eq.s32.totalorder %s15, 0
      %p125 = por %p123, %p124
      %p126 = scmp.ne.s32.totalorder %s114, %s115
      %p127 = scmp.eq.s32.totalorder %s16, 7
      %p128 = por %p126, %p127
      %p130 = scmp.ne.s32.totalorder %s115, %s129
      %p131 = scmp.eq.s32.totalorder %s16, 0
      %p132 = por %p130, %p131
      %p133 = scmp.le.s32.totalorder 1, %s10
      %p134 = scmp.lt.s32.totalorder %s10, 9
      %p135 = pnand %p133, %p134
      %p136 = pneg %p135
      // Predicated region
      $region9: #{discriminator_forward.8} parent=5 // pred_check
        _
      $region10: #{discriminator_forward.8} parent=5 // pred_check_branch
        %138 = sbr.rel (%p135) target = $region12
      $region11: #{discriminator_forward.8} parent=5 // pred_region
        %s139 = ssub.s32 %s10, 1
        // Predicated region
        $region13: #{discriminator_forward.8} parent=11 // pred_check
          %p140 = pneg %p83
        $region14: #{discriminator_forward.8} parent=11 // pred_check_branch
          %142 = sbr.rel (%p140) target = $region16
        $region15: #{discriminator_forward.8} parent=11 // pred_region
          _
        $region16: #{discriminator_forward.8} parent=11 // pred_fallthru
          _
        // Predicated region
        $region17: #{discriminator_forward.8} parent=11 // pred_check
          %p143 = pneg %p104
        $region18: #{discriminator_forward.8} parent=11 // pred_check_branch
          %145 = sbr.rel (%p143) target = $region20
        $region19: #{discriminator_forward.8} parent=11 // pred_region
          _
        $region20: #{discriminator_forward.8} parent=11 // pred_fallthru
          _
      $region12: #{discriminator_forward.8} parent=5 // pred_fallthru
        _
      %p146 = scmp.lt.s32.totalorder %s10, 8
      // Predicated region
      $region21: #{discriminator_forward.8} parent=5 // pred_check
        %p147 = pneg %p146
      $region22: #{discriminator_forward.8} parent=5 // pred_check_branch
        %149 = sbr.rel (%p147) target = $region24
      $region23: #{discriminator_forward.8} parent=5 // pred_region
        // Predicated region
        $region25: #{discriminator_forward.8} parent=23 // pred_check
          %p150 = pneg %p30
        $region26: #{discriminator_forward.8} parent=23 // pred_check_branch
          %152 = sbr.rel (%p150) target = $region28
        $region27: #{discriminator_forward.8} parent=23 // pred_region
          %s153 = sand.u32 %s20, 1
          %s154 = sand.u32 %s20, 1
          %s155 = smul.addr %s154, 64
          %s156 = scalar_lea.vmem [#allocation3], %s155
          %s157 = smul.u32 4, %s10
          %s158 = smul.addr %s157, 4
          %s159 = scalar_lea.vmem %s0, %s158
          // Predicated region
          $region29: #{discriminator_forward.8} parent=27 // pred_check
            _
          $region30: #{discriminator_forward.8} parent=27 // pred_check_branch
            %161 = sbr.rel (0) target = $region32
          $region31: #{discriminator_forward.8} parent=27 // pred_region
            // Predicated region
            $region33: #{discriminator_forward.8} parent=31 // pred_check
              _
            $region34: #{discriminator_forward.8} parent=31 // pred_check_branch
              %163 = sbr.rel (0) target = $region36
            $region35: #{discriminator_forward.8} parent=31 // pred_region
              loop: start=0, step=1, limit=1
              $region37: #{discriminator_forward.8} parent=35 // loop_pre_header
                _
              $region38: #{discriminator_forward.8} parent=35 // loop_header
                %s165 = sphi 0, %s169
                %p166 = scmp.ge.s32.totalorder %s165, 1
                %s170 = sphi %s159, %s159
                %s171 = sphi %s156, %s156
              $region39: #{discriminator_forward.8} parent=35 // loop_header_branch
                %168 = sbr.rel (%p166) target = $region43
              $region40: #{discriminator_forward.8} parent=35 // loop_body
                %v172 = vld [vmem:[%s170] sm:$0xff]
                %173 = vst [vmem:[%s171] sm:$0xff] %v172
                %v174 = vld [vmem:[%s170 + $0x8] sm:$0xff]
                %175 = vst [vmem:[%s171 + $0x8] sm:$0xff] %v174
                %v176 = vld [vmem:[%s170 + $0x80] sm:$0xff]
                %177 = vst [vmem:[%s171 + $0x10] sm:$0xff] %v176
                %v178 = vld [vmem:[%s170 + $0x88] sm:$0xff]
                %179 = vst [vmem:[%s171 + $0x18] sm:$0xff] %v178
                %v180 = vld [vmem:[%s170 + $0x100] sm:$0xff]
                %181 = vst [vmem:[%s171 + $0x20] sm:$0xff] %v180
                %v182 = vld [vmem:[%s170 + $0x108] sm:$0xff]
                %183 = vst [vmem:[%s171 + $0x28] sm:$0xff] %v182
                %v184 = vld [vmem:[%s170 + $0x180] sm:$0xff]
                %185 = vst [vmem:[%s171 + $0x30] sm:$0xff] %v184
                %v186 = vld [vmem:[%s170 + $0x188] sm:$0xff]
                %187 = vst [vmem:[%s171 + $0x38] sm:$0xff] %v186
              $region41: #{discriminator_forward.8} parent=35 // loop_footer
                %s169 = sadd.s32 1, %s165
              $region42: #{discriminator_forward.8} parent=35 // loop_footer_branch
                %164 = sbr.rel target = $region38
              $region43: #{discriminator_forward.8} parent=35 // loop_exit
                _
            $region36: #{discriminator_forward.8} parent=31 // pred_fallthru
              _
            // Predicated region
            $region44: #{discriminator_forward.8} parent=31 // pred_check
              _
            $region45: #{discriminator_forward.8} parent=31 // pred_check_branch
              %189 = sbr.rel target = $region47
            $region46: #{discriminator_forward.8} parent=31 // pred_region
              _
            $region47: #{discriminator_forward.8} parent=31 // pred_fallthru
              _
          $region32: #{discriminator_forward.8} parent=27 // pred_fallthru
            _
          %190 = vnop
        $region28: #{discriminator_forward.8} parent=23 // pred_fallthru
          _
        // Predicated region
        $region48: #{discriminator_forward.8} parent=23 // pred_check
          %p191 = pneg %p56
        $region49: #{discriminator_forward.8} parent=23 // pred_check_branch
          %193 = sbr.rel (%p191) target = $region51
        $region50: #{discriminator_forward.8} parent=23 // pred_region
          %s194 = smul.u32 64, %s10
          %p195 = scmp.lt.s32.totalorder %s194, 511
          %s196 = scalar_select %p195, %s194, 511
          %s197 = smul.addr %s196, 4
          %s198 = smul.addr %s197, 4
          %s199 = scalar_lea.vmem %s1, %s198
          %s200 = smul.u32 64, %s10
        $region51: #{discriminator_forward.8} parent=23 // pred_fallthru
          _
      $region24: #{discriminator_forward.8} parent=5 // pred_fallthru
        _
      %p201 = scmp.le.s32.totalorder 1, %s10
      %p202 = scmp.lt.s32.totalorder %s10, 9
      %p203 = pnand %p201, %p202
      %p204 = pneg %p203
      // Predicated region
      $region52: #{discriminator_forward.8} parent=5 // pred_check
        _
      $region53: #{discriminator_forward.8} parent=5 // pred_check_branch
        %206 = sbr.rel (%p203) target = $region55
      $region54: #{discriminator_forward.8} parent=5 // pred_region
        %s207 = ssub.s32 %s10, 1
        %s208 = sand.u32 %s23, 1
        %s209 = sand.u32 %s23, 1
        %s210 = smul.addr %s209, 64
        %s211 = scalar_lea.vmem [#allocation3], %s210
        // Predicated region
        $region56: #{discriminator_forward.8} parent=54 // pred_check
          %p212 = pneg %p36
        $region57: #{discriminator_forward.8} parent=54 // pred_check_branch
          %214 = sbr.rel (%p212) target = $region59
        $region58: #{discriminator_forward.8} parent=54 // pred_region
          _
        $region59: #{discriminator_forward.8} parent=54 // pred_fallthru
          _
        %s215 = sand.u32 %s23, 1
        %s216 = sand.u32 %s23, 1
        %s217 = smul.addr %s216, 64
        %s218 = scalar_lea.vmem [#allocation3], %s217
        %p219 = pneg %p36
        %p220 = pneg %p33
        %s221 = smul.u32 64, %s15
        %p222 = scmp.lt.s32.totalorder %s221, 511
        %s223 = scalar_select %p222, %s221, 511
        %s224 = smul.addr %s223, 4
        %s225 = smul.addr %s224, 4
        %s226 = scalar_lea.vmem %s1, %s225
        %p227 = pneg %p62
        %p228 = pneg %p59
        %p229 = pneg %p83
        %p230 = pneg %p80
        %p231 = pneg %p104
        %p232 = pneg %p101
        %p233 = pneg %p125
        %p234 = pneg %p122
        %s235 = smul.u32 4, %s15
        %s236 = smul.u32 64, %s15
        %p237 = scmp.lt.s32.totalorder %s236, 511
        %s238 = scalar_select %p237, %s236, 511
        %s239 = smul.addr %s238, 4
        %s240 = smul.addr %s239, 4
        %s241 = scalar_lea.vmem %s1, %s240
        %s242 = smul.u32 64, %s15
        %p243 = scmp.eq.s32.totalorder %s15, 0
        // Predicated region
        $region60: #{discriminator_forward.8} parent=54 // pred_check
          %p244 = pneg %p243
        $region61: #{discriminator_forward.8} parent=54 // pred_check_branch
          %246 = sbr.rel (%p244) target = $region63
        $region62: #{discriminator_forward.8} parent=54 // pred_region
          %247 = vst [vmem:[#allocation2] sm:$0xff] 0.0
          %248 = vst [vmem:[#allocation2 + $0x8] sm:$0xff] 0.0
          %249 = vst [vmem:[#allocation2 + $0x10] sm:$0xff] 0.0
          %250 = vst [vmem:[#allocation2 + $0x18] sm:$0xff] 0.0
          %251 = vst [vmem:[#allocation2 + $0x20] sm:$0xff] 0.0
          %252 = vst [vmem:[#allocation2 + $0x28] sm:$0xff] 0.0
          %253 = vst [vmem:[#allocation2 + $0x30] sm:$0xff] 0.0
          %254 = vst [vmem:[#allocation2 + $0x38] sm:$0xff] 0.0
          %255 = vst [vmem:[#allocation2 + $0x40] sm:$0xff] 0.0
          %256 = vst [vmem:[#allocation2 + $0x48] sm:$0xff] 0.0
          %257 = vst [vmem:[#allocation2 + $0x50] sm:$0xff] 0.0
          %258 = vst [vmem:[#allocation2 + $0x58] sm:$0xff] 0.0
          %259 = vst [vmem:[#allocation2 + $0x60] sm:$0xff] 0.0
          %260 = vst [vmem:[#allocation2 + $0x68] sm:$0xff] 0.0
          %261 = vst [vmem:[#allocation2 + $0x70] sm:$0xff] 0.0
          %262 = vst [vmem:[#allocation2 + $0x78] sm:$0xff] 0.0
        $region63: #{discriminator_forward.8} parent=54 // pred_fallthru
          _
        %v263 = vld [vmem:[#allocation2] sm:$0xff]
        %v264 = vld [vmem:[#allocation2 + $0x8] sm:$0xff]
        %v265 = vld [vmem:[#allocation2 + $0x10] sm:$0xff]
        %v266 = vld [vmem:[#allocation2 + $0x18] sm:$0xff]
        %v267 = vld [vmem:[#allocation2 + $0x20] sm:$0xff]
        %v268 = vld [vmem:[#allocation2 + $0x28] sm:$0xff]
        %v269 = vld [vmem:[#allocation2 + $0x30] sm:$0xff]
        %v270 = vld [vmem:[#allocation2 + $0x38] sm:$0xff]
        %v271 = vld [vmem:[#allocation2 + $0x40] sm:$0xff]
        %v272 = vld [vmem:[#allocation2 + $0x48] sm:$0xff]
        %v273 = vld [vmem:[#allocation2 + $0x50] sm:$0xff]
        %v274 = vld [vmem:[#allocation2 + $0x58] sm:$0xff]
        %v275 = vld [vmem:[#allocation2 + $0x60] sm:$0xff]
        %v276 = vld [vmem:[#allocation2 + $0x68] sm:$0xff]
        %v277 = vld [vmem:[#allocation2 + $0x70] sm:$0xff]
        %v278 = vld [vmem:[#allocation2 + $0x78] sm:$0xff]
        %v279 = vld [vmem:[%s211] sm:$0xff]
        %v280 = vld [vmem:[%s211 + $0x8] sm:$0xff]
        %v281 = vld [vmem:[%s211 + $0x10] sm:$0xff]
        %v282 = vld [vmem:[%s211 + $0x18] sm:$0xff]
        %v283 = vld [vmem:[%s211 + $0x20] sm:$0xff]
        %v284 = vld [vmem:[%s211 + $0x28] sm:$0xff]
        %v285 = vld [vmem:[%s211 + $0x30] sm:$0xff]
        %v286 = vld [vmem:[%s211 + $0x38] sm:$0xff]
        %v287 = vld [vmem:[%s241] sm:$0xff]
        %v288 = vld [vmem:[%s241 + $0x8] sm:$0xff]
        %v289 = vld [vmem:[%s241 + $0x10] sm:$0xff]
        %v290 = vld [vmem:[%s241 + $0x18] sm:$0xff]
        %v291 = vld [vmem:[%s241 + $0x20] sm:$0xff]
        %v292 = vld [vmem:[%s241 + $0x28] sm:$0xff]
        %v293 = vld [vmem:[%s241 + $0x30] sm:$0xff]
        %v294 = vld [vmem:[%s241 + $0x38] sm:$0xff]
        %v295 = vld [vmem:[%s241 + $0x40] sm:$0xff]
        %v296 = vld [vmem:[%s241 + $0x48] sm:$0xff]
        %v297 = vld [vmem:[%s241 + $0x50] sm:$0xff]
        %v298 = vld [vmem:[%s241 + $0x58] sm:$0xff]
        %v299 = vld [vmem:[%s241 + $0x60] sm:$0xff]
        %v300 = vld [vmem:[%s241 + $0x68] sm:$0xff]
        %v301 = vld [vmem:[%s241 + $0x70] sm:$0xff]
        %v302 = vld [vmem:[%s241 + $0x78] sm:$0xff]
        %v303 = vld [vmem:[%s241 + $0x80] sm:$0xff]
        %v304 = vld [vmem:[%s241 + $0x88] sm:$0xff]
        %v305 = vld [vmem:[%s241 + $0x90] sm:$0xff]
        %v306 = vld [vmem:[%s241 + $0x98] sm:$0xff]
        %v307 = vld [vmem:[%s241 + $0xa0] sm:$0xff]
        %v308 = vld [vmem:[%s241 + $0xa8] sm:$0xff]
        %v309 = vld [vmem:[%s241 + $0xb0] sm:$0xff]
        %v310 = vld [vmem:[%s241 + $0xb8] sm:$0xff]
        %v311 = vld [vmem:[%s241 + $0xc0] sm:$0xff]
        %v312 = vld [vmem:[%s241 + $0xc8] sm:$0xff]
        %v313 = vld [vmem:[%s241 + $0xd0] sm:$0xff]
        %v314 = vld [vmem:[%s241 + $0xd8] sm:$0xff]
        %v315 = vld [vmem:[%s241 + $0xe0] sm:$0xff]
        %v316 = vld [vmem:[%s241 + $0xe8] sm:$0xff]
        %v317 = vld [vmem:[%s241 + $0xf0] sm:$0xff]
        %v318 = vld [vmem:[%s241 + $0xf8] sm:$0xff]
        %v319 = vld [vmem:[%s241 + $0x100] sm:$0xff]
        %v320 = vld [vmem:[%s241 + $0x108] sm:$0xff]
        %v321 = vld [vmem:[%s241 + $0x110] sm:$0xff]
        %v322 = vld [vmem:[%s241 + $0x118] sm:$0xff]
        %v323 = vld [vmem:[%s241 + $0x120] sm:$0xff]
        %v324 = vld [vmem:[%s241 + $0x128] sm:$0xff]
        %v325 = vld [vmem:[%s241 + $0x130] sm:$0xff]
        %v326 = vld [vmem:[%s241 + $0x138] sm:$0xff]
        %v327 = vld [vmem:[%s241 + $0x140] sm:$0xff]
        %v328 = vld [vmem:[%s241 + $0x148] sm:$0xff]
        %v329 = vld [vmem:[%s241 + $0x150] sm:$0xff]
        %v330 = vld [vmem:[%s241 + $0x158] sm:$0xff]
        %v331 = vld [vmem:[%s241 + $0x160] sm:$0xff]
        %v332 = vld [vmem:[%s241 + $0x168] sm:$0xff]
        %v333 = vld [vmem:[%s241 + $0x170] sm:$0xff]
        %v334 = vld [vmem:[%s241 + $0x178] sm:$0xff]
        %v335 = vld [vmem:[%s241 + $0x180] sm:$0xff]
        %v336 = vld [vmem:[%s241 + $0x188] sm:$0xff]
        %v337 = vld [vmem:[%s241 + $0x190] sm:$0xff]
        %v338 = vld [vmem:[%s241 + $0x198] sm:$0xff]
        %v339 = vld [vmem:[%s241 + $0x1a0] sm:$0xff]
        %v340 = vld [vmem:[%s241 + $0x1a8] sm:$0xff]
        %v341 = vld [vmem:[%s241 + $0x1b0] sm:$0xff]
        %v342 = vld [vmem:[%s241 + $0x1b8] sm:$0xff]
        %v343 = vld [vmem:[%s241 + $0x1c0] sm:$0xff]
        %v344 = vld [vmem:[%s241 + $0x1c8] sm:$0xff]
        %v345 = vld [vmem:[%s241 + $0x1d0] sm:$0xff]
        %v346 = vld [vmem:[%s241 + $0x1d8] sm:$0xff]
        %v347 = vld [vmem:[%s241 + $0x1e0] sm:$0xff]
        %v348 = vld [vmem:[%s241 + $0x1e8] sm:$0xff]
        %v349 = vld [vmem:[%s241 + $0x1f0] sm:$0xff]
        %v350 = vld [vmem:[%s241 + $0x1f8] sm:$0xff]
        %v351 = vld [vmem:[%s241 + $0x200] sm:$0xff]
        %v352 = vld [vmem:[%s241 + $0x208] sm:$0xff]
        %v353 = vld [vmem:[%s241 + $0x210] sm:$0xff]
        %v354 = vld [vmem:[%s241 + $0x218] sm:$0xff]
        %v355 = vld [vmem:[%s241 + $0x220] sm:$0xff]
        %v356 = vld [vmem:[%s241 + $0x228] sm:$0xff]
        %v357 = vld [vmem:[%s241 + $0x230] sm:$0xff]
        %v358 = vld [vmem:[%s241 + $0x238] sm:$0xff]
        %v359 = vld [vmem:[%s241 + $0x240] sm:$0xff]
        %v360 = vld [vmem:[%s241 + $0x248] sm:$0xff]
        %v361 = vld [vmem:[%s241 + $0x250] sm:$0xff]
        %v362 = vld [vmem:[%s241 + $0x258] sm:$0xff]
        %v363 = vld [vmem:[%s241 + $0x260] sm:$0xff]
        %v364 = vld [vmem:[%s241 + $0x268] sm:$0xff]
        %v365 = vld [vmem:[%s241 + $0x270] sm:$0xff]
        %v366 = vld [vmem:[%s241 + $0x278] sm:$0xff]
        %v367 = vld [vmem:[%s241 + $0x280] sm:$0xff]
        %v368 = vld [vmem:[%s241 + $0x288] sm:$0xff]
        %v369 = vld [vmem:[%s241 + $0x290] sm:$0xff]
        %v370 = vld [vmem:[%s241 + $0x298] sm:$0xff]
        %v371 = vld [vmem:[%s241 + $0x2a0] sm:$0xff]
        %v372 = vld [vmem:[%s241 + $0x2a8] sm:$0xff]
        %v373 = vld [vmem:[%s241 + $0x2b0] sm:$0xff]
        %v374 = vld [vmem:[%s241 + $0x2b8] sm:$0xff]
        %v375 = vld [vmem:[%s241 + $0x2c0] sm:$0xff]
        %v376 = vld [vmem:[%s241 + $0x2c8] sm:$0xff]
        %v377 = vld [vmem:[%s241 + $0x2d0] sm:$0xff]
        %v378 = vld [vmem:[%s241 + $0x2d8] sm:$0xff]
        %v379 = vld [vmem:[%s241 + $0x2e0] sm:$0xff]
        %v380 = vld [vmem:[%s241 + $0x2e8] sm:$0xff]
        %v381 = vld [vmem:[%s241 + $0x2f0] sm:$0xff]
        %v382 = vld [vmem:[%s241 + $0x2f8] sm:$0xff]
        %v383 = vld [vmem:[%s241 + $0x300] sm:$0xff]
        %v384 = vld [vmem:[%s241 + $0x308] sm:$0xff]
        %v385 = vld [vmem:[%s241 + $0x310] sm:$0xff]
        %v386 = vld [vmem:[%s241 + $0x318] sm:$0xff]
        %v387 = vld [vmem:[%s241 + $0x320] sm:$0xff]
        %v388 = vld [vmem:[%s241 + $0x328] sm:$0xff]
        %v389 = vld [vmem:[%s241 + $0x330] sm:$0xff]
        %v390 = vld [vmem:[%s241 + $0x338] sm:$0xff]
        %v391 = vld [vmem:[%s241 + $0x340] sm:$0xff]
        %v392 = vld [vmem:[%s241 + $0x348] sm:$0xff]
        %v393 = vld [vmem:[%s241 + $0x350] sm:$0xff]
        %v394 = vld [vmem:[%s241 + $0x358] sm:$0xff]
        %v395 = vld [vmem:[%s241 + $0x360] sm:$0xff]
        %v396 = vld [vmem:[%s241 + $0x368] sm:$0xff]
        %v397 = vld [vmem:[%s241 + $0x370] sm:$0xff]
        %v398 = vld [vmem:[%s241 + $0x378] sm:$0xff]
        %v399 = vld [vmem:[%s241 + $0x380] sm:$0xff]
        %v400 = vld [vmem:[%s241 + $0x388] sm:$0xff]
        %v401 = vld [vmem:[%s241 + $0x390] sm:$0xff]
        %v402 = vld [vmem:[%s241 + $0x398] sm:$0xff]
        %v403 = vld [vmem:[%s241 + $0x3a0] sm:$0xff]
        %v404 = vld [vmem:[%s241 + $0x3a8] sm:$0xff]
        %v405 = vld [vmem:[%s241 + $0x3b0] sm:$0xff]
        %v406 = vld [vmem:[%s241 + $0x3b8] sm:$0xff]
        %v407 = vld [vmem:[%s241 + $0x3c0] sm:$0xff]
        %v408 = vld [vmem:[%s241 + $0x3c8] sm:$0xff]
        %v409 = vld [vmem:[%s241 + $0x3d0] sm:$0xff]
        %v410 = vld [vmem:[%s241 + $0x3d8] sm:$0xff]
        %v411 = vld [vmem:[%s241 + $0x3e0] sm:$0xff]
        %v412 = vld [vmem:[%s241 + $0x3e8] sm:$0xff]
        %v413 = vld [vmem:[%s241 + $0x3f0] sm:$0xff]
        %v414 = vld [vmem:[%s241 + $0x3f8] sm:$0xff]
        %v423 = vunpack.c.l.b16 %v279
        %v424 = vunpack.c.h.b16 %v279
        %v425 = vunpack.c.l.b16 %v280
        %v426 = vunpack.c.h.b16 %v280
        %v427 = vunpack.c.l.b16 %v281
        %v428 = vunpack.c.h.b16 %v281
        %v429 = vunpack.c.l.b16 %v282
        %v430 = vunpack.c.h.b16 %v282
        %v431 = vunpack.c.l.b16 %v283
        %v432 = vunpack.c.h.b16 %v283
        %v433 = vunpack.c.l.b16 %v284
        %v434 = vunpack.c.h.b16 %v284
        %v435 = vunpack.c.l.b16 %v285
        %v436 = vunpack.c.h.b16 %v285
        %v437 = vunpack.c.l.b16 %v286
        %v438 = vunpack.c.h.b16 %v286
        %v439 = vpack.c.b16 %v427, %v423
        %v440 = vpack.c.b16 %v428, %v424
        %v441 = vpack.c.b16 %v429, %v425
        %v442 = vpack.c.b16 %v430, %v426
        %v443 = vpack.c.b16 %v435, %v431
        %v444 = vpack.c.b16 %v436, %v432
        %v445 = vpack.c.b16 %v437, %v433
        %v446 = vpack.c.b16 %v438, %v434
        %v583 = vunpack.c.l.b16 %v287
        %v584 = vunpack.c.h.b16 %v287
        %v585 = vunpack.c.l.b16 %v288
        %v586 = vunpack.c.h.b16 %v288
        %v587 = vunpack.c.l.b16 %v289
        %v588 = vunpack.c.h.b16 %v289
        %v589 = vunpack.c.l.b16 %v290
        %v590 = vunpack.c.h.b16 %v290
        %v591 = vunpack.c.l.b16 %v291
        %v592 = vunpack.c.h.b16 %v291
        %v593 = vunpack.c.l.b16 %v292
        %v594 = vunpack.c.h.b16 %v292
        %v595 = vunpack.c.l.b16 %v293
        %v596 = vunpack.c.h.b16 %v293
        %v597 = vunpack.c.l.b16 %v294
        %v598 = vunpack.c.h.b16 %v294
        %v599 = vunpack.c.l.b16 %v295
        %v600 = vunpack.c.h.b16 %v295
        %v601 = vunpack.c.l.b16 %v296
        %v602 = vunpack.c.h.b16 %v296
        %v603 = vunpack.c.l.b16 %v297
        %v604 = vunpack.c.h.b16 %v297
        %v605 = vunpack.c.l.b16 %v298
        %v606 = vunpack.c.h.b16 %v298
        %v607 = vunpack.c.l.b16 %v299
        %v608 = vunpack.c.h.b16 %v299
        %v609 = vunpack.c.l.b16 %v300
        %v610 = vunpack.c.h.b16 %v300
        %v611 = vunpack.c.l.b16 %v301
        %v612 = vunpack.c.h.b16 %v301
        %v613 = vunpack.c.l.b16 %v302
        %v614 = vunpack.c.h.b16 %v302
        %v615 = vunpack.c.l.b16 %v303
        %v616 = vunpack.c.h.b16 %v303
        %v617 = vunpack.c.l.b16 %v304
        %v618 = vunpack.c.h.b16 %v304
        %v619 = vunpack.c.l.b16 %v305
        %v620 = vunpack.c.h.b16 %v305
        %v621 = vunpack.c.l.b16 %v306
        %v622 = vunpack.c.h.b16 %v306
        %v623 = vunpack.c.l.b16 %v307
        %v624 = vunpack.c.h.b16 %v307
        %v625 = vunpack.c.l.b16 %v308
        %v626 = vunpack.c.h.b16 %v308
        %v627 = vunpack.c.l.b16 %v309
        %v628 = vunpack.c.h.b16 %v309
        %v629 = vunpack.c.l.b16 %v310
        %v630 = vunpack.c.h.b16 %v310
        %v631 = vunpack.c.l.b16 %v311
        %v632 = vunpack.c.h.b16 %v311
        %v633 = vunpack.c.l.b16 %v312
        %v634 = vunpack.c.h.b16 %v312
        %v635 = vunpack.c.l.b16 %v313
        %v636 = vunpack.c.h.b16 %v313
        %v637 = vunpack.c.l.b16 %v314
        %v638 = vunpack.c.h.b16 %v314
        %v639 = vunpack.c.l.b16 %v315
        %v640 = vunpack.c.h.b16 %v315
        %v641 = vunpack.c.l.b16 %v316
        %v642 = vunpack.c.h.b16 %v316
        %v643 = vunpack.c.l.b16 %v317
        %v644 = vunpack.c.h.b16 %v317
        %v645 = vunpack.c.l.b16 %v318
        %v646 = vunpack.c.h.b16 %v318
        %v647 = vunpack.c.l.b16 %v319
        %v648 = vunpack.c.h.b16 %v319
        %v649 = vunpack.c.l.b16 %v320
        %v650 = vunpack.c.h.b16 %v320
        %v651 = vunpack.c.l.b16 %v321
        %v652 = vunpack.c.h.b16 %v321
        %v653 = vunpack.c.l.b16 %v322
        %v654 = vunpack.c.h.b16 %v322
        %v655 = vunpack.c.l.b16 %v323
        %v656 = vunpack.c.h.b16 %v323
        %v657 = vunpack.c.l.b16 %v324
        %v658 = vunpack.c.h.b16 %v324
        %v659 = vunpack.c.l.b16 %v325
        %v660 = vunpack.c.h.b16 %v325
        %v661 = vunpack.c.l.b16 %v326
        %v662 = vunpack.c.h.b16 %v326
        %v663 = vunpack.c.l.b16 %v327
        %v664 = vunpack.c.h.b16 %v327
        %v665 = vunpack.c.l.b16 %v328
        %v666 = vunpack.c.h.b16 %v328
        %v667 = vunpack.c.l.b16 %v329
        %v668 = vunpack.c.h.b16 %v329
        %v669 = vunpack.c.l.b16 %v330
        %v670 = vunpack.c.h.b16 %v330
        %v671 = vunpack.c.l.b16 %v331
        %v672 = vunpack.c.h.b16 %v331
        %v673 = vunpack.c.l.b16 %v332
        %v674 = vunpack.c.h.b16 %v332
        %v675 = vunpack.c.l.b16 %v333
        %v676 = vunpack.c.h.b16 %v333
        %v677 = vunpack.c.l.b16 %v334
        %v678 = vunpack.c.h.b16 %v334
        %v679 = vunpack.c.l.b16 %v335
        %v680 = vunpack.c.h.b16 %v335
        %v681 = vunpack.c.l.b16 %v336
        %v682 = vunpack.c.h.b16 %v336
        %v683 = vunpack.c.l.b16 %v337
        %v684 = vunpack.c.h.b16 %v337
        %v685 = vunpack.c.l.b16 %v338
        %v686 = vunpack.c.h.b16 %v338
        %v687 = vunpack.c.l.b16 %v339
        %v688 = vunpack.c.h.b16 %v339
        %v689 = vunpack.c.l.b16 %v340
        %v690 = vunpack.c.h.b16 %v340
        %v691 = vunpack.c.l.b16 %v341
        %v692 = vunpack.c.h.b16 %v341
        %v693 = vunpack.c.l.b16 %v342
        %v694 = vunpack.c.h.b16 %v342
        %v695 = vunpack.c.l.b16 %v343
        %v696 = vunpack.c.h.b16 %v343
        %v697 = vunpack.c.l.b16 %v344
        %v698 = vunpack.c.h.b16 %v344
        %v699 = vunpack.c.l.b16 %v345
        %v700 = vunpack.c.h.b16 %v345
        %v701 = vunpack.c.l.b16 %v346
        %v702 = vunpack.c.h.b16 %v346
        %v703 = vunpack.c.l.b16 %v347
        %v704 = vunpack.c.h.b16 %v347
        %v705 = vunpack.c.l.b16 %v348
        %v706 = vunpack.c.h.b16 %v348
        %v707 = vunpack.c.l.b16 %v349
        %v708 = vunpack.c.h.b16 %v349
        %v709 = vunpack.c.l.b16 %v350
        %v710 = vunpack.c.h.b16 %v350
        %v711 = vunpack.c.l.b16 %v351
        %v712 = vunpack.c.h.b16 %v351
        %v713 = vunpack.c.l.b16 %v352
        %v714 = vunpack.c.h.b16 %v352
        %v715 = vunpack.c.l.b16 %v353
        %v716 = vunpack.c.h.b16 %v353
        %v717 = vunpack.c.l.b16 %v354
        %v718 = vunpack.c.h.b16 %v354
        %v719 = vunpack.c.l.b16 %v355
        %v720 = vunpack.c.h.b16 %v355
        %v721 = vunpack.c.l.b16 %v356
        %v722 = vunpack.c.h.b16 %v356
        %v723 = vunpack.c.l.b16 %v357
        %v724 = vunpack.c.h.b16 %v357
        %v725 = vunpack.c.l.b16 %v358
        %v726 = vunpack.c.h.b16 %v358
        %v727 = vunpack.c.l.b16 %v359
        %v728 = vunpack.c.h.b16 %v359
        %v729 = vunpack.c.l.b16 %v360
        %v730 = vunpack.c.h.b16 %v360
        %v731 = vunpack.c.l.b16 %v361
        %v732 = vunpack.c.h.b16 %v361
        %v733 = vunpack.c.l.b16 %v362
        %v734 = vunpack.c.h.b16 %v362
        %v735 = vunpack.c.l.b16 %v363
        %v736 = vunpack.c.h.b16 %v363
        %v737 = vunpack.c.l.b16 %v364
        %v738 = vunpack.c.h.b16 %v364
        %v739 = vunpack.c.l.b16 %v365
        %v740 = vunpack.c.h.b16 %v365
        %v741 = vunpack.c.l.b16 %v366
        %v742 = vunpack.c.h.b16 %v366
        %v743 = vunpack.c.l.b16 %v367
        %v744 = vunpack.c.h.b16 %v367
        %v745 = vunpack.c.l.b16 %v368
        %v746 = vunpack.c.h.b16 %v368
        %v747 = vunpack.c.l.b16 %v369
        %v748 = vunpack.c.h.b16 %v369
        %v749 = vunpack.c.l.b16 %v370
        %v750 = vunpack.c.h.b16 %v370
        %v751 = vunpack.c.l.b16 %v371
        %v752 = vunpack.c.h.b16 %v371
        %v753 = vunpack.c.l.b16 %v372
        %v754 = vunpack.c.h.b16 %v372
        %v755 = vunpack.c.l.b16 %v373
        %v756 = vunpack.c.h.b16 %v373
        %v757 = vunpack.c.l.b16 %v374
        %v758 = vunpack.c.h.b16 %v374
        %v759 = vunpack.c.l.b16 %v375
        %v760 = vunpack.c.h.b16 %v375
        %v761 = vunpack.c.l.b16 %v376
        %v762 = vunpack.c.h.b16 %v376
        %v763 = vunpack.c.l.b16 %v377
        %v764 = vunpack.c.h.b16 %v377
        %v765 = vunpack.c.l.b16 %v378
        %v766 = vunpack.c.h.b16 %v378
        %v767 = vunpack.c.l.b16 %v379
        %v768 = vunpack.c.h.b16 %v379
        %v769 = vunpack.c.l.b16 %v380
        %v770 = vunpack.c.h.b16 %v380
        %v771 = vunpack.c.l.b16 %v381
        %v772 = vunpack.c.h.b16 %v381
        %v773 = vunpack.c.l.b16 %v382
        %v774 = vunpack.c.h.b16 %v382
        %v775 = vunpack.c.l.b16 %v383
        %v776 = vunpack.c.h.b16 %v383
        %v777 = vunpack.c.l.b16 %v384
        %v778 = vunpack.c.h.b16 %v384
        %v779 = vunpack.c.l.b16 %v385
        %v780 = vunpack.c.h.b16 %v385
        %v781 = vunpack.c.l.b16 %v386
        %v782 = vunpack.c.h.b16 %v386
        %v783 = vunpack.c.l.b16 %v387
        %v784 = vunpack.c.h.b16 %v387
        %v785 = vunpack.c.l.b16 %v388
        %v786 = vunpack.c.h.b16 %v388
        %v787 = vunpack.c.l.b16 %v389
        %v788 = vunpack.c.h.b16 %v389
        %v789 = vunpack.c.l.b16 %v390
        %v790 = vunpack.c.h.b16 %v390
        %v791 = vunpack.c.l.b16 %v391
        %v792 = vunpack.c.h.b16 %v391
        %v793 = vunpack.c.l.b16 %v392
        %v794 = vunpack.c.h.b16 %v392
        %v795 = vunpack.c.l.b16 %v393
        %v796 = vunpack.c.h.b16 %v393
        %v797 = vunpack.c.l.b16 %v394
        %v798 = vunpack.c.h.b16 %v394
        %v799 = vunpack.c.l.b16 %v395
        %v800 = vunpack.c.h.b16 %v395
        %v801 = vunpack.c.l.b16 %v396
        %v802 = vunpack.c.h.b16 %v396
        %v803 = vunpack.c.l.b16 %v397
        %v804 = vunpack.c.h.b16 %v397
        %v805 = vunpack.c.l.b16 %v398
        %v806 = vunpack.c.h.b16 %v398
        %v807 = vunpack.c.l.b16 %v399
        %v808 = vunpack.c.h.b16 %v399
        %v809 = vunpack.c.l.b16 %v400
        %v810 = vunpack.c.h.b16 %v400
        %v811 = vunpack.c.l.b16 %v401
        %v812 = vunpack.c.h.b16 %v401
        %v813 = vunpack.c.l.b16 %v402
        %v814 = vunpack.c.h.b16 %v402
        %v815 = vunpack.c.l.b16 %v403
        %v816 = vunpack.c.h.b16 %v403
        %v817 = vunpack.c.l.b16 %v404
        %v818 = vunpack.c.h.b16 %v404
        %v819 = vunpack.c.l.b16 %v405
        %v820 = vunpack.c.h.b16 %v405
        %v821 = vunpack.c.l.b16 %v406
        %v822 = vunpack.c.h.b16 %v406
        %v823 = vunpack.c.l.b16 %v407
        %v824 = vunpack.c.h.b16 %v407
        %v825 = vunpack.c.l.b16 %v408
        %v826 = vunpack.c.h.b16 %v408
        %v827 = vunpack.c.l.b16 %v409
        %v828 = vunpack.c.h.b16 %v409
        %v829 = vunpack.c.l.b16 %v410
        %v830 = vunpack.c.h.b16 %v410
        %v831 = vunpack.c.l.b16 %v411
        %v832 = vunpack.c.h.b16 %v411
        %v833 = vunpack.c.l.b16 %v412
        %v834 = vunpack.c.h.b16 %v412
        %v835 = vunpack.c.l.b16 %v413
        %v836 = vunpack.c.h.b16 %v413
        %v837 = vunpack.c.l.b16 %v414
        %v838 = vunpack.c.h.b16 %v414
        %v839 = vpack.c.b16 %v587, %v583
        %v840 = vpack.c.b16 %v588, %v584
        %v841 = vpack.c.b16 %v589, %v585
        %v842 = vpack.c.b16 %v590, %v586
        %v843 = vpack.c.b16 %v595, %v591
        %v844 = vpack.c.b16 %v596, %v592
        %v845 = vpack.c.b16 %v597, %v593
        %v846 = vpack.c.b16 %v598, %v594
        %v847 = vpack.c.b16 %v603, %v599
        %v848 = vpack.c.b16 %v604, %v600
        %v849 = vpack.c.b16 %v605, %v601
        %v850 = vpack.c.b16 %v606, %v602
        %v851 = vpack.c.b16 %v611, %v607
        %v852 = vpack.c.b16 %v612, %v608
        %v853 = vpack.c.b16 %v613, %v609
        %v854 = vpack.c.b16 %v614, %v610
        %v855 = vpack.c.b16 %v619, %v615
        %v856 = vpack.c.b16 %v620, %v616
        %v857 = vpack.c.b16 %v621, %v617
        %v858 = vpack.c.b16 %v622, %v618
        %v859 = vpack.c.b16 %v627, %v623
        %v860 = vpack.c.b16 %v628, %v624
        %v861 = vpack.c.b16 %v629, %v625
        %v862 = vpack.c.b16 %v630, %v626
        %v863 = vpack.c.b16 %v635, %v631
        %v864 = vpack.c.b16 %v636, %v632
        %v865 = vpack.c.b16 %v637, %v633
        %v866 = vpack.c.b16 %v638, %v634
        %v867 = vpack.c.b16 %v643, %v639
        %v868 = vpack.c.b16 %v644, %v640
        %v869 = vpack.c.b16 %v645, %v641
        %v870 = vpack.c.b16 %v646, %v642
        %v871 = vpack.c.b16 %v651, %v647
        %v872 = vpack.c.b16 %v652, %v648
        %v873 = vpack.c.b16 %v653, %v649
        %v874 = vpack.c.b16 %v654, %v650
        %v875 = vpack.c.b16 %v659, %v655
        %v876 = vpack.c.b16 %v660, %v656
        %v877 = vpack.c.b16 %v661, %v657
        %v878 = vpack.c.b16 %v662, %v658
        %v879 = vpack.c.b16 %v667, %v663
        %v880 = vpack.c.b16 %v668, %v664
        %v881 = vpack.c.b16 %v669, %v665
        %v882 = vpack.c.b16 %v670, %v666
        %v883 = vpack.c.b16 %v675, %v671
        %v884 = vpack.c.b16 %v676, %v672
        %v885 = vpack.c.b16 %v677, %v673
        %v886 = vpack.c.b16 %v678, %v674
        %v887 = vpack.c.b16 %v683, %v679
        %v888 = vpack.c.b16 %v684, %v680
        %v889 = vpack.c.b16 %v685, %v681
        %v890 = vpack.c.b16 %v686, %v682
        %v891 = vpack.c.b16 %v691, %v687
        %v892 = vpack.c.b16 %v692, %v688
        %v893 = vpack.c.b16 %v693, %v689
        %v894 = vpack.c.b16 %v694, %v690
        %v895 = vpack.c.b16 %v699, %v695
        %v896 = vpack.c.b16 %v700, %v696
        %v897 = vpack.c.b16 %v701, %v697
        %v898 = vpack.c.b16 %v702, %v698
        %v899 = vpack.c.b16 %v707, %v703
        %v900 = vpack.c.b16 %v708, %v704
        %v901 = vpack.c.b16 %v709, %v705
        %v902 = vpack.c.b16 %v710, %v706
        %v903 = vpack.c.b16 %v715, %v711
        %v904 = vpack.c.b16 %v716, %v712
        %v905 = vpack.c.b16 %v717, %v713
        %v906 = vpack.c.b16 %v718, %v714
        %v907 = vpack.c.b16 %v723, %v719
        %v908 = vpack.c.b16 %v724, %v720
        %v909 = vpack.c.b16 %v725, %v721
        %v910 = vpack.c.b16 %v726, %v722
        %v911 = vpack.c.b16 %v731, %v727
        %v912 = vpack.c.b16 %v732, %v728
        %v913 = vpack.c.b16 %v733, %v729
        %v914 = vpack.c.b16 %v734, %v730
        %v915 = vpack.c.b16 %v739, %v735
        %v916 = vpack.c.b16 %v740, %v736
        %v917 = vpack.c.b16 %v741, %v737
        %v918 = vpack.c.b16 %v742, %v738
        %v919 = vpack.c.b16 %v747, %v743
        %v920 = vpack.c.b16 %v748, %v744
        %v921 = vpack.c.b16 %v749, %v745
        %v922 = vpack.c.b16 %v750, %v746
        %v923 = vpack.c.b16 %v755, %v751
        %v924 = vpack.c.b16 %v756, %v752
        %v925 = vpack.c.b16 %v757, %v753
        %v926 = vpack.c.b16 %v758, %v754
        %v927 = vpack.c.b16 %v763, %v759
        %v928 = vpack.c.b16 %v764, %v760
        %v929 = vpack.c.b16 %v765, %v761
        %v930 = vpack.c.b16 %v766, %v762
        %v931 = vpack.c.b16 %v771, %v767
        %v932 = vpack.c.b16 %v772, %v768
        %v933 = vpack.c.b16 %v773, %v769
        %v934 = vpack.c.b16 %v774, %v770
        %v935 = vpack.c.b16 %v779, %v775
        %v936 = vpack.c.b16 %v780, %v776
        %v937 = vpack.c.b16 %v781, %v777
        %v938 = vpack.c.b16 %v782, %v778
        %v939 = vpack.c.b16 %v787, %v783
        %v940 = vpack.c.b16 %v788, %v784
        %v941 = vpack.c.b16 %v789, %v785
        %v942 = vpack.c.b16 %v790, %v786
        %v943 = vpack.c.b16 %v795, %v791
        %v944 = vpack.c.b16 %v796, %v792
        %v945 = vpack.c.b16 %v797, %v793
        %v946 = vpack.c.b16 %v798, %v794
        %v947 = vpack.c.b16 %v803, %v799
        %v948 = vpack.c.b16 %v804, %v800
        %v949 = vpack.c.b16 %v805, %v801
        %v950 = vpack.c.b16 %v806, %v802
        %v951 = vpack.c.b16 %v811, %v807
        %v952 = vpack.c.b16 %v812, %v808
        %v953 = vpack.c.b16 %v813, %v809
        %v954 = vpack.c.b16 %v814, %v810
        %v955 = vpack.c.b16 %v819, %v815
        %v956 = vpack.c.b16 %v820, %v816
        %v957 = vpack.c.b16 %v821, %v817
        %v958 = vpack.c.b16 %v822, %v818
        %v959 = vpack.c.b16 %v827, %v823
        %v960 = vpack.c.b16 %v828, %v824
        %v961 = vpack.c.b16 %v829, %v825
        %v962 = vpack.c.b16 %v830, %v826
        %v963 = vpack.c.b16 %v835, %v831
        %v964 = vpack.c.b16 %v836, %v832
        %v965 = vpack.c.b16 %v837, %v833
        %v966 = vpack.c.b16 %v838, %v834
        %1095 = vmatprep.subr.bf16.mxu0 %v840
        %1096 = vmatpush1.bf16.msra.mxu0 %v839
        %1097 = vmatprep.subr.bf16.mxu0 %v844
        %1098 = vmatpush1.bf16.msra.mxu0 %v843
        %1099 = vmatprep.subr.bf16.mxu0 %v848
        %1100 = vmatpush1.bf16.msra.mxu0 %v847
        %1101 = vmatprep.subr.bf16.mxu0 %v852
        %1102 = vmatpush1.bf16.msra.mxu0 %v851
        %1103 = vmatprep.subr.bf16.mxu0 %v856
        %1104 = vmatpush1.bf16.msra.mxu0 %v855
        %1105 = vmatprep.subr.bf16.mxu0 %v860
        %1106 = vmatpush1.bf16.msra.mxu0 %v859
        %1107 = vmatprep.subr.bf16.mxu0 %v864
        %1108 = vmatpush1.bf16.msra.mxu0 %v863
        %1109 = vmatprep.subr.bf16.mxu0 %v868
        %1110 = vmatpush1.bf16.msra.mxu0 %v867
        %1111 = vmatprep.subr.bf16.mxu0 %v872
        %1112 = vmatpush1.bf16.msra.mxu0 %v871
        %1113 = vmatprep.subr.bf16.mxu0 %v876
        %1114 = vmatpush1.bf16.msra.mxu0 %v875
        %1115 = vmatprep.subr.bf16.mxu0 %v880
        %1116 = vmatpush1.bf16.msra.mxu0 %v879
        %1117 = vmatprep.subr.bf16.mxu0 %v884
        %1118 = vmatpush1.bf16.msra.mxu0 %v883
        %1119 = vmatprep.subr.bf16.mxu0 %v888
        %1120 = vmatpush1.bf16.msra.mxu0 %v887
        %1121 = vmatprep.subr.bf16.mxu0 %v892
        %1122 = vmatpush1.bf16.msra.mxu0 %v891
        %1123 = vmatprep.subr.bf16.mxu0 %v896
        %1124 = vmatpush1.bf16.msra.mxu0 %v895
        %1125 = vmatprep.subr.bf16.mxu0 %v900
        %1126 = vmatpush1.bf16.msra.mxu0 %v899
        %1127 = vmatprep.mubr.bf16.mxu0 %v440
        %1128 = vmatmul.mubr.bf16.gmra.mrb[0].mxu0 %v439
        %v1129 = vpop.f32.mrb[0].mxu0
        %v1130 = vadd.f32 0.0, %v1129
        %v1131 = vpop.f32.mrb[0].mxu0
        %v1132 = vadd.f32 0.0, %v1131
        %v1133 = vpop.f32.mrb[0].mxu0
        %v1134 = vadd.f32 0.0, %v1133
        %v1135 = vpop.f32.mrb[0].mxu0
        %v1136 = vadd.f32 0.0, %v1135
        %1137 = vmatprep.mubr.bf16.mxu0 %v444
        %1138 = vmatmul.mubr.bf16.gmra.mrb[0].mxu0 %v443
        %v1139 = vpop.f32.mrb[0].mxu0
        %v1140 = vadd.f32 0.0, %v1139
        %v1141 = vpop.f32.mrb[0].mxu0
        %v1142 = vadd.f32 0.0, %v1141
        %v1143 = vpop.f32.mrb[0].mxu0
        %v1144 = vadd.f32 0.0, %v1143
        %v1145 = vpop.f32.mrb[0].mxu0
        %v1146 = vadd.f32 0.0, %v1145
        %1147 = vdwg.mxu0
        %1148 = vmatprep.subr.bf16.mxu0 %v904
        %1149 = vmatpush1.bf16.msra.mxu0 %v903
        %1150 = vmatprep.subr.bf16.mxu0 %v908
        %1151 = vmatpush1.bf16.msra.mxu0 %v907
        %1152 = vmatprep.subr.bf16.mxu0 %v912
        %1153 = vmatpush1.bf16.msra.mxu0 %v911
        %1154 = vmatprep.subr.bf16.mxu0 %v916
        %1155 = vmatpush1.bf16.msra.mxu0 %v915
        %1156 = vmatprep.subr.bf16.mxu0 %v920
        %1157 = vmatpush1.bf16.msra.mxu0 %v919
        %1158 = vmatprep.subr.bf16.mxu0 %v924
        %1159 = vmatpush1.bf16.msra.mxu0 %v923
        %1160 = vmatprep.subr.bf16.mxu0 %v928
        %1161 = vmatpush1.bf16.msra.mxu0 %v927
        %1162 = vmatprep.subr.bf16.mxu0 %v932
        %1163 = vmatpush1.bf16.msra.mxu0 %v931
        %1164 = vmatprep.subr.bf16.mxu0 %v936
        %1165 = vmatpush1.bf16.msra.mxu0 %v935
        %1166 = vmatprep.subr.bf16.mxu0 %v940
        %1167 = vmatpush1.bf16.msra.mxu0 %v939
        %1168 = vmatprep.subr.bf16.mxu0 %v944
        %1169 = vmatpush1.bf16.msra.mxu0 %v943
        %1170 = vmatprep.subr.bf16.mxu0 %v948
        %1171 = vmatpush1.bf16.msra.mxu0 %v947
        %1172 = vmatprep.subr.bf16.mxu0 %v952
        %1173 = vmatpush1.bf16.msra.mxu0 %v951
        %1174 = vmatprep.subr.bf16.mxu0 %v956
        %1175 = vmatpush1.bf16.msra.mxu0 %v955
        %1176 = vmatprep.subr.bf16.mxu0 %v960
        %1177 = vmatpush1.bf16.msra.mxu0 %v959
        %1178 = vmatprep.subr.bf16.mxu0 %v964
        %1179 = vmatpush1.bf16.msra.mxu0 %v963
        %1180 = vmatprep.mubr.bf16.mxu0 %v442
        %1181 = vmatmul.mubr.bf16.gmra.mrb[0].mxu0 %v441
        %v1182 = vpop.f32.mrb[0].mxu0
        %v1183 = vadd.f32 %v1130, %v1182
        %v1184 = vpop.f32.mrb[0].mxu0
        %v1185 = vadd.f32 %v1132, %v1184
        %v1186 = vpop.f32.mrb[0].mxu0
        %v1187 = vadd.f32 %v1134, %v1186
        %v1188 = vpop.f32.mrb[0].mxu0
        %v1189 = vadd.f32 %v1136, %v1188
        %1190 = vmatprep.mubr.bf16.mxu0 %v446
        %1191 = vmatmul.mubr.bf16.gmra.mrb[0].mxu0 %v445
        %v1192 = vpop.f32.mrb[0].mxu0
        %v1193 = vadd.f32 %v1140, %v1192
        %v1194 = vpop.f32.mrb[0].mxu0
        %v1195 = vadd.f32 %v1142, %v1194
        %v1196 = vpop.f32.mrb[0].mxu0
        %v1197 = vadd.f32 %v1144, %v1196
        %v1198 = vpop.f32.mrb[0].mxu0
        %v1199 = vadd.f32 %v1146, %v1198
        %1200 = vdwg.mxu0
        %1201 = vmatprep.subr.bf16.mxu0 %v842
        %1202 = vmatpush1.bf16.msra.mxu0 %v841
        %1203 = vmatprep.subr.bf16.mxu0 %v846
        %1204 = vmatpush1.bf16.msra.mxu0 %v845
        %1205 = vmatprep.subr.bf16.mxu0 %v850
        %1206 = vmatpush1.bf16.msra.mxu0 %v849
        %1207 = vmatprep.subr.bf16.mxu0 %v854
        %1208 = vmatpush1.bf16.msra.mxu0 %v853
        %1209 = vmatprep.subr.bf16.mxu0 %v858
        %1210 = vmatpush1.bf16.msra.mxu0 %v857
        %1211 = vmatprep.subr.bf16.mxu0 %v862
        %1212 = vmatpush1.bf16.msra.mxu0 %v861
        %1213 = vmatprep.subr.bf16.mxu0 %v866
        %1214 = vmatpush1.bf16.msra.mxu0 %v865
        %1215 = vmatprep.subr.bf16.mxu0 %v870
        %1216 = vmatpush1.bf16.msra.mxu0 %v869
        %1217 = vmatprep.subr.bf16.mxu0 %v874
        %1218 = vmatpush1.bf16.msra.mxu0 %v873
        %1219 = vmatprep.subr.bf16.mxu0 %v878
        %1220 = vmatpush1.bf16.msra.mxu0 %v877
        %1221 = vmatprep.subr.bf16.mxu0 %v882
        %1222 = vmatpush1.bf16.msra.mxu0 %v881
        %1223 = vmatprep.subr.bf16.mxu0 %v886
        %1224 = vmatpush1.bf16.msra.mxu0 %v885
        %1225 = vmatprep.subr.bf16.mxu0 %v890
        %1226 = vmatpush1.bf16.msra.mxu0 %v889
        %1227 = vmatprep.subr.bf16.mxu0 %v894
        %1228 = vmatpush1.bf16.msra.mxu0 %v893
        %1229 = vmatprep.subr.bf16.mxu0 %v898
        %1230 = vmatpush1.bf16.msra.mxu0 %v897
        %1231 = vmatprep.subr.bf16.mxu0 %v902
        %1232 = vmatpush1.bf16.msra.mxu0 %v901
        %1233 = vmatprep.mubr.bf16.mxu0 %v440
        %1234 = vmatmul.mubr.bf16.gmra.mrb[0].mxu0 %v439
        %v1235 = vpop.f32.mrb[0].mxu0
        %v1236 = vadd.f32 0.0, %v1235
        %v1237 = vpop.f32.mrb[0].mxu0
        %v1238 = vadd.f32 0.0, %v1237
        %v1239 = vpop.f32.mrb[0].mxu0
        %v1240 = vadd.f32 0.0, %v1239
        %v1241 = vpop.f32.mrb[0].mxu0
        %v1242 = vadd.f32 0.0, %v1241
        %1243 = vmatprep.mubr.bf16.mxu0 %v444
        %1244 = vmatmul.mubr.bf16.gmra.mrb[0].mxu0 %v443
        %v1245 = vpop.f32.mrb[0].mxu0
        %v1246 = vadd.f32 0.0, %v1245
        %v1247 = vpop.f32.mrb[0].mxu0
        %v1248 = vadd.f32 0.0, %v1247
        %v1249 = vpop.f32.mrb[0].mxu0
        %v1250 = vadd.f32 0.0, %v1249
        %v1251 = vpop.f32.mrb[0].mxu0
        %v1252 = vadd.f32 0.0, %v1251
        %1253 = vdwg.mxu0
        %1254 = vmatprep.subr.bf16.mxu0 %v906
        %1255 = vmatpush1.bf16.msra.mxu0 %v905
        %1256 = vmatprep.subr.bf16.mxu0 %v910
        %1257 = vmatpush1.bf16.msra.mxu0 %v909
        %1258 = vmatprep.subr.bf16.mxu0 %v914
        %1259 = vmatpush1.bf16.msra.mxu0 %v913
        %1260 = vmatprep.subr.bf16.mxu0 %v918
        %1261 = vmatpush1.bf16.msra.mxu0 %v917
        %1262 = vmatprep.subr.bf16.mxu0 %v922
        %1263 = vmatpush1.bf16.msra.mxu0 %v921
        %1264 = vmatprep.subr.bf16.mxu0 %v926
        %1265 = vmatpush1.bf16.msra.mxu0 %v925
        %1266 = vmatprep.subr.bf16.mxu0 %v930
        %1267 = vmatpush1.bf16.msra.mxu0 %v929
        %1268 = vmatprep.subr.bf16.mxu0 %v934
        %1269 = vmatpush1.bf16.msra.mxu0 %v933
        %1270 = vmatprep.subr.bf16.mxu0 %v938
        %1271 = vmatpush1.bf16.msra.mxu0 %v937
        %1272 = vmatprep.subr.bf16.mxu0 %v942
        %1273 = vmatpush1.bf16.msra.mxu0 %v941
        %1274 = vmatprep.subr.bf16.mxu0 %v946
        %1275 = vmatpush1.bf16.msra.mxu0 %v945
        %1276 = vmatprep.subr.bf16.mxu0 %v950
        %1277 = vmatpush1.bf16.msra.mxu0 %v949
        %1278 = vmatprep.subr.bf16.mxu0 %v954
        %1279 = vmatpush1.bf16.msra.mxu0 %v953
        %1280 = vmatprep.subr.bf16.mxu0 %v958
        %1281 = vmatpush1.bf16.msra.mxu0 %v957
        %1282 = vmatprep.subr.bf16.mxu0 %v962
        %1283 = vmatpush1.bf16.msra.mxu0 %v961
        %1284 = vmatprep.subr.bf16.mxu0 %v966
        %1285 = vmatpush1.bf16.msra.mxu0 %v965
        %1286 = vmatprep.mubr.bf16.mxu0 %v442
        %1287 = vmatmul.mubr.bf16.gmra.mrb[0].mxu0 %v441
        %v1288 = vpop.f32.mrb[0].mxu0
        %v1289 = vadd.f32 %v1236, %v1288
        %v1290 = vpop.f32.mrb[0].mxu0
        %v1291 = vadd.f32 %v1238, %v1290
        %v1292 = vpop.f32.mrb[0].mxu0
        %v1293 = vadd.f32 %v1240, %v1292
        %v1294 = vpop.f32.mrb[0].mxu0
        %v1295 = vadd.f32 %v1242, %v1294
        %1296 = vmatprep.mubr.bf16.mxu0 %v446
        %1297 = vmatmul.mubr.bf16.gmra.mrb[0].mxu0 %v445
        %v1298 = vpop.f32.mrb[0].mxu0
        %v1299 = vadd.f32 %v1246, %v1298
        %v1300 = vpop.f32.mrb[0].mxu0
        %v1301 = vadd.f32 %v1248, %v1300
        %v1302 = vpop.f32.mrb[0].mxu0
        %v1303 = vadd.f32 %v1250, %v1302
        %v1304 = vpop.f32.mrb[0].mxu0
        %v1305 = vadd.f32 %v1252, %v1304
        %1306 = vdwg.mxu0
        %v1307 = vadd.f32 %v263, %v1183
        %v1308 = vadd.f32 %v264, %v1185
        %v1309 = vadd.f32 %v265, %v1289
        %v1310 = vadd.f32 %v266, %v1291
        %v1311 = vadd.f32 %v267, %v1187
        %v1312 = vadd.f32 %v268, %v1189
        %v1313 = vadd.f32 %v269, %v1293
        %v1314 = vadd.f32 %v270, %v1295
        %v1315 = vadd.f32 %v271, %v1193
        %v1316 = vadd.f32 %v272, %v1195
        %v1317 = vadd.f32 %v273, %v1299
        %v1318 = vadd.f32 %v274, %v1301
        %v1319 = vadd.f32 %v275, %v1197
        %v1320 = vadd.f32 %v276, %v1199
        %v1321 = vadd.f32 %v277, %v1303
        %v1322 = vadd.f32 %v278, %v1305
        %1323 = vst [vmem:[#allocation2] sm:$0xff] %v1307
        %1324 = vst [vmem:[#allocation2 + $0x8] sm:$0xff] %v1308
        %1325 = vst [vmem:[#allocation2 + $0x10] sm:$0xff] %v1309
        %1326 = vst [vmem:[#allocation2 + $0x18] sm:$0xff] %v1310
        %1327 = vst [vmem:[#allocation2 + $0x20] sm:$0xff] %v1311
        %1328 = vst [vmem:[#allocation2 + $0x28] sm:$0xff] %v1312
        %1329 = vst [vmem:[#allocation2 + $0x30] sm:$0xff] %v1313
        %1330 = vst [vmem:[#allocation2 + $0x38] sm:$0xff] %v1314
        %1331 = vst [vmem:[#allocation2 + $0x40] sm:$0xff] %v1315
        %1332 = vst [vmem:[#allocation2 + $0x48] sm:$0xff] %v1316
        %1333 = vst [vmem:[#allocation2 + $0x50] sm:$0xff] %v1317
        %1334 = vst [vmem:[#allocation2 + $0x58] sm:$0xff] %v1318
        %1335 = vst [vmem:[#allocation2 + $0x60] sm:$0xff] %v1319
        %1336 = vst [vmem:[#allocation2 + $0x68] sm:$0xff] %v1320
        %1337 = vst [vmem:[#allocation2 + $0x70] sm:$0xff] %v1321
        %1338 = vst [vmem:[#allocation2 + $0x78] sm:$0xff] %v1322
        %p1339 = scmp.eq.s32.totalorder %s15, 7
        // Predicated region
        $region64: #{discriminator_forward.8} parent=54 // pred_check
          %p1340 = pneg %p1339
        $region65: #{discriminator_forward.8} parent=54 // pred_check_branch
          %1342 = sbr.rel (%p1340) target = $region67
        $region66: #{discriminator_forward.8} parent=54 // pred_region
          %v1343 = vld [vmem:[#allocation2] sm:$0xff]
          %v1344 = vld [vmem:[#allocation2 + $0x8] sm:$0xff]
          %v1345 = vld [vmem:[#allocation2 + $0x10] sm:$0xff]
          %v1346 = vld [vmem:[#allocation2 + $0x18] sm:$0xff]
          %v1347 = vld [vmem:[#allocation2 + $0x20] sm:$0xff]
          %v1348 = vld [vmem:[#allocation2 + $0x28] sm:$0xff]
          %v1349 = vld [vmem:[#allocation2 + $0x30] sm:$0xff]
          %v1350 = vld [vmem:[#allocation2 + $0x38] sm:$0xff]
          %v1351 = vld [vmem:[#allocation2 + $0x40] sm:$0xff]
          %v1352 = vld [vmem:[#allocation2 + $0x48] sm:$0xff]
          %v1353 = vld [vmem:[#allocation2 + $0x50] sm:$0xff]
          %v1354 = vld [vmem:[#allocation2 + $0x58] sm:$0xff]
          %v1355 = vld [vmem:[#allocation2 + $0x60] sm:$0xff]
          %v1356 = vld [vmem:[#allocation2 + $0x68] sm:$0xff]
          %v1357 = vld [vmem:[#allocation2 + $0x70] sm:$0xff]
          %v1358 = vld [vmem:[#allocation2 + $0x78] sm:$0xff]
          %v1359 = vadd.f32 %v1343, %v1347
          %v1360 = vadd.f32 %v1359, %v1351
          %v1361 = vadd.f32 %v1360, %v1355
          %v1362 = vrot.slane %v1361, 4
          %v1363 = vadd.f32 %v1361, %v1362
          %v1364 = vrot.slane %v1363, 2
          %v1365 = vadd.f32 %v1363, %v1364
          %v1366 = vrot.slane %v1365, 1
          %v1367 = vadd.f32 %v1365, %v1366
          %v1368 = vadd.f32 %v1344, %v1348
          %v1369 = vadd.f32 %v1368, %v1352
          %v1370 = vadd.f32 %v1369, %v1356
          %v1371 = vrot.slane %v1370, 4
          %v1372 = vadd.f32 %v1370, %v1371
          %v1373 = vrot.slane %v1372, 2
          %v1374 = vadd.f32 %v1372, %v1373
          %v1375 = vrot.slane %v1374, 1
          %v1376 = vadd.f32 %v1374, %v1375
          %v1377 = vadd.f32 %v1345, %v1349
          %v1378 = vadd.f32 %v1377, %v1353
          %v1379 = vadd.f32 %v1378, %v1357
          %v1380 = vrot.slane %v1379, 4
          %v1381 = vadd.f32 %v1379, %v1380
          %v1382 = vrot.slane %v1381, 2
          %v1383 = vadd.f32 %v1381, %v1382
          %v1384 = vrot.slane %v1383, 1
          %v1385 = vadd.f32 %v1383, %v1384
          %v1386 = vadd.f32 %v1346, %v1350
          %v1387 = vadd.f32 %v1386, %v1354
          %v1388 = vadd.f32 %v1387, %v1358
          %v1389 = vrot.slane %v1388, 4
          %v1390 = vadd.f32 %v1388, %v1389
          %v1391 = vrot.slane %v1390, 2
          %v1392 = vadd.f32 %v1390, %v1391
          %v1393 = vrot.slane %v1392, 1
          %v1394 = vadd.f32 %v1392, %v1393
          %v1395 = vmul.f32 %v1367, 0.055555556
          %v1396 = vmul.f32 %v1376, 0.055555556
          %v1397 = vmul.f32 %v1385, 0.055555556
          %v1398 = vmul.f32 %v1394, 0.055555556
          %v1399 = vmul.f32 %v1343, %v1343
          %v1400 = vmul.f32 %v1344, %v1344
          %v1401 = vmul.f32 %v1345, %v1345
          %v1402 = vmul.f32 %v1346, %v1346
          %v1403 = vmul.f32 %v1347, %v1347
          %v1404 = vmul.f32 %v1348, %v1348
          %v1405 = vmul.f32 %v1349, %v1349
          %v1406 = vmul.f32 %v1350, %v1350
          %v1407 = vmul.f32 %v1351, %v1351
          %v1408 = vmul.f32 %v1352, %v1352
          %v1409 = vmul.f32 %v1353, %v1353
          %v1410 = vmul.f32 %v1354, %v1354
          %v1411 = vmul.f32 %v1355, %v1355
          %v1412 = vmul.f32 %v1356, %v1356
          %v1413 = vmul.f32 %v1357, %v1357
          %v1414 = vmul.f32 %v1358, %v1358
          %v1415 = vadd.f32 %v1399, %v1403
          %v1416 = vadd.f32 %v1415, %v1407
          %v1417 = vadd.f32 %v1416, %v1411
          %v1418 = vrot.slane %v1417, 4
          %v1419 = vadd.f32 %v1417, %v1418
          %v1420 = vrot.slane %v1419, 2
          %v1421 = vadd.f32 %v1419, %v1420
          %v1422 = vrot.slane %v1421, 1
          %v1423 = vadd.f32 %v1421, %v1422
          %v1424 = vadd.f32 %v1400, %v1404
          %v1425 = vadd.f32 %v1424, %v1408
          %v1426 = vadd.f32 %v1425, %v1412
          %v1427 = vrot.slane %v1426, 4
          %v1428 = vadd.f32 %v1426, %v1427
          %v1429 = vrot.slane %v1428, 2
          %v1430 = vadd.f32 %v1428, %v1429
          %v1431 = vrot.slane %v1430, 1
          %v1432 = vadd.f32 %v1430, %v1431
          %v1433 = vadd.f32 %v1401, %v1405
          %v1434 = vadd.f32 %v1433, %v1409
          %v1435 = vadd.f32 %v1434, %v1413
          %v1436 = vrot.slane %v1435, 4
          %v1437 = vadd.f32 %v1435, %v1436
          %v1438 = vrot.slane %v1437, 2
          %v1439 = vadd.f32 %v1437, %v1438
          %v1440 = vrot.slane %v1439, 1
          %v1441 = vadd.f32 %v1439, %v1440
          %v1442 = vadd.f32 %v1402, %v1406
          %v1443 = vadd.f32 %v1442, %v1410
          %v1444 = vadd.f32 %v1443, %v1414
          %v1445 = vrot.slane %v1444, 4
          %v1446 = vadd.f32 %v1444, %v1445
          %v1447 = vrot.slane %v1446, 2
          %v1448 = vadd.f32 %v1446, %v1447
          %v1449 = vrot.slane %v1448, 1
          %v1450 = vadd.f32 %v1448, %v1449
          %v1451 = vmul.f32 %v1423, 0.055555556
          %v1452 = vmul.f32 %v1432, 0.055555556
          %v1453 = vmul.f32 %v1441, 0.055555556
          %v1454 = vmul.f32 %v1450, 0.055555556
          %v1455 = vmul.f32 %v1395, %v1395
          %v1456 = vmul.f32 %v1396, %v1396
          %v1457 = vmul.f32 %v1397, %v1397
          %v1458 = vmul.f32 %v1398, %v1398
          %v1459 = vsub.f32 %v1451, %v1455
          %v1460 = vsub.f32 %v1452, %v1456
          %v1461 = vsub.f32 %v1453, %v1457
          %v1462 = vsub.f32 %v1454, %v1458
          %v1463 = vmax.f32 %v1459, 0.0
          %v1464 = vmax.f32 %v1460, 0.0
          %v1465 = vmax.f32 %v1461, 0.0
          %v1466 = vmax.f32 %v1462, 0.0
          %v1467 = vld [vmem:[%s2] sm:$0xf]
          %v1468 = vadd.f32 %v1463, 1e-05
          %v1469 = vadd.f32 %v1464, 1e-05
          %v1470 = vadd.f32 %v1465, 1e-05
          %v1471 = vadd.f32 %v1466, 1e-05
          %v1472 = vrsqrt.pop %v1468
          %v1473 = vrsqrt.pop %v1469
          %v1474 = vrsqrt.pop %v1470
          %v1475 = vrsqrt.pop %v1471
          %v1480 = vcombine.low %v1472, %v1473
          %v1481 = vcombine.low %v1474, %v1475
          %v1483 = vunpack.c.l.s4 1966171168
          %v1484 = vunpack.c.0.s8 %v1483
          %v1485 = vlaneseq
          %v1486 = vshrl.u32 %v1485, 7
          %v1487 = vsub.s32 %v1484, %v1486
          %v1488 = vrot.slane %v1480, %v1487
          %v1490 = vunpack.c.l.s4 1966171168
          %v1491 = vunpack.c.0.s8 %v1490
          %v1492 = vlaneseq
          %v1493 = vshrl.u32 %v1492, 7
          %v1494 = vsub.s32 %v1491, %v1493
          %v1495 = vrot.slane %v1481, %v1494
          %v1496 = vcombine.low %v1488, %v1495
          %v1498 = vunpack.c.l.s4 1966171168
          %v1499 = vunpack.c.0.s8 %v1498
          %v1500 = vlaneseq
          %v1501 = vshrl.u32 %v1500, 7
          %v1502 = vsub.s32 %v1499, %v1501
          %v1503 = vrot.slane %v1496, %v1502
          %v1505 = vmul.f32 %v1467, %v1503
          %v1506 = vld [vmem:[%s3] sm:$0xf]
          %v1508 = vlaneseq
          %v1509 = vshrl.u32 %v1508, 7
          %v1510 = vsub.s32 0, %v1509
          %v1511 = vrot.slane %v1505, %v1510
          %v1512 = vlaneseq
          %v1513 = vshrl.u32 %v1512, 7
          %v1514 = vsub.s32 1, %v1513
          %v1515 = vrot.slane %v1505, %v1514
          %v1516 = vlaneseq
          %v1517 = vshrl.u32 %v1516, 7
          %v1518 = vsub.s32 2, %v1517
          %v1519 = vrot.slane %v1505, %v1518
          %v1520 = vlaneseq
          %v1521 = vshrl.u32 %v1520, 7
          %v1522 = vsub.s32 3, %v1521
          %v1523 = vrot.slane %v1505, %v1522
          %v1528 = vmul.f32 %v1395, %v1511
          %v1529 = vmul.f32 %v1396, %v1515
          %v1530 = vmul.f32 %v1397, %v1519
          %v1531 = vmul.f32 %v1398, %v1523
          %v1536 = vcombine.low %v1528, %v1529
          %v1537 = vcombine.low %v1530, %v1531
          %v1539 = vunpack.c.l.s4 1966171168
          %v1540 = vunpack.c.0.s8 %v1539
          %v1541 = vlaneseq
          %v1542 = vshrl.u32 %v1541, 7
          %v1543 = vsub.s32 %v1540, %v1542
          %v1544 = vrot.slane %v1536, %v1543
          %v1546 = vunpack.c.l.s4 1966171168
          %v1547 = vunpack.c.0.s8 %v1546
          %v1548 = vlaneseq
          %v1549 = vshrl.u32 %v1548, 7
          %v1550 = vsub.s32 %v1547, %v1549
          %v1551 = vrot.slane %v1537, %v1550
          %v1552 = vcombine.low %v1544, %v1551
          %v1554 = vunpack.c.l.s4 1966171168
          %v1555 = vunpack.c.0.s8 %v1554
          %v1556 = vlaneseq
          %v1557 = vshrl.u32 %v1556, 7
          %v1558 = vsub.s32 %v1555, %v1557
          %v1559 = vrot.slane %v1552, %v1558
          %v1561 = vsub.f32 %v1506, %v1559
          %v1562 = vmul.f32 %v1343, %v1511
          %v1563 = vmul.f32 %v1344, %v1515
          %v1564 = vmul.f32 %v1345, %v1519
          %v1565 = vmul.f32 %v1346, %v1523
          %v1566 = vmul.f32 %v1347, %v1511
          %v1567 = vmul.f32 %v1348, %v1515
          %v1568 = vmul.f32 %v1349, %v1519
          %v1569 = vmul.f32 %v1350, %v1523
          %v1570 = vmul.f32 %v1351, %v1511
          %v1571 = vmul.f32 %v1352, %v1515
          %v1572 = vmul.f32 %v1353, %v1519
          %v1573 = vmul.f32 %v1354, %v1523
          %v1574 = vmul.f32 %v1355, %v1511
          %v1575 = vmul.f32 %v1356, %v1515
          %v1576 = vmul.f32 %v1357, %v1519
          %v1577 = vmul.f32 %v1358, %v1523
          %v1579 = vlaneseq
          %v1580 = vshrl.u32 %v1579, 7
          %v1581 = vsub.s32 0, %v1580
          %v1582 = vrot.slane %v1561, %v1581
          %v1583 = vlaneseq
          %v1584 = vshrl.u32 %v1583, 7
          %v1585 = vsub.s32 1, %v1584
          %v1586 = vrot.slane %v1561, %v1585
          %v1587 = vlaneseq
          %v1588 = vshrl.u32 %v1587, 7
          %v1589 = vsub.s32 2, %v1588
          %v1590 = vrot.slane %v1561, %v1589
          %v1591 = vlaneseq
          %v1592 = vshrl.u32 %v1591, 7
          %v1593 = vsub.s32 3, %v1592
          %v1594 = vrot.slane %v1561, %v1593
          %v1599 = vadd.f32 %v1562, %v1582
          %v1600 = vadd.f32 %v1563, %v1586
          %v1601 = vadd.f32 %v1564, %v1590
          %v1602 = vadd.f32 %v1565, %v1594
          %v1603 = vadd.f32 %v1566, %v1582
          %v1604 = vadd.f32 %v1567, %v1586
          %v1605 = vadd.f32 %v1568, %v1590
          %v1606 = vadd.f32 %v1569, %v1594
          %v1607 = vadd.f32 %v1570, %v1582
          %v1608 = vadd.f32 %v1571, %v1586
          %v1609 = vadd.f32 %v1572, %v1590
          %v1610 = vadd.f32 %v1573, %v1594
          %v1611 = vadd.f32 %v1574, %v1582
          %v1612 = vadd.f32 %v1575, %v1586
          %v1613 = vadd.f32 %v1576, %v1590
          %v1614 = vadd.f32 %v1577, %v1594
          %vm1615 = vcmp.ge.f32.partialorder %v1599, 0.0
          %vm1616 = vcmp.ge.f32.partialorder %v1600, 0.0
          %vm1617 = vcmp.ge.f32.partialorder %v1601, 0.0
          %vm1618 = vcmp.ge.f32.partialorder %v1602, 0.0
          %vm1619 = vcmp.ge.f32.partialorder %v1603, 0.0
          %vm1620 = vcmp.ge.f32.partialorder %v1604, 0.0
          %vm1621 = vcmp.ge.f32.partialorder %v1605, 0.0
          %vm1622 = vcmp.ge.f32.partialorder %v1606, 0.0
          %vm1623 = vcmp.ge.f32.partialorder %v1607, 0.0
          %vm1624 = vcmp.ge.f32.partialorder %v1608, 0.0
          %vm1625 = vcmp.ge.f32.partialorder %v1609, 0.0
          %vm1626 = vcmp.ge.f32.partialorder %v1610, 0.0
          %vm1627 = vcmp.ge.f32.partialorder %v1611, 0.0
          %vm1628 = vcmp.ge.f32.partialorder %v1612, 0.0
          %vm1629 = vcmp.ge.f32.partialorder %v1613, 0.0
          %vm1630 = vcmp.ge.f32.partialorder %v1614, 0.0
          %v1631 = vmul.f32 %v1599, 0.2
          %v1632 = vmul.f32 %v1600, 0.2
          %v1633 = vmul.f32 %v1601, 0.2
          %v1634 = vmul.f32 %v1602, 0.2
          %v1635 = vmul.f32 %v1603, 0.2
          %v1636 = vmul.f32 %v1604, 0.2
          %v1637 = vmul.f32 %v1605, 0.2
          %v1638 = vmul.f32 %v1606, 0.2
          %v1639 = vmul.f32 %v1607, 0.2
          %v1640 = vmul.f32 %v1608, 0.2
          %v1641 = vmul.f32 %v1609, 0.2
          %v1642 = vmul.f32 %v1610, 0.2
          %v1643 = vmul.f32 %v1611, 0.2
          %v1644 = vmul.f32 %v1612, 0.2
          %v1645 = vmul.f32 %v1613, 0.2
          %v1646 = vmul.f32 %v1614, 0.2
          %v1647 = vsel %vm1615, %v1599, %v1631
          %v1648 = vsel %vm1616, %v1600, %v1632
          %v1649 = vsel %vm1617, %v1601, %v1633
          %v1650 = vsel %vm1618, %v1602, %v1634
          %v1651 = vsel %vm1619, %v1603, %v1635
          %v1652 = vsel %vm1620, %v1604, %v1636
          %v1653 = vsel %vm1621, %v1605, %v1637
          %v1654 = vsel %vm1622, %v1606, %v1638
          %v1655 = vsel %vm1623, %v1607, %v1639
          %v1656 = vsel %vm1624, %v1608, %v1640
          %v1657 = vsel %vm1625, %v1609, %v1641
          %v1658 = vsel %vm1626, %v1610, %v1642
          %v1659 = vsel %vm1627, %v1611, %v1643
          %v1660 = vsel %vm1628, %v1612, %v1644
          %v1661 = vsel %vm1629, %v1613, %v1645
          %v1662 = vsel %vm1630, %v1614, %v1646
          %v1663 = vpack.c.bf16 %v1651, %v1647
          %v1664 = vpack.c.bf16 %v1652, %v1648
          %v1665 = vpack.c.bf16 %v1653, %v1649
          %v1666 = vpack.c.bf16 %v1654, %v1650
          %v1667 = vpack.c.bf16 %v1659, %v1655
          %v1668 = vpack.c.bf16 %v1660, %v1656
          %v1669 = vpack.c.bf16 %v1661, %v1657
          %v1670 = vpack.c.bf16 %v1662, %v1658
          %v1679 = vunpack.c.l.b16 %v1663
          %v1680 = vunpack.c.l.b16 %v1664
          %v1681 = vunpack.c.l.b16 %v1665
          %v1682 = vunpack.c.l.b16 %v1666
          %v1683 = vunpack.c.h.b16 %v1663
          %v1684 = vunpack.c.h.b16 %v1664
          %v1685 = vunpack.c.h.b16 %v1665
          %v1686 = vunpack.c.h.b16 %v1666
          %v1687 = vunpack.c.l.b16 %v1667
          %v1688 = vunpack.c.l.b16 %v1668
          %v1689 = vunpack.c.l.b16 %v1669
          %v1690 = vunpack.c.l.b16 %v1670
          %v1691 = vunpack.c.h.b16 %v1667
          %v1692 = vunpack.c.h.b16 %v1668
          %v1693 = vunpack.c.h.b16 %v1669
          %v1694 = vunpack.c.h.b16 %v1670
          %v1695 = vpack.c.b16 %v1680, %v1679
          %v1696 = vpack.c.b16 %v1682, %v1681
          %v1697 = vpack.c.b16 %v1684, %v1683
          %v1698 = vpack.c.b16 %v1686, %v1685
          %v1699 = vpack.c.b16 %v1688, %v1687
          %v1700 = vpack.c.b16 %v1690, %v1689
          %v1701 = vpack.c.b16 %v1692, %v1691
          %v1702 = vpack.c.b16 %v1694, %v1693
          %1711 = vst [vmem:[%s4] sm:$0xff] %v1695
          %1712 = vst [vmem:[%s4 + $0x8] sm:$0xff] %v1696
          %1713 = vst [vmem:[%s4 + $0x10] sm:$0xff] %v1697
          %1714 = vst [vmem:[%s4 + $0x18] sm:$0xff] %v1698
          %1715 = vst [vmem:[%s4 + $0x20] sm:$0xff] %v1699
          %1716 = vst [vmem:[%s4 + $0x28] sm:$0xff] %v1700
          %1717 = vst [vmem:[%s4 + $0x30] sm:$0xff] %v1701
          %1718 = vst [vmem:[%s4 + $0x38] sm:$0xff] %v1702
        $region67: #{discriminator_forward.8} parent=54 // pred_fallthru
          _
        // Predicated region
        $region68: #{discriminator_forward.8} parent=54 // pred_check
          %p1719 = pneg %p122
        $region69: #{discriminator_forward.8} parent=54 // pred_check_branch
          %1721 = sbr.rel (%p1719) target = $region71
        $region70: #{discriminator_forward.8} parent=54 // pred_region
          _
        $region71: #{discriminator_forward.8} parent=54 // pred_fallthru
          _
        // Predicated region
        $region72: #{discriminator_forward.8} parent=54 // pred_check
          %p1722 = pneg %p122
        $region73: #{discriminator_forward.8} parent=54 // pred_check_branch
          %1724 = sbr.rel (%p1722) target = $region75
        $region74: #{discriminator_forward.8} parent=54 // pred_region
          _
        $region75: #{discriminator_forward.8} parent=54 // pred_fallthru
          _
      $region55: #{discriminator_forward.8} parent=5 // pred_fallthru
        _
      %p1725 = scmp.le.s32.totalorder 2, %s10
      // Predicated region
      $region76: #{discriminator_forward.8} parent=5 // pred_check
        %p1726 = pneg %p1725
      $region77: #{discriminator_forward.8} parent=5 // pred_check_branch
        %1728 = sbr.rel (%p1726) target = $region79
      $region78: #{discriminator_forward.8} parent=5 // pred_region
        %s1729 = ssub.s32 %s10, 2
      $region79: #{discriminator_forward.8} parent=5 // pred_fallthru
        _
    $region6: #{discriminator_forward.8} parent=1 // loop_footer
      %s14 = sadd.s32 1, %s10
    $region7: #{discriminator_forward.8} parent=1 // loop_footer_branch
      %9 = sbr.rel target = $region3
    $region8: #{discriminator_forward.8} parent=1 // loop_exit
      _

// kernel: discriminator_forward.9
$region0: #{discriminator_forward.9}
  #allocation0 [shape = 'u32[]', space=smem, size = 0x4, offset = 0x4, fixed_abs, tag = 'smem constant byte address 0x4 - core index']
  #allocation1 [shape = 'u32[144,128]{1,0:T(1,128)}', space=vmem, size = 0x12000, scoped, tag = 'internal scratch']
  #allocation2 [shape = 'f32[16,1]{1,0:T(8,128)}', space=vmem, size = 0x2000, scoped, tag = 'scratch operand']
  #allocation3 [shape = 'f32[1,1]{1,0:T(1,128)S(1)}', space=vmem, size = 0x200, scoped, tag = 'scoped memory for discriminator_forward.9']
  %s0 = inlined_call_operand.vmem [shape: bf16[16,8192], index: 0, kind: input, shape index: {}]
  %s1 = inlined_call_operand.vmem [shape: f32[1,8192], index: 1, kind: input, shape index: {}]
  %s2 = inlined_call_operand.<no memory space> [shape: f32[1,1], index: 2, kind: input, shape index: {}]
  %s3 = inlined_call_operand.vmem [shape: f32[16,1], index: 3, kind: output, shape index: {}]
  %s4 = sld [smem:[#allocation0]]
  $region76: #{discriminator_forward.9} parent=0
    _
  %s6 = ssub.s32 1, %s4
  %s7 = scalar_select 0, %s6, %s4
  %v8 = vstv %s2
  %9 = vst [vmem:[#allocation3] sm:$0x1] %v8
  $region1: #{discriminator_forward.9} parent=0
    #allocation4 [shape = 'u8[32768]{0}', space=vmem, size = 0x8000, scoped, tag = 'input window, operand 0']
    loop: start=0, step=1, limit=18
    $region2: #{discriminator_forward.9} parent=1 // loop_pre_header
      _
    $region3: #{discriminator_forward.9} parent=1 // loop_header
      %s11 = sphi 0, %s15
      %p12 = scmp.ge.s32.totalorder %s11, 18
      %s21 = sphi 0, %s23
      %s24 = sphi 0, %s21
      %s25 = sphi 0, %s24
      %s41 = sphi 0, %s25
      %s47 = sphi 0, %s49
      %s50 = sphi 0, %s47
      %s51 = sphi 0, %s50
      %s67 = sphi 0, %s51
      %s71 = sphi 0, %s71
      %s73 = sphi 0, %s71
      %s74 = sphi 0, %s73
      %s88 = sphi 0, %s74
      %s92 = sphi 0, %s92
      %s94 = sphi 0, %s92
      %s95 = sphi 0, %s94
      %s109 = sphi 0, %s95
    $region4: #{discriminator_forward.9} parent=1 // loop_header_branch
      %14 = sbr.rel (%p12) target = $region8
    $region5: #{discriminator_forward.9} parent=1 // loop_body
      %s16 = ssub.s32 %s11, 1
      %s17 = ssub.s32 %s11, 2
      %s18 = sadd.s32 %s11, 1
      %s19 = ssub.s32 %s11, %s18
      %p20 = scmp.eq.s32.totalorder %s19, 0
      %s22 = sadd.s32 %s21, 1
      %s23 = scalar_select %p20, %s21, %s22
      %p26 = pneg %p20
      %p27 = scmp.eq.s32.totalorder %s11, 15
      %p28 = por %p26, %p27
      %p29 = scmp.ne.s32.totalorder %s21, %s24
      %p30 = scmp.eq.s32.totalorder %s11, 0
      %p31 = por %p29, %p30
      %p32 = scmp.ne.s32.totalorder %s21, %s24
      %p33 = scmp.eq.s32.totalorder %s16, 15
      %p34 = por %p32, %p33
      %p35 = scmp.ne.s32.totalorder %s24, %s25
      %p36 = scmp.eq.s32.totalorder %s16, 0
      %p37 = por %p35, %p36
      %p38 = scmp.ne.s32.totalorder %s24, %s25
      %p39 = scmp.eq.s32.totalorder %s17, 15
      %p40 = por %p38, %p39
      %p42 = scmp.ne.s32.totalorder %s25, %s41
      %p43 = scmp.eq.s32.totalorder %s17, 0
      %p44 = por %p42, %p43
      %s45 = ssub.s32 %s11, %s18
      %p46 = scmp.eq.s32.totalorder %s45, 0
      %s48 = sadd.s32 %s47, 1
      %s49 = scalar_select %p46, %s47, %s48
      %p52 = pneg %p46
      %p53 = scmp.eq.s32.totalorder %s11, 15
      %p54 = por %p52, %p53
      %p55 = scmp.ne.s32.totalorder %s47, %s50
      %p56 = scmp.eq.s32.totalorder %s11, 0
      %p57 = por %p55, %p56
      %p58 = scmp.ne.s32.totalorder %s47, %s50
      %p59 = scmp.eq.s32.totalorder %s16, 15
      %p60 = por %p58, %p59
      %p61 = scmp.ne.s32.totalorder %s50, %s51
      %p62 = scmp.eq.s32.totalorder %s16, 0
      %p63 = por %p61, %p62
      %p64 = scmp.ne.s32.totalorder %s50, %s51
      %p65 = scmp.eq.s32.totalorder %s17, 15
      %p66 = por %p64, %p65
      %p68 = scmp.ne.s32.totalorder %s51, %s67
      %p69 = scmp.eq.s32.totalorder %s17, 0
      %p70 = por %p68, %p69
      %s72 = sadd.s32 %s71, 1
      %p75 = scmp.eq.s32.totalorder %s11, 15
      %p76 = scmp.ne.s32.totalorder %s71, %s73
      %p77 = scmp.eq.s32.totalorder %s11, 0
      %p78 = por %p76, %p77
      %p79 = scmp.ne.s32.totalorder %s71, %s73
      %p80 = scmp.eq.s32.totalorder %s16, 15
      %p81 = por %p79, %p80
      %p82 = scmp.ne.s32.totalorder %s73, %s74
      %p83 = scmp.eq.s32.totalorder %s16, 0
      %p84 = por %p82, %p83
      %p85 = scmp.ne.s32.totalorder %s73, %s74
      %p86 = scmp.eq.s32.totalorder %s17, 15
      %p87 = por %p85, %p86
      %p89 = scmp.ne.s32.totalorder %s74, %s88
      %p90 = scmp.eq.s32.totalorder %s17, 0
      %p91 = por %p89, %p90
      %s93 = sadd.s32 %s92, 1
      %p96 = scmp.eq.s32.totalorder %s11, 15
      %p97 = scmp.ne.s32.totalorder %s92, %s94
      %p98 = scmp.eq.s32.totalorder %s11, 0
      %p99 = por %p97, %p98
      %p100 = scmp.ne.s32.totalorder %s92, %s94
      %p101 = scmp.eq.s32.totalorder %s16, 15
      %p102 = por %p100, %p101
      %p103 = scmp.ne.s32.totalorder %s94, %s95
      %p104 = scmp.eq.s32.totalorder %s16, 0
      %p105 = por %p103, %p104
      %p106 = scmp.ne.s32.totalorder %s94, %s95
      %p107 = scmp.eq.s32.totalorder %s17, 15
      %p108 = por %p106, %p107
      %p110 = scmp.ne.s32.totalorder %s95, %s109
      %p111 = scmp.eq.s32.totalorder %s17, 0
      %p112 = por %p110, %p111
      %p113 = scmp.le.s32.totalorder 1, %s11
      %p114 = scmp.lt.s32.totalorder %s11, 17
      %p115 = pnand %p113, %p114
      %p116 = pneg %p115
      // Predicated region
      $region9: #{discriminator_forward.9} parent=5 // pred_check
        _
      $region10: #{discriminator_forward.9} parent=5 // pred_check_branch
        %118 = sbr.rel (%p115) target = $region12
      $region11: #{discriminator_forward.9} parent=5 // pred_region
        %s119 = ssub.s32 %s11, 1
        // Predicated region
        $region13: #{discriminator_forward.9} parent=11 // pred_check
          %p120 = pneg %p84
        $region14: #{discriminator_forward.9} parent=11 // pred_check_branch
          %122 = sbr.rel (%p120) target = $region16
        $region15: #{discriminator_forward.9} parent=11 // pred_region
          _
        $region16: #{discriminator_forward.9} parent=11 // pred_fallthru
          _
      $region12: #{discriminator_forward.9} parent=5 // pred_fallthru
        _
      %p123 = scmp.lt.s32.totalorder %s11, 16
      // Predicated region
      $region17: #{discriminator_forward.9} parent=5 // pred_check
        %p124 = pneg %p123
      $region18: #{discriminator_forward.9} parent=5 // pred_check_branch
        %126 = sbr.rel (%p124) target = $region20
      $region19: #{discriminator_forward.9} parent=5 // pred_region
        // Predicated region
        $region21: #{discriminator_forward.9} parent=19 // pred_check
          %p127 = pneg %p31
        $region22: #{discriminator_forward.9} parent=19 // pred_check_branch
          %129 = sbr.rel (%p127) target = $region24
        $region23: #{discriminator_forward.9} parent=19 // pred_region
          %s130 = sand.u32 %s21, 1
          %s131 = sand.u32 %s21, 1
          %s132 = smul.addr %s131, 32
          %s133 = scalar_lea.vmem [#allocation4], %s132
          %s134 = smul.u32 4, %s11
          %s135 = smul.addr %s134, 4
          %s136 = scalar_lea.vmem %s0, %s135
          // Predicated region
          $region25: #{discriminator_forward.9} parent=23 // pred_check
            _
          $region26: #{discriminator_forward.9} parent=23 // pred_check_branch
            %138 = sbr.rel (0) target = $region28
          $region27: #{discriminator_forward.9} parent=23 // pred_region
            // Predicated region
            $region29: #{discriminator_forward.9} parent=27 // pred_check
              _
            $region30: #{discriminator_forward.9} parent=27 // pred_check_branch
              %140 = sbr.rel (0) target = $region32
            $region31: #{discriminator_forward.9} parent=27 // pred_region
              loop: start=0, step=1, limit=1
              $region33: #{discriminator_forward.9} parent=31 // loop_pre_header
                _
              $region34: #{discriminator_forward.9} parent=31 // loop_header
                %s142 = sphi 0, %s146
                %p143 = scmp.ge.s32.totalorder %s142, 1
                %s147 = sphi %s136, %s136
                %s148 = sphi %s133, %s133
              $region35: #{discriminator_forward.9} parent=31 // loop_header_branch
                %145 = sbr.rel (%p143) target = $region39
              $region36: #{discriminator_forward.9} parent=31 // loop_body
                %v149 = vld [vmem:[%s147] sm:$0xff]
                %150 = vst [vmem:[%s148] sm:$0xff] %v149
                %v151 = vld [vmem:[%s147 + $0x8] sm:$0xff]
                %152 = vst [vmem:[%s148 + $0x8] sm:$0xff] %v151
                %v153 = vld [vmem:[%s147 + $0x100] sm:$0xff]
                %154 = vst [vmem:[%s148 + $0x10] sm:$0xff] %v153
                %v155 = vld [vmem:[%s147 + $0x108] sm:$0xff]
                %156 = vst [vmem:[%s148 + $0x18] sm:$0xff] %v155
              $region37: #{discriminator_forward.9} parent=31 // loop_footer
                %s146 = sadd.s32 1, %s142
              $region38: #{discriminator_forward.9} parent=31 // loop_footer_branch
                %141 = sbr.rel target = $region34
              $region39: #{discriminator_forward.9} parent=31 // loop_exit
                _
            $region32: #{discriminator_forward.9} parent=27 // pred_fallthru
              _
            // Predicated region
            $region40: #{discriminator_forward.9} parent=27 // pred_check
              _
            $region41: #{discriminator_forward.9} parent=27 // pred_check_branch
              %158 = sbr.rel target = $region43
            $region42: #{discriminator_forward.9} parent=27 // pred_region
              _
            $region43: #{discriminator_forward.9} parent=27 // pred_fallthru
              _
          $region28: #{discriminator_forward.9} parent=23 // pred_fallthru
            _
          %159 = vnop
        $region24: #{discriminator_forward.9} parent=19 // pred_fallthru
          _
        // Predicated region
        $region44: #{discriminator_forward.9} parent=19 // pred_check
          %p160 = pneg %p57
        $region45: #{discriminator_forward.9} parent=19 // pred_check_branch
          %162 = sbr.rel (%p160) target = $region47
        $region46: #{discriminator_forward.9} parent=19 // pred_region
          %s163 = smul.u32 4, %s11
          %p164 = scmp.lt.s32.totalorder %s163, 63
          %s165 = scalar_select %p164, %s163, 63
          %s166 = scalar_lea.vmem %s1, %s165
          %s167 = smul.u32 4, %s11
        $region47: #{discriminator_forward.9} parent=19 // pred_fallthru
          _
      $region20: #{discriminator_forward.9} parent=5 // pred_fallthru
        _
      %p168 = scmp.le.s32.totalorder 1, %s11
      %p169 = scmp.lt.s32.totalorder %s11, 17
      %p170 = pnand %p168, %p169
      %p171 = pneg %p170
      // Predicated region
      $region48: #{discriminator_forward.9} parent=5 // pred_check
        _
      $region49: #{discriminator_forward.9} parent=5 // pred_check_branch
        %173 = sbr.rel (%p170) target = $region51
      $region50: #{discriminator_forward.9} parent=5 // pred_region
        %s174 = ssub.s32 %s11, 1
        %s175 = sand.u32 %s24, 1
        %s176 = sand.u32 %s24, 1
        %s177 = smul.addr %s176, 32
        %s178 = scalar_lea.vmem [#allocation4], %s177
        // Predicated region
        $region52: #{discriminator_forward.9} parent=50 // pred_check
          %p179 = pneg %p37
        $region53: #{discriminator_forward.9} parent=50 // pred_check_branch
          %181 = sbr.rel (%p179) target = $region55
        $region54: #{discriminator_forward.9} parent=50 // pred_region
          _
        $region55: #{discriminator_forward.9} parent=50 // pred_fallthru
          _
        %s182 = sand.u32 %s24, 1
        %s183 = sand.u32 %s24, 1
        %s184 = smul.addr %s183, 32
        %s185 = scalar_lea.vmem [#allocation4], %s184
        %p186 = pneg %p37
        %p187 = pneg %p34
        %s188 = smul.u32 4, %s16
        %p189 = scmp.lt.s32.totalorder %s188, 63
        %s190 = scalar_select %p189, %s188, 63
        %s191 = scalar_lea.vmem %s1, %s190
        %p192 = pneg %p63
        %p193 = pneg %p60
        %p194 = pneg %p84
        %p195 = pneg %p81
        %p196 = pneg %p105
        %p197 = pneg %p102
        %s198 = smul.u32 4, %s16
        %s199 = smul.u32 4, %s16
        %p200 = scmp.lt.s32.totalorder %s199, 63
        %s201 = scalar_select %p200, %s199, 63
        %s202 = scalar_lea.vmem %s1, %s201
        %s203 = smul.u32 4, %s16
        %p204 = scmp.eq.s32.totalorder %s16, 0
        // Predicated region
        $region56: #{discriminator_forward.9} parent=50 // pred_check
          %p205 = pneg %p204
        $region57: #{discriminator_forward.9} parent=50 // pred_check_branch
          %207 = sbr.rel (%p205) target = $region59
        $region58: #{discriminator_forward.9} parent=50 // pred_region
          %vm208 = vcmask 7168
          %209 = vst.msk [vmem:[#allocation2] sm:$0xff] %vm208, 0.0
          %210 = vst.msk [vmem:[#allocation2 + $0x8] sm:$0xff] %vm208, 0.0
        $region59: #{discriminator_forward.9} parent=50 // pred_fallthru
          _
        %v211 = vld [vmem:[%s178] sm:$0xff]
        %v212 = vld [vmem:[%s178 + $0x8] sm:$0xff]
        %v213 = vld [vmem:[%s178 + $0x10] sm:$0xff]
        %v214 = vld [vmem:[%s178 + $0x18] sm:$0xff]
        %v215 = vunpack.c.l.bf16 %v211
        %v216 = vunpack.c.h.bf16 %v211
        %v217 = vunpack.c.l.bf16 %v212
        %v218 = vunpack.c.h.bf16 %v212
        %v219 = vunpack.c.l.bf16 %v213
        %v220 = vunpack.c.h.bf16 %v213
        %v221 = vunpack.c.l.bf16 %v214
        %v222 = vunpack.c.h.bf16 %v214
        %v223 = vld [vmem:[%s202] sm:$0xf]
        %v225 = vlaneseq
        %v226 = vshrl.u32 %v225, 7
        %v227 = vsub.s32 0, %v226
        %v228 = vrot.slane %v223, %v227
        %v229 = vlaneseq
        %v230 = vshrl.u32 %v229, 7
        %v231 = vsub.s32 1, %v230
        %v232 = vrot.slane %v223, %v231
        %v233 = vlaneseq
        %v234 = vshrl.u32 %v233, 7
        %v235 = vsub.s32 2, %v234
        %v236 = vrot.slane %v223, %v235
        %v237 = vlaneseq
        %v238 = vshrl.u32 %v237, 7
        %v239 = vsub.s32 3, %v238
        %v240 = vrot.slane %v223, %v239
        %v245 = vmul.f32 %v215, %v228
        %v246 = vmul.f32 %v216, %v232
        %v247 = vmul.f32 %v217, %v236
        %v248 = vmul.f32 %v218, %v240
        %v249 = vmul.f32 %v219, %v228
        %v250 = vmul.f32 %v220, %v232
        %v251 = vmul.f32 %v221, %v236
        %v252 = vmul.f32 %v222, %v240
        %v253 = vld [vmem:[#allocation2] sm:$0xff]
        %v254 = vld [vmem:[#allocation2 + $0x8] sm:$0xff]
        %v255 = vadd.f32 %v245, %v246
        %v256 = vadd.f32 %v255, %v247
        %v257 = vadd.f32 %v256, %v248
        %258 = vadd.xlane.f32.xlu0 %v257
        %v259 = vpop.xlane.xlu0 %258
        %v260 = vadd.f32 %v249, %v250
        %v261 = vadd.f32 %v260, %v251
        %v262 = vadd.f32 %v261, %v252
        %263 = vadd.xlane.f32.xlu0 %v262
        %v264 = vpop.xlane.xlu0 %263
        %v265 = vadd.f32 %v253, %v259
        %v266 = vadd.f32 %v254, %v264
        %vm267 = vcmask 7168
        %268 = vst.msk [vmem:[#allocation2] sm:$0xff] %vm267, %v265
        %269 = vst.msk [vmem:[#allocation2 + $0x8] sm:$0xff] %vm267, %v266
        %p270 = scmp.eq.s32.totalorder %s16, 15
        // Predicated region
        $region60: #{discriminator_forward.9} parent=50 // pred_check
          %p271 = pneg %p270
        $region61: #{discriminator_forward.9} parent=50 // pred_check_branch
          %273 = sbr.rel (%p271) target = $region63
        $region62: #{discriminator_forward.9} parent=50 // pred_region
          %v274 = vld [vmem:[#allocation2] sm:$0xff]
          %v275 = vld [vmem:[#allocation2 + $0x8] sm:$0xff]
          %v276 = vld [vmem:[#allocation3] sm:$0x1]
          %v278 = vlaneseq
          %v279 = vshrl.u32 %v278, 7
          %v280 = vsub.s32 0, %v279
          %v281 = vrot.slane %v276, %v280
          %v283 = vadd.f32 %v274, %v281
          %v284 = vadd.f32 %v275, %v281
          %285 = vst.msk [vmem:[%s3] sm:$0xff] %vm267, %v283
          %286 = vst.msk [vmem:[%s3 + $0x8] sm:$0xff] %vm267, %v284
        $region63: #{discriminator_forward.9} parent=50 // pred_fallthru
          _
        // Predicated region
        $region64: #{discriminator_forward.9} parent=50 // pred_check
          %p287 = pneg %p102
        $region65: #{discriminator_forward.9} parent=50 // pred_check_branch
          %289 = sbr.rel (%p287) target = $region67
        $region66: #{discriminator_forward.9} parent=50 // pred_region
          _
        $region67: #{discriminator_forward.9} parent=50 // pred_fallthru
          _
        // Predicated region
        $region68: #{discriminator_forward.9} parent=50 // pred_check
          %p290 = pneg %p102
        $region69: #{discriminator_forward.9} parent=50 // pred_check_branch
          %292 = sbr.rel (%p290) target = $region71
        $region70: #{discriminator_forward.9} parent=50 // pred_region
          _
        $region71: #{discriminator_forward.9} parent=50 // pred_fallthru
          _
      $region51: #{discriminator_forward.9} parent=5 // pred_fallthru
        _
      %p293 = scmp.le.s32.totalorder 2, %s11
      // Predicated region
      $region72: #{discriminator_forward.9} parent=5 // pred_check
        %p294 = pneg %p293
      $region73: #{discriminator_forward.9} parent=5 // pred_check_branch
        %296 = sbr.rel (%p294) target = $region75
      $region74: #{discriminator_forward.9} parent=5 // pred_region
        %s297 = ssub.s32 %s11, 2
      $region75: #{discriminator_forward.9} parent=5 // pred_fallthru
        _
    $region6: #{discriminator_forward.9} parent=1 // loop_footer
      %s15 = sadd.s32 1, %s11
    $region7: #{discriminator_forward.9} parent=1 // loop_footer_branch
      %10 = sbr.rel target = $region3
    $region8: #{discriminator_forward.9} parent=1 // loop_exit
      _

</llo_original>
